<compile_context>
chip_gen: v7x
topology: tpu7x:2x2x1
jax: 0.10.0
libtpu: 0.0.40
codegen_flags: <defaults>
</compile_context>

<pallas_src>
import numpy as np
import jax
import jax.numpy as jnp
from jax.experimental import pallas as pl
from jax.experimental.pallas import tpu as pltpu


def _round_up(x, m):
    return (x + m - 1) // m * m


# ---------------------------------------------------------------------------
# Pallas kernel: one fused matmul + bias + ReLU per grid step
# ---------------------------------------------------------------------------
def _matmul_bias_relu_kernel(x_ref, w_ref, b_ref, o_ref):
    acc = jnp.dot(x_ref[...], w_ref[...], preferred_element_type=jnp.float32)
    o_ref[...] = jnp.maximum(acc + b_ref[...], 0.0).astype(o_ref.dtype)


# ---------------------------------------------------------------------------
# Patch extraction for Conv2d(kernel=4, stride=2, pad=0)
# ---------------------------------------------------------------------------
def _im2col_4x4_s2(x):
    """(B, H, W, C) -> (B, Ho, Wo, 16*C); feature index order is (p, q, c)."""
    B, H, W, C = x.shape
    Ho = (H - 4) // 2 + 1
    Wo = (W - 4) // 2 + 1
    cols = []
    for p in range(4):
        for q in range(4):
            cols.append(x[:, p:p + 2 * Ho - 1:2, q:q + 2 * Wo - 1:2, :])
    return jnp.concatenate(cols, axis=-1), Ho, Wo


def _pick_row_tile(m_rows, k, itemsize):
    """Row-tile: single step for small layers, ~2 MiB LHS blocks otherwise."""
    if m_rows <= 1024:
        return max(16, _round_up(m_rows, 16))
    budget_rows = (2 << 20) // max(k * itemsize, 1)
    tm = _round_up(min(budget_rows, m_rows), 256)
    return int(max(256, min(4096, tm)))


# ---------------------------------------------------------------------------
# One conv layer: im2col glue (XLA) + fused Pallas matmul/bias/ReLU kernel
# ---------------------------------------------------------------------------
def _conv4x4s2_bias_relu(x_nhwc, w_mat, bias2d, cout, *, out_dtype,
                         compute_dtype):
    """Conv2d(k=4, s=2, pad=0) + bias + ReLU.

    x_nhwc : (B, H, W, Cin)
    w_mat  : (16*Cin, n_pad)  pre-packed weights, feature order (p, q, c)
    bias2d : (1, n_pad) float32
    cout   : true number of output channels (<= n_pad)
    """
    B, H, W, C = x_nhwc.shape
    K = 16 * C
    n_pad = w_mat.shape[-1]
    assert w_mat.shape == (K, n_pad)

    # Patch matrix (cheap XLA relayout; no in-kernel shifted slices needed).
    X, Ho, Wo = _im2col_4x4_s2(x_nhwc.astype(compute_dtype))
    assert Ho >= 1 and Wo >= 1, "spatial size too small"
    M = B * Ho * Wo
    X = X.reshape(M, K)

    in_item = jnp.dtype(compute_dtype).itemsize
    out_item = jnp.dtype(out_dtype).itemsize

    tm = _pick_row_tile(M, K, in_item)
    M_pad = _round_up(M, tm)
    if M_pad > M:
        X = jnp.pad(X, ((0, M_pad - M), (0, 0)))

    # Lane-dense output channel tile.
    if n_pad <= 512:
        tn = n_pad
    elif n_pad % 512 == 0:
        tn = 512
    elif n_pad % 256 == 0:
        tn = 256
    else:
        tn = 128

    grid = (n_pad // tn, M_pad // tm)   # (Cout tiles slow, row tiles fast)

    flops = 2 * M_pad * K * n_pad
    bytes_accessed = (M_pad * K * in_item + K * n_pad * in_item
                      + n_pad * 4 + M_pad * n_pad * out_item)
    # Double-buffered block footprint + small margin (right-sized for v7x).
    vmem_need = 2 * (tm * K * in_item + K * tn * in_item + tn * 4
                     + tm * tn * out_item)
    vmem_limit = int(min(vmem_need + (4 << 20), 64 << 20))

    out = pl.pallas_call(
        _matmul_bias_relu_kernel,
        out_shape=jax.ShapeDtypeStruct((M_pad, n_pad), out_dtype),
        grid_spec=pltpu.PrefetchScalarGridSpec(
            num_scalar_prefetch=0,
            grid=grid,
            in_specs=[
                pl.BlockSpec((tm, K), lambda j, i: (i, 0)),
                pl.BlockSpec((K, tn), lambda j, i: (0, j)),
                pl.BlockSpec((1, tn), lambda j, i: (0, j)),
            ],
            out_specs=pl.BlockSpec((tm, tn), lambda j, i: (i, j)),
        ),
        compiler_params=pltpu.CompilerParams(
            dimension_semantics=("parallel", "parallel"),
            vmem_limit_bytes=vmem_limit),
        cost_estimate=pl.CostEstimate(
            flops=flops, transcendentals=0, bytes_accessed=bytes_accessed),
    )(X, w_mat, bias2d)

    # Drop row padding and the zero-weight padded channels.
    out = out[:M, :cout].reshape(B, Ho, Wo, cout)
    return out                                          # (B, Ho, Wo, Cout)


# ---------------------------------------------------------------------------
# ObservationEnc
# ---------------------------------------------------------------------------
class ObservationEncPallas:
    """JAX/Pallas port of the PyTorch ObservationEnc forward pass."""

    def __init__(self, depth=64, stride=2, shape=(3, 64, 64),
                 key=jax.random.PRNGKey(0), use_bf16=True):
        if stride != 2:
            # TODO(synk): kernel path is specialized to the module default
            # stride=2 / kernel=4; other strides unsupported.
            raise NotImplementedError("ObservationEncPallas supports stride=2 only")
        self.depth = depth
        self.stride = stride
        self.shape = shape
        self.compute_dtype = jnp.bfloat16 if use_bf16 else jnp.float32

        chans = [shape[0], 1 * depth, 2 * depth, 4 * depth, 8 * depth]
        self.params = []        # raw PyTorch-layout (w, b) for reference use
        self._prepped = []      # kernel-ready packed weights / padded biases
        self._couts = []
        for li in range(4):
            key, wk, bk = jax.random.split(key, 3)
            cin, cout = chans[li], chans[li + 1]
            fan_in = cin * 4 * 4
            bound = 1.0 / np.sqrt(fan_in)   # PyTorch-style uniform init bound
            w = jax.random.uniform(wk, (cout, cin, 4, 4), jnp.float32, -bound, bound)
            b = jax.random.uniform(bk, (cout,), jnp.float32, -bound, bound)
            self.params.append((w, b))

            # Pre-pack once: (Cout,Cin,4,4) -> (k=(p,q,cin), Cout), pad Cout
            # to a multiple of 128 (>=128) so output stores are lane-dense.
            wt = jnp.transpose(w, (2, 3, 1, 0)).reshape(16 * cin, cout)
            n_pad = max(128, _round_up(cout, 128))
            if n_pad != cout:
                wt = jnp.pad(wt, ((0, 0), (0, n_pad - cout)))
            b2 = jnp.pad(b.reshape(1, cout), ((0, 0), (0, n_pad - cout)))
            self._prepped.append((wt.astype(self.compute_dtype),
                                  b2.astype(jnp.float32)))
            self._couts.append(cout)

        self._fwd = jax.jit(self._forward_impl)

    def _forward_impl(self, prepped, obs):
        batch_shape = obs.shape[:-3]
        C, H, W = obs.shape[-3:]
        x = obs.reshape((-1, C, H, W))
        x = jnp.transpose(x, (0, 2, 3, 1))                  # NHWC
        n_layers = len(prepped)
        for li, (wm, b2) in enumerate(prepped):
            out_dtype = jnp.float32 if li == n_layers - 1 else self.compute_dtype
            x = _conv4x4s2_bias_relu(x, wm, b2, self._couts[li],
                                     out_dtype=out_dtype,
                                     compute_dtype=self.compute_dtype)
        x = jnp.transpose(x, (0, 3, 1, 2))                  # back to NCHW
        return x.reshape(*batch_shape, -1)                  # (C,H,W)-order flatten

    def __call__(self, obs):
        # obs: (*batch, C, H, W) — same convention as the PyTorch module.
        return self._fwd(self._prepped, obs)

    @property
    def embed_size(self):
        h = self.shape[1:]
        for _ in range(4):
            h = tuple((d - 4) // self.stride + 1 for d in h)
        return 8 * self.depth * int(np.prod(h))


# ---------------------------------------------------------------------------
# Pure-JAX reference (XLA conv, float32) for correctness checking
# ---------------------------------------------------------------------------
def _reference(obs, params, stride):
    batch_shape = obs.shape[:-3]
    x = obs.reshape((-1,) + obs.shape[-3:])
    for (w, b) in params:
        x = jax.lax.conv_general_dilated(
            x, w, window_strides=(stride, stride), padding="VALID",
            dimension_numbers=("NCHW", "OIHW", "NCHW"))
        x = jax.nn.relu(x + b[None, :, None, None])
    return x.reshape(*batch_shape, -1)


if __name__ == "__main__":
    key = jax.random.PRNGKey(0)
    k_obs, k_params = jax.random.split(key)

    # Small but forward-consistent shapes: 4 stride-2 k=4 convs on 64x64 input.
    depth = 8
    enc = ObservationEncPallas(depth=depth, stride=2, shape=(3, 64, 64),
                               key=k_params)

    obs = jax.random.normal(k_obs, (2, 3, 64, 64), dtype=jnp.float32)

    embed = jax.block_until_ready(enc(obs))
    assert embed.shape == (2, enc.embed_size), (embed.shape, enc.embed_size)
    assert embed.dtype == jnp.float32

    ref = jax.block_until_ready(_reference(obs, enc.params, enc.stride))
    # Kernel feeds the MXU bf16 inputs with f32 accumulation; tolerance covers
    # the bf16 rounding of weights/activations vs the pure-f32 XLA reference.
    np.testing.assert_allclose(np.asarray(embed), np.asarray(ref),
                               rtol=5e-2, atol=5e-2)

    print("KERNEL_OK")
</pallas_src>

<mosaic_0001>
module attributes {stable_mosaic.version = 11 : i64} {
  func.func @_matmul_bias_relu_kernel(%arg0: i32, %arg1: i32, %arg2: memref<2048x48xbf16, #tpu.memory_space<vmem>>, %arg3: memref<48x128xbf16, #tpu.memory_space<vmem>>, %arg4: memref<1x128xf32, #tpu.memory_space<vmem>>, %arg5: memref<2048x128xbf16, #tpu.memory_space<vmem>>) attributes {dimension_semantics = [#tpu.dimension_semantics<parallel>, #tpu.dimension_semantics<parallel>], iteration_bounds = array<i64: 1, 1>, scalar_prefetch = 0 : i64, scratch_operands = 0 : i64, tpu.core_type = #tpu.core_type<tc>, window_params = [{transform_indices = @transform_0, window_bounds = array<i64: 2048, 48>}, {transform_indices = @transform_1, window_bounds = array<i64: 48, 128>}, {transform_indices = @transform_2, window_bounds = array<i64: 1, 128>}, {transform_indices = @transform_3, window_bounds = array<i64: 2048, 128>}]} {
    %c0 = arith.constant 0 : index
    %c0_0 = arith.constant 0 : index
    %0 = vector.load %arg2[%c0, %c0_0] : memref<2048x48xbf16, #tpu.memory_space<vmem>>, vector<2048x48xbf16>
    %c0_1 = arith.constant 0 : index
    %c0_2 = arith.constant 0 : index
    %1 = vector.load %arg3[%c0_1, %c0_2] : memref<48x128xbf16, #tpu.memory_space<vmem>>, vector<48x128xbf16>
    %cst = arith.constant dense<0.000000e+00> : vector<2048x128xf32>
    %2 = tpu.matmul %0, %1, %cst {dimension_numbers = #tpu.dot_dimension_numbers<[1], [0], [0], [1], [0, 0, 1, 1], [], []>} : vector<2048x48xbf16>, vector<48x128xbf16>, vector<2048x128xf32> -> vector<2048x128xf32>
    %c0_3 = arith.constant 0 : index
    %c0_4 = arith.constant 0 : index
    %3 = vector.load %arg4[%c0_3, %c0_4] : memref<1x128xf32, #tpu.memory_space<vmem>>, vector<1x128xf32>
    %4 = vector.broadcast %3 : vector<1x128xf32> to vector<2048x128xf32>
    %5 = arith.addf %2, %4 : vector<2048x128xf32>
    %cst_5 = arith.constant 0.000000e+00 : f32
    %6 = vector.broadcast %cst_5 : f32 to vector<2048x128xf32>
    %7 = arith.maximumf %5, %6 : vector<2048x128xf32>
    %8 = arith.truncf %7 : vector<2048x128xf32> to vector<2048x128xbf16>
    %c0_6 = arith.constant 0 : index
    %c0_7 = arith.constant 0 : index
    %9 = vector.load %arg5[%c0_6, %c0_7] : memref<2048x128xbf16, #tpu.memory_space<vmem>>, vector<2048x128xbf16>
    tpu.vector_store %arg5[%c0_6, %c0_7], %8 {strides = array<i32>} : memref<2048x128xbf16, #tpu.memory_space<vmem>>, vector<2048x128xbf16>,
    return
  }
  func.func @transform_0(%arg0: i32, %arg1: i32) -> (i32, i32) {
    %c0_i32 = arith.constant 0 : i32
    %c0_i32_0 = arith.constant 0 : i32
    return %arg1, %c0_i32 : i32, i32
  }
  func.func @transform_1(%arg0: i32, %arg1: i32) -> (i32, i32) {
    %c0_i32 = arith.constant 0 : i32
    %c0_i32_0 = arith.constant 0 : i32
    return %c0_i32, %arg0 : i32, i32
  }
  func.func @transform_2(%arg0: i32, %arg1: i32) -> (i32, i32) {
    %c0_i32 = arith.constant 0 : i32
    %c0_i32_0 = arith.constant 0 : i32
    return %c0_i32, %arg0 : i32, i32
  }
  func.func @transform_3(%arg0: i32, %arg1: i32) -> (i32, i32) {
    %c0_i32 = arith.constant 0 : i32
    return %arg1, %arg0 : i32, i32
  }
}

module attributes {stable_mosaic.version = 11 : i64} {
  func.func @_matmul_bias_relu_kernel(%arg0: i32, %arg1: i32, %arg2: memref<400x128xbf16, #tpu.memory_space<vmem>>, %arg3: memref<128x128xbf16, #tpu.memory_space<vmem>>, %arg4: memref<1x128xf32, #tpu.memory_space<vmem>>, %arg5: memref<400x128xbf16, #tpu.memory_space<vmem>>) attributes {dimension_semantics = [#tpu.dimension_semantics<parallel>, #tpu.dimension_semantics<parallel>], iteration_bounds = array<i64: 1, 1>, scalar_prefetch = 0 : i64, scratch_operands = 0 : i64, tpu.core_type = #tpu.core_type<tc>, window_params = [{transform_indices = @transform_0, window_bounds = array<i64: 400, 128>}, {transform_indices = @transform_1, window_bounds = array<i64: 128, 128>}, {transform_indices = @transform_2, window_bounds = array<i64: 1, 128>}, {transform_indices = @transform_3, window_bounds = array<i64: 400, 128>}]} {
    %c0 = arith.constant 0 : index
    %c0_0 = arith.constant 0 : index
    %0 = vector.load %arg2[%c0, %c0_0] : memref<400x128xbf16, #tpu.memory_space<vmem>>, vector<400x128xbf16>
    %c0_1 = arith.constant 0 : index
    %c0_2 = arith.constant 0 : index
    %1 = vector.load %arg3[%c0_1, %c0_2] : memref<128x128xbf16, #tpu.memory_space<vmem>>, vector<128x128xbf16>
    %cst = arith.constant dense<0.000000e+00> : vector<400x128xf32>
    %2 = tpu.matmul %0, %1, %cst {dimension_numbers = #tpu.dot_dimension_numbers<[1], [0], [0], [1], [0, 0, 1, 1], [], []>} : vector<400x128xbf16>, vector<128x128xbf16>, vector<400x128xf32> -> vector<400x128xf32>
    %c0_3 = arith.constant 0 : index
    %c0_4 = arith.constant 0 : index
    %3 = vector.load %arg4[%c0_3, %c0_4] : memref<1x128xf32, #tpu.memory_space<vmem>>, vector<1x128xf32>
    %4 = vector.broadcast %3 : vector<1x128xf32> to vector<400x128xf32>
    %5 = arith.addf %2, %4 : vector<400x128xf32>
    %cst_5 = arith.constant 0.000000e+00 : f32
    %6 = vector.broadcast %cst_5 : f32 to vector<400x128xf32>
    %7 = arith.maximumf %5, %6 : vector<400x128xf32>
    %8 = arith.truncf %7 : vector<400x128xf32> to vector<400x128xbf16>
    %c0_6 = arith.constant 0 : index
    %c0_7 = arith.constant 0 : index
    %9 = vector.load %arg5[%c0_6, %c0_7] : memref<400x128xbf16, #tpu.memory_space<vmem>>, vector<400x128xbf16>
    tpu.vector_store %arg5[%c0_6, %c0_7], %8 {strides = array<i32>} : memref<400x128xbf16, #tpu.memory_space<vmem>>, vector<400x128xbf16>,
    return
  }
  func.func @transform_0(%arg0: i32, %arg1: i32) -> (i32, i32) {
    %c0_i32 = arith.constant 0 : i32
    %c0_i32_0 = arith.constant 0 : i32
    return %arg1, %c0_i32 : i32, i32
  }
  func.func @transform_1(%arg0: i32, %arg1: i32) -> (i32, i32) {
    %c0_i32 = arith.constant 0 : i32
    %c0_i32_0 = arith.constant 0 : i32
    return %c0_i32, %arg0 : i32, i32
  }
  func.func @transform_2(%arg0: i32, %arg1: i32) -> (i32, i32) {
    %c0_i32 = arith.constant 0 : i32
    %c0_i32_0 = arith.constant 0 : i32
    return %c0_i32, %arg0 : i32, i32
  }
  func.func @transform_3(%arg0: i32, %arg1: i32) -> (i32, i32) {
    %c0_i32 = arith.constant 0 : i32
    return %arg1, %arg0 : i32, i32
  }
}

module attributes {stable_mosaic.version = 11 : i64} {
  func.func @_matmul_bias_relu_kernel(%arg0: i32, %arg1: i32, %arg2: memref<80x256xbf16, #tpu.memory_space<vmem>>, %arg3: memref<256x128xbf16, #tpu.memory_space<vmem>>, %arg4: memref<1x128xf32, #tpu.memory_space<vmem>>, %arg5: memref<80x128xbf16, #tpu.memory_space<vmem>>) attributes {dimension_semantics = [#tpu.dimension_semantics<parallel>, #tpu.dimension_semantics<parallel>], iteration_bounds = array<i64: 1, 1>, scalar_prefetch = 0 : i64, scratch_operands = 0 : i64, tpu.core_type = #tpu.core_type<tc>, window_params = [{transform_indices = @transform_0, window_bounds = array<i64: 80, 256>}, {transform_indices = @transform_1, window_bounds = array<i64: 256, 128>}, {transform_indices = @transform_2, window_bounds = array<i64: 1, 128>}, {transform_indices = @transform_3, window_bounds = array<i64: 80, 128>}]} {
    %c0 = arith.constant 0 : index
    %c0_0 = arith.constant 0 : index
    %0 = vector.load %arg2[%c0, %c0_0] : memref<80x256xbf16, #tpu.memory_space<vmem>>, vector<80x256xbf16>
    %c0_1 = arith.constant 0 : index
    %c0_2 = arith.constant 0 : index
    %1 = vector.load %arg3[%c0_1, %c0_2] : memref<256x128xbf16, #tpu.memory_space<vmem>>, vector<256x128xbf16>
    %cst = arith.constant dense<0.000000e+00> : vector<80x128xf32>
    %2 = tpu.matmul %0, %1, %cst {dimension_numbers = #tpu.dot_dimension_numbers<[1], [0], [0], [1], [0, 0, 1, 1], [], []>} : vector<80x256xbf16>, vector<256x128xbf16>, vector<80x128xf32> -> vector<80x128xf32>
    %c0_3 = arith.constant 0 : index
    %c0_4 = arith.constant 0 : index
    %3 = vector.load %arg4[%c0_3, %c0_4] : memref<1x128xf32, #tpu.memory_space<vmem>>, vector<1x128xf32>
    %4 = vector.broadcast %3 : vector<1x128xf32> to vector<80x128xf32>
    %5 = arith.addf %2, %4 : vector<80x128xf32>
    %cst_5 = arith.constant 0.000000e+00 : f32
    %6 = vector.broadcast %cst_5 : f32 to vector<80x128xf32>
    %7 = arith.maximumf %5, %6 : vector<80x128xf32>
    %8 = arith.truncf %7 : vector<80x128xf32> to vector<80x128xbf16>
    %c0_6 = arith.constant 0 : index
    %c0_7 = arith.constant 0 : index
    %9 = vector.load %arg5[%c0_6, %c0_7] : memref<80x128xbf16, #tpu.memory_space<vmem>>, vector<80x128xbf16>
    tpu.vector_store %arg5[%c0_6, %c0_7], %8 {strides = array<i32>} : memref<80x128xbf16, #tpu.memory_space<vmem>>, vector<80x128xbf16>,
    return
  }
  func.func @transform_0(%arg0: i32, %arg1: i32) -> (i32, i32) {
    %c0_i32 = arith.constant 0 : i32
    %c0_i32_0 = arith.constant 0 : i32
    return %arg1, %c0_i32 : i32, i32
  }
  func.func @transform_1(%arg0: i32, %arg1: i32) -> (i32, i32) {
    %c0_i32 = arith.constant 0 : i32
    %c0_i32_0 = arith.constant 0 : i32
    return %c0_i32, %arg0 : i32, i32
  }
  func.func @transform_2(%arg0: i32, %arg1: i32) -> (i32, i32) {
    %c0_i32 = arith.constant 0 : i32
    %c0_i32_0 = arith.constant 0 : i32
    return %c0_i32, %arg0 : i32, i32
  }
  func.func @transform_3(%arg0: i32, %arg1: i32) -> (i32, i32) {
    %c0_i32 = arith.constant 0 : i32
    return %arg1, %arg0 : i32, i32
  }
}

module attributes {stable_mosaic.version = 11 : i64} {
  func.func @_matmul_bias_relu_kernel(%arg0: i32, %arg1: i32, %arg2: memref<16x512xbf16, #tpu.memory_space<vmem>>, %arg3: memref<512x128xbf16, #tpu.memory_space<vmem>>, %arg4: memref<1x128xf32, #tpu.memory_space<vmem>>, %arg5: memref<16x128xf32, #tpu.memory_space<vmem>>) attributes {dimension_semantics = [#tpu.dimension_semantics<parallel>, #tpu.dimension_semantics<parallel>], iteration_bounds = array<i64: 1, 1>, scalar_prefetch = 0 : i64, scratch_operands = 0 : i64, tpu.core_type = #tpu.core_type<tc>, window_params = [{transform_indices = @transform_0, window_bounds = array<i64: 16, 512>}, {transform_indices = @transform_1, window_bounds = array<i64: 512, 128>}, {transform_indices = @transform_2, window_bounds = array<i64: 1, 128>}, {transform_indices = @transform_3, window_bounds = array<i64: 16, 128>}]} {
    %c0 = arith.constant 0 : index
    %c0_0 = arith.constant 0 : index
    %0 = vector.load %arg2[%c0, %c0_0] : memref<16x512xbf16, #tpu.memory_space<vmem>>, vector<16x512xbf16>
    %c0_1 = arith.constant 0 : index
    %c0_2 = arith.constant 0 : index
    %1 = vector.load %arg3[%c0_1, %c0_2] : memref<512x128xbf16, #tpu.memory_space<vmem>>, vector<512x128xbf16>
    %cst = arith.constant dense<0.000000e+00> : vector<16x128xf32>
    %2 = tpu.matmul %0, %1, %cst {dimension_numbers = #tpu.dot_dimension_numbers<[1], [0], [0], [1], [0, 0, 1, 1], [], []>} : vector<16x512xbf16>, vector<512x128xbf16>, vector<16x128xf32> -> vector<16x128xf32>
    %c0_3 = arith.constant 0 : index
    %c0_4 = arith.constant 0 : index
    %3 = vector.load %arg4[%c0_3, %c0_4] : memref<1x128xf32, #tpu.memory_space<vmem>>, vector<1x128xf32>
    %4 = vector.broadcast %3 : vector<1x128xf32> to vector<16x128xf32>
    %5 = arith.addf %2, %4 : vector<16x128xf32>
    %cst_5 = arith.constant 0.000000e+00 : f32
    %6 = vector.broadcast %cst_5 : f32 to vector<16x128xf32>
    %7 = arith.maximumf %5, %6 : vector<16x128xf32>
    %c0_6 = arith.constant 0 : index
    %c0_7 = arith.constant 0 : index
    %8 = vector.load %arg5[%c0_6, %c0_7] : memref<16x128xf32, #tpu.memory_space<vmem>>, vector<16x128xf32>
    tpu.vector_store %arg5[%c0_6, %c0_7], %7 {strides = array<i32>} : memref<16x128xf32, #tpu.memory_space<vmem>>, vector<16x128xf32>,
    return
  }
  func.func @transform_0(%arg0: i32, %arg1: i32) -> (i32, i32) {
    %c0_i32 = arith.constant 0 : i32
    %c0_i32_0 = arith.constant 0 : i32
    return %arg1, %c0_i32 : i32, i32
  }
  func.func @transform_1(%arg0: i32, %arg1: i32) -> (i32, i32) {
    %c0_i32 = arith.constant 0 : i32
    %c0_i32_0 = arith.constant 0 : i32
    return %c0_i32, %arg0 : i32, i32
  }
  func.func @transform_2(%arg0: i32, %arg1: i32) -> (i32, i32) {
    %c0_i32 = arith.constant 0 : i32
    %c0_i32_0 = arith.constant 0 : i32
    return %c0_i32, %arg0 : i32, i32
  }
  func.func @transform_3(%arg0: i32, %arg1: i32) -> (i32, i32) {
    %c0_i32 = arith.constant 0 : i32
    return %arg1, %arg0 : i32, i32
  }
}

</mosaic_0001>

<llo_original>
// kernel: _forward_impl.4
$region0: #{_forward_impl.4}
  #allocation0 [shape = 'u32[]', space=smem, size = 0x4, offset = 0x4, fixed_abs, tag = 'smem constant byte address 0x4 - core index']
  #allocation1 [shape = 'u32[144,128]{1,0:T(1,128)}', space=vmem, size = 0x12000, scoped, tag = 'internal scratch']
  %s0 = inlined_call_operand.vmem [shape: bf16[2048,48], index: 0, kind: input, shape index: {}]
  %s1 = inlined_call_operand.vmem [shape: bf16[48,128], index: 1, kind: input, shape index: {}]
  %s2 = inlined_call_operand.vmem [shape: f32[1,128], index: 2, kind: input, shape index: {}]
  %s3 = inlined_call_operand.vmem [shape: bf16[2048,128], index: 3, kind: output, shape index: {}]
  %s4 = sld [smem:[#allocation0]]
  $region22: #{_forward_impl.4} parent=0
    _
  %s6 = ssub.s32 1, %s4
  %s7 = scalar_select 0, %s6, %s4
  // Predicated region
  $region2: #{_forward_impl.4} parent=0 // pred_check
    _
  $region3: #{_forward_impl.4} parent=0 // pred_check_branch
    %9 = sbr.rel (0) target = $region5
  $region4: #{_forward_impl.4} parent=0 // pred_region
    _
  $region5: #{_forward_impl.4} parent=0 // pred_fallthru
    _
  // Predicated region
  $region6: #{_forward_impl.4} parent=0 // pred_check
    _
  $region7: #{_forward_impl.4} parent=0 // pred_check_branch
    %11 = sbr.rel (0) target = $region9
  $region8: #{_forward_impl.4} parent=0 // pred_region
    _
  $region9: #{_forward_impl.4} parent=0 // pred_fallthru
    _
  // Predicated region
  $region10: #{_forward_impl.4} parent=0 // pred_check
    _
  $region11: #{_forward_impl.4} parent=0 // pred_check_branch
    %13 = sbr.rel (0) target = $region13
  $region12: #{_forward_impl.4} parent=0 // pred_region
    _
  $region13: #{_forward_impl.4} parent=0 // pred_fallthru
    _
  %v15 = vld [vmem:[%s0] sm:$0xf]
  %v16 = vld [vmem:[%s0 + $0x4] sm:$0xf]
  %v17 = vld [vmem:[%s0 + $0x8] sm:$0xf]
  %v18 = vld [vmem:[%s0 + $0xc] sm:$0xf]
  %v19 = vld [vmem:[%s0 + $0x10] sm:$0xf]
  %v20 = vld [vmem:[%s0 + $0x14] sm:$0xf]
  %v21 = vld [vmem:[%s0 + $0x18] sm:$0xf]
  %v22 = vld [vmem:[%s0 + $0x1c] sm:$0xf]
  %v23 = vld [vmem:[%s0 + $0x20] sm:$0xf]
  %v24 = vld [vmem:[%s0 + $0x24] sm:$0xf]
  %v25 = vld [vmem:[%s0 + $0x28] sm:$0xf]
  %v26 = vld [vmem:[%s0 + $0x2c] sm:$0xf]
  %v27 = vld [vmem:[%s0 + $0x30] sm:$0xf]
  %v28 = vld [vmem:[%s0 + $0x34] sm:$0xf]
  %v29 = vld [vmem:[%s0 + $0x38] sm:$0xf]
  %v30 = vld [vmem:[%s0 + $0x3c] sm:$0xf]
  %v31 = vld [vmem:[%s0 + $0x40] sm:$0xf]
  %v32 = vld [vmem:[%s0 + $0x44] sm:$0xf]
  %v33 = vld [vmem:[%s0 + $0x48] sm:$0xf]
  %v34 = vld [vmem:[%s0 + $0x4c] sm:$0xf]
  %v35 = vld [vmem:[%s0 + $0x50] sm:$0xf]
  %v36 = vld [vmem:[%s0 + $0x54] sm:$0xf]
  %v37 = vld [vmem:[%s0 + $0x58] sm:$0xf]
  %v38 = vld [vmem:[%s0 + $0x5c] sm:$0xf]
  %v39 = vld [vmem:[%s0 + $0x60] sm:$0xf]
  %v40 = vld [vmem:[%s0 + $0x64] sm:$0xf]
  %v41 = vld [vmem:[%s0 + $0x68] sm:$0xf]
  %v42 = vld [vmem:[%s0 + $0x6c] sm:$0xf]
  %v43 = vld [vmem:[%s0 + $0x70] sm:$0xf]
  %v44 = vld [vmem:[%s0 + $0x74] sm:$0xf]
  %v45 = vld [vmem:[%s0 + $0x78] sm:$0xf]
  %v46 = vld [vmem:[%s0 + $0x7c] sm:$0xf]
  %v47 = vld [vmem:[%s0 + $0x80] sm:$0xf]
  %v48 = vld [vmem:[%s0 + $0x84] sm:$0xf]
  %v49 = vld [vmem:[%s0 + $0x88] sm:$0xf]
  %v50 = vld [vmem:[%s0 + $0x8c] sm:$0xf]
  %v51 = vld [vmem:[%s0 + $0x90] sm:$0xf]
  %v52 = vld [vmem:[%s0 + $0x94] sm:$0xf]
  %v53 = vld [vmem:[%s0 + $0x98] sm:$0xf]
  %v54 = vld [vmem:[%s0 + $0x9c] sm:$0xf]
  %v55 = vld [vmem:[%s0 + $0xa0] sm:$0xf]
  %v56 = vld [vmem:[%s0 + $0xa4] sm:$0xf]
  %v57 = vld [vmem:[%s0 + $0xa8] sm:$0xf]
  %v58 = vld [vmem:[%s0 + $0xac] sm:$0xf]
  %v59 = vld [vmem:[%s0 + $0xb0] sm:$0xf]
  %v60 = vld [vmem:[%s0 + $0xb4] sm:$0xf]
  %v61 = vld [vmem:[%s0 + $0xb8] sm:$0xf]
  %v62 = vld [vmem:[%s0 + $0xbc] sm:$0xf]
  %v63 = vld [vmem:[%s0 + $0xc0] sm:$0xf]
  %v64 = vld [vmem:[%s0 + $0xc4] sm:$0xf]
  %v65 = vld [vmem:[%s0 + $0xc8] sm:$0xf]
  %v66 = vld [vmem:[%s0 + $0xcc] sm:$0xf]
  %v67 = vld [vmem:[%s0 + $0xd0] sm:$0xf]
  %v68 = vld [vmem:[%s0 + $0xd4] sm:$0xf]
  %v69 = vld [vmem:[%s0 + $0xd8] sm:$0xf]
  %v70 = vld [vmem:[%s0 + $0xdc] sm:$0xf]
  %v71 = vld [vmem:[%s0 + $0xe0] sm:$0xf]
  %v72 = vld [vmem:[%s0 + $0xe4] sm:$0xf]
  %v73 = vld [vmem:[%s0 + $0xe8] sm:$0xf]
  %v74 = vld [vmem:[%s0 + $0xec] sm:$0xf]
  %v75 = vld [vmem:[%s0 + $0xf0] sm:$0xf]
  %v76 = vld [vmem:[%s0 + $0xf4] sm:$0xf]
  %v77 = vld [vmem:[%s0 + $0xf8] sm:$0xf]
  %v78 = vld [vmem:[%s0 + $0xfc] sm:$0xf]
  %v79 = vld [vmem:[%s0 + $0x100] sm:$0xf]
  %v80 = vld [vmem:[%s0 + $0x104] sm:$0xf]
  %v81 = vld [vmem:[%s0 + $0x108] sm:$0xf]
  %v82 = vld [vmem:[%s0 + $0x10c] sm:$0xf]
  %v83 = vld [vmem:[%s0 + $0x110] sm:$0xf]
  %v84 = vld [vmem:[%s0 + $0x114] sm:$0xf]
  %v85 = vld [vmem:[%s0 + $0x118] sm:$0xf]
  %v86 = vld [vmem:[%s0 + $0x11c] sm:$0xf]
  %v87 = vld [vmem:[%s0 + $0x120] sm:$0xf]
  %v88 = vld [vmem:[%s0 + $0x124] sm:$0xf]
  %v89 = vld [vmem:[%s0 + $0x128] sm:$0xf]
  %v90 = vld [vmem:[%s0 + $0x12c] sm:$0xf]
  %v91 = vld [vmem:[%s0 + $0x130] sm:$0xf]
  %v92 = vld [vmem:[%s0 + $0x134] sm:$0xf]
  %v93 = vld [vmem:[%s0 + $0x138] sm:$0xf]
  %v94 = vld [vmem:[%s0 + $0x13c] sm:$0xf]
  %v95 = vld [vmem:[%s0 + $0x140] sm:$0xf]
  %v96 = vld [vmem:[%s0 + $0x144] sm:$0xf]
  %v97 = vld [vmem:[%s0 + $0x148] sm:$0xf]
  %v98 = vld [vmem:[%s0 + $0x14c] sm:$0xf]
  %v99 = vld [vmem:[%s0 + $0x150] sm:$0xf]
  %v100 = vld [vmem:[%s0 + $0x154] sm:$0xf]
  %v101 = vld [vmem:[%s0 + $0x158] sm:$0xf]
  %v102 = vld [vmem:[%s0 + $0x15c] sm:$0xf]
  %v103 = vld [vmem:[%s0 + $0x160] sm:$0xf]
  %v104 = vld [vmem:[%s0 + $0x164] sm:$0xf]
  %v105 = vld [vmem:[%s0 + $0x168] sm:$0xf]
  %v106 = vld [vmem:[%s0 + $0x16c] sm:$0xf]
  %v107 = vld [vmem:[%s0 + $0x170] sm:$0xf]
  %v108 = vld [vmem:[%s0 + $0x174] sm:$0xf]
  %v109 = vld [vmem:[%s0 + $0x178] sm:$0xf]
  %v110 = vld [vmem:[%s0 + $0x17c] sm:$0xf]
  %v111 = vld [vmem:[%s0 + $0x180] sm:$0xf]
  %v112 = vld [vmem:[%s0 + $0x184] sm:$0xf]
  %v113 = vld [vmem:[%s0 + $0x188] sm:$0xf]
  %v114 = vld [vmem:[%s0 + $0x18c] sm:$0xf]
  %v115 = vld [vmem:[%s0 + $0x190] sm:$0xf]
  %v116 = vld [vmem:[%s0 + $0x194] sm:$0xf]
  %v117 = vld [vmem:[%s0 + $0x198] sm:$0xf]
  %v118 = vld [vmem:[%s0 + $0x19c] sm:$0xf]
  %v119 = vld [vmem:[%s0 + $0x1a0] sm:$0xf]
  %v120 = vld [vmem:[%s0 + $0x1a4] sm:$0xf]
  %v121 = vld [vmem:[%s0 + $0x1a8] sm:$0xf]
  %v122 = vld [vmem:[%s0 + $0x1ac] sm:$0xf]
  %v123 = vld [vmem:[%s0 + $0x1b0] sm:$0xf]
  %v124 = vld [vmem:[%s0 + $0x1b4] sm:$0xf]
  %v125 = vld [vmem:[%s0 + $0x1b8] sm:$0xf]
  %v126 = vld [vmem:[%s0 + $0x1bc] sm:$0xf]
  %v127 = vld [vmem:[%s0 + $0x1c0] sm:$0xf]
  %v128 = vld [vmem:[%s0 + $0x1c4] sm:$0xf]
  %v129 = vld [vmem:[%s0 + $0x1c8] sm:$0xf]
  %v130 = vld [vmem:[%s0 + $0x1cc] sm:$0xf]
  %v131 = vld [vmem:[%s0 + $0x1d0] sm:$0xf]
  %v132 = vld [vmem:[%s0 + $0x1d4] sm:$0xf]
  %v133 = vld [vmem:[%s0 + $0x1d8] sm:$0xf]
  %v134 = vld [vmem:[%s0 + $0x1dc] sm:$0xf]
  %v135 = vld [vmem:[%s0 + $0x1e0] sm:$0xf]
  %v136 = vld [vmem:[%s0 + $0x1e4] sm:$0xf]
  %v137 = vld [vmem:[%s0 + $0x1e8] sm:$0xf]
  %v138 = vld [vmem:[%s0 + $0x1ec] sm:$0xf]
  %v139 = vld [vmem:[%s0 + $0x1f0] sm:$0xf]
  %v140 = vld [vmem:[%s0 + $0x1f4] sm:$0xf]
  %v141 = vld [vmem:[%s0 + $0x1f8] sm:$0xf]
  %v142 = vld [vmem:[%s0 + $0x1fc] sm:$0xf]
  %v143 = vld [vmem:[%s0 + $0x200] sm:$0xf]
  %v144 = vld [vmem:[%s0 + $0x204] sm:$0xf]
  %v145 = vld [vmem:[%s0 + $0x208] sm:$0xf]
  %v146 = vld [vmem:[%s0 + $0x20c] sm:$0xf]
  %v147 = vld [vmem:[%s0 + $0x210] sm:$0xf]
  %v148 = vld [vmem:[%s0 + $0x214] sm:$0xf]
  %v149 = vld [vmem:[%s0 + $0x218] sm:$0xf]
  %v150 = vld [vmem:[%s0 + $0x21c] sm:$0xf]
  %v151 = vld [vmem:[%s0 + $0x220] sm:$0xf]
  %v152 = vld [vmem:[%s0 + $0x224] sm:$0xf]
  %v153 = vld [vmem:[%s0 + $0x228] sm:$0xf]
  %v154 = vld [vmem:[%s0 + $0x22c] sm:$0xf]
  %v155 = vld [vmem:[%s0 + $0x230] sm:$0xf]
  %v156 = vld [vmem:[%s0 + $0x234] sm:$0xf]
  %v157 = vld [vmem:[%s0 + $0x238] sm:$0xf]
  %v158 = vld [vmem:[%s0 + $0x23c] sm:$0xf]
  %v159 = vld [vmem:[%s0 + $0x240] sm:$0xf]
  %v160 = vld [vmem:[%s0 + $0x244] sm:$0xf]
  %v161 = vld [vmem:[%s0 + $0x248] sm:$0xf]
  %v162 = vld [vmem:[%s0 + $0x24c] sm:$0xf]
  %v163 = vld [vmem:[%s0 + $0x250] sm:$0xf]
  %v164 = vld [vmem:[%s0 + $0x254] sm:$0xf]
  %v165 = vld [vmem:[%s0 + $0x258] sm:$0xf]
  %v166 = vld [vmem:[%s0 + $0x25c] sm:$0xf]
  %v167 = vld [vmem:[%s0 + $0x260] sm:$0xf]
  %v168 = vld [vmem:[%s0 + $0x264] sm:$0xf]
  %v169 = vld [vmem:[%s0 + $0x268] sm:$0xf]
  %v170 = vld [vmem:[%s0 + $0x26c] sm:$0xf]
  %v171 = vld [vmem:[%s0 + $0x270] sm:$0xf]
  %v172 = vld [vmem:[%s0 + $0x274] sm:$0xf]
  %v173 = vld [vmem:[%s0 + $0x278] sm:$0xf]
  %v174 = vld [vmem:[%s0 + $0x27c] sm:$0xf]
  %v175 = vld [vmem:[%s0 + $0x280] sm:$0xf]
  %v176 = vld [vmem:[%s0 + $0x284] sm:$0xf]
  %v177 = vld [vmem:[%s0 + $0x288] sm:$0xf]
  %v178 = vld [vmem:[%s0 + $0x28c] sm:$0xf]
  %v179 = vld [vmem:[%s0 + $0x290] sm:$0xf]
  %v180 = vld [vmem:[%s0 + $0x294] sm:$0xf]
  %v181 = vld [vmem:[%s0 + $0x298] sm:$0xf]
  %v182 = vld [vmem:[%s0 + $0x29c] sm:$0xf]
  %v183 = vld [vmem:[%s0 + $0x2a0] sm:$0xf]
  %v184 = vld [vmem:[%s0 + $0x2a4] sm:$0xf]
  %v185 = vld [vmem:[%s0 + $0x2a8] sm:$0xf]
  %v186 = vld [vmem:[%s0 + $0x2ac] sm:$0xf]
  %v187 = vld [vmem:[%s0 + $0x2b0] sm:$0xf]
  %v188 = vld [vmem:[%s0 + $0x2b4] sm:$0xf]
  %v189 = vld [vmem:[%s0 + $0x2b8] sm:$0xf]
  %v190 = vld [vmem:[%s0 + $0x2bc] sm:$0xf]
  %v191 = vld [vmem:[%s0 + $0x2c0] sm:$0xf]
  %v192 = vld [vmem:[%s0 + $0x2c4] sm:$0xf]
  %v193 = vld [vmem:[%s0 + $0x2c8] sm:$0xf]
  %v194 = vld [vmem:[%s0 + $0x2cc] sm:$0xf]
  %v195 = vld [vmem:[%s0 + $0x2d0] sm:$0xf]
  %v196 = vld [vmem:[%s0 + $0x2d4] sm:$0xf]
  %v197 = vld [vmem:[%s0 + $0x2d8] sm:$0xf]
  %v198 = vld [vmem:[%s0 + $0x2dc] sm:$0xf]
  %v199 = vld [vmem:[%s0 + $0x2e0] sm:$0xf]
  %v200 = vld [vmem:[%s0 + $0x2e4] sm:$0xf]
  %v201 = vld [vmem:[%s0 + $0x2e8] sm:$0xf]
  %v202 = vld [vmem:[%s0 + $0x2ec] sm:$0xf]
  %v203 = vld [vmem:[%s0 + $0x2f0] sm:$0xf]
  %v204 = vld [vmem:[%s0 + $0x2f4] sm:$0xf]
  %v205 = vld [vmem:[%s0 + $0x2f8] sm:$0xf]
  %v206 = vld [vmem:[%s0 + $0x2fc] sm:$0xf]
  %v207 = vld [vmem:[%s0 + $0x300] sm:$0xf]
  %v208 = vld [vmem:[%s0 + $0x304] sm:$0xf]
  %v209 = vld [vmem:[%s0 + $0x308] sm:$0xf]
  %v210 = vld [vmem:[%s0 + $0x30c] sm:$0xf]
  %v211 = vld [vmem:[%s0 + $0x310] sm:$0xf]
  %v212 = vld [vmem:[%s0 + $0x314] sm:$0xf]
  %v213 = vld [vmem:[%s0 + $0x318] sm:$0xf]
  %v214 = vld [vmem:[%s0 + $0x31c] sm:$0xf]
  %v215 = vld [vmem:[%s0 + $0x320] sm:$0xf]
  %v216 = vld [vmem:[%s0 + $0x324] sm:$0xf]
  %v217 = vld [vmem:[%s0 + $0x328] sm:$0xf]
  %v218 = vld [vmem:[%s0 + $0x32c] sm:$0xf]
  %v219 = vld [vmem:[%s0 + $0x330] sm:$0xf]
  %v220 = vld [vmem:[%s0 + $0x334] sm:$0xf]
  %v221 = vld [vmem:[%s0 + $0x338] sm:$0xf]
  %v222 = vld [vmem:[%s0 + $0x33c] sm:$0xf]
  %v223 = vld [vmem:[%s0 + $0x340] sm:$0xf]
  %v224 = vld [vmem:[%s0 + $0x344] sm:$0xf]
  %v225 = vld [vmem:[%s0 + $0x348] sm:$0xf]
  %v226 = vld [vmem:[%s0 + $0x34c] sm:$0xf]
  %v227 = vld [vmem:[%s0 + $0x350] sm:$0xf]
  %v228 = vld [vmem:[%s0 + $0x354] sm:$0xf]
  %v229 = vld [vmem:[%s0 + $0x358] sm:$0xf]
  %v230 = vld [vmem:[%s0 + $0x35c] sm:$0xf]
  %v231 = vld [vmem:[%s0 + $0x360] sm:$0xf]
  %v232 = vld [vmem:[%s0 + $0x364] sm:$0xf]
  %v233 = vld [vmem:[%s0 + $0x368] sm:$0xf]
  %v234 = vld [vmem:[%s0 + $0x36c] sm:$0xf]
  %v235 = vld [vmem:[%s0 + $0x370] sm:$0xf]
  %v236 = vld [vmem:[%s0 + $0x374] sm:$0xf]
  %v237 = vld [vmem:[%s0 + $0x378] sm:$0xf]
  %v238 = vld [vmem:[%s0 + $0x37c] sm:$0xf]
  %v239 = vld [vmem:[%s0 + $0x380] sm:$0xf]
  %v240 = vld [vmem:[%s0 + $0x384] sm:$0xf]
  %v241 = vld [vmem:[%s0 + $0x388] sm:$0xf]
  %v242 = vld [vmem:[%s0 + $0x38c] sm:$0xf]
  %v243 = vld [vmem:[%s0 + $0x390] sm:$0xf]
  %v244 = vld [vmem:[%s0 + $0x394] sm:$0xf]
  %v245 = vld [vmem:[%s0 + $0x398] sm:$0xf]
  %v246 = vld [vmem:[%s0 + $0x39c] sm:$0xf]
  %v247 = vld [vmem:[%s0 + $0x3a0] sm:$0xf]
  %v248 = vld [vmem:[%s0 + $0x3a4] sm:$0xf]
  %v249 = vld [vmem:[%s0 + $0x3a8] sm:$0xf]
  %v250 = vld [vmem:[%s0 + $0x3ac] sm:$0xf]
  %v251 = vld [vmem:[%s0 + $0x3b0] sm:$0xf]
  %v252 = vld [vmem:[%s0 + $0x3b4] sm:$0xf]
  %v253 = vld [vmem:[%s0 + $0x3b8] sm:$0xf]
  %v254 = vld [vmem:[%s0 + $0x3bc] sm:$0xf]
  %v255 = vld [vmem:[%s0 + $0x3c0] sm:$0xf]
  %v256 = vld [vmem:[%s0 + $0x3c4] sm:$0xf]
  %v257 = vld [vmem:[%s0 + $0x3c8] sm:$0xf]
  %v258 = vld [vmem:[%s0 + $0x3cc] sm:$0xf]
  %v259 = vld [vmem:[%s0 + $0x3d0] sm:$0xf]
  %v260 = vld [vmem:[%s0 + $0x3d4] sm:$0xf]
  %v261 = vld [vmem:[%s0 + $0x3d8] sm:$0xf]
  %v262 = vld [vmem:[%s0 + $0x3dc] sm:$0xf]
  %v263 = vld [vmem:[%s0 + $0x3e0] sm:$0xf]
  %v264 = vld [vmem:[%s0 + $0x3e4] sm:$0xf]
  %v265 = vld [vmem:[%s0 + $0x3e8] sm:$0xf]
  %v266 = vld [vmem:[%s0 + $0x3ec] sm:$0xf]
  %v267 = vld [vmem:[%s0 + $0x3f0] sm:$0xf]
  %v268 = vld [vmem:[%s0 + $0x3f4] sm:$0xf]
  %v269 = vld [vmem:[%s0 + $0x3f8] sm:$0xf]
  %v270 = vld [vmem:[%s0 + $0x3fc] sm:$0xf]
  %v271 = vld [vmem:[%s1] sm:$0xf]
  %v272 = vld [vmem:[%s1 + $0x4] sm:$0xf]
  %v273 = vld [vmem:[%s1 + $0x8] sm:$0xf]
  %v274 = vld [vmem:[%s1 + $0xc] sm:$0xf]
  %v275 = vld [vmem:[%s1 + $0x10] sm:$0xf]
  %v276 = vld [vmem:[%s1 + $0x14] sm:$0xf]
  %v277 = vld [vmem:[%s2] sm:$0x1]
  %v279 = vlaneseq
  %v280 = vshrl.u32 %v279, 7
  %v281 = vsub.s32 0, %v280
  %v282 = vrot.slane %v277, %v281
  %v540 = vunpack.c.l.b16 %v15
  %v541 = vunpack.c.l.b16 %v16
  %v542 = vunpack.c.l.b16 %v17
  %v543 = vunpack.c.l.b16 %v18
  %v544 = vunpack.c.l.b16 %v19
  %v545 = vunpack.c.l.b16 %v20
  %v546 = vunpack.c.l.b16 %v21
  %v547 = vunpack.c.l.b16 %v22
  %v548 = vunpack.c.l.b16 %v23
  %v549 = vunpack.c.l.b16 %v24
  %v550 = vunpack.c.l.b16 %v25
  %v551 = vunpack.c.l.b16 %v26
  %v552 = vunpack.c.l.b16 %v27
  %v553 = vunpack.c.l.b16 %v28
  %v554 = vunpack.c.l.b16 %v29
  %v555 = vunpack.c.l.b16 %v30
  %v556 = vunpack.c.l.b16 %v31
  %v557 = vunpack.c.l.b16 %v32
  %v558 = vunpack.c.l.b16 %v33
  %v559 = vunpack.c.l.b16 %v34
  %v560 = vunpack.c.l.b16 %v35
  %v561 = vunpack.c.l.b16 %v36
  %v562 = vunpack.c.l.b16 %v37
  %v563 = vunpack.c.l.b16 %v38
  %v564 = vunpack.c.l.b16 %v39
  %v565 = vunpack.c.l.b16 %v40
  %v566 = vunpack.c.l.b16 %v41
  %v567 = vunpack.c.l.b16 %v42
  %v568 = vunpack.c.l.b16 %v43
  %v569 = vunpack.c.l.b16 %v44
  %v570 = vunpack.c.l.b16 %v45
  %v571 = vunpack.c.l.b16 %v46
  %v572 = vunpack.c.l.b16 %v47
  %v573 = vunpack.c.l.b16 %v48
  %v574 = vunpack.c.l.b16 %v49
  %v575 = vunpack.c.l.b16 %v50
  %v576 = vunpack.c.l.b16 %v51
  %v577 = vunpack.c.l.b16 %v52
  %v578 = vunpack.c.l.b16 %v53
  %v579 = vunpack.c.l.b16 %v54
  %v580 = vunpack.c.l.b16 %v55
  %v581 = vunpack.c.l.b16 %v56
  %v582 = vunpack.c.l.b16 %v57
  %v583 = vunpack.c.l.b16 %v58
  %v584 = vunpack.c.l.b16 %v59
  %v585 = vunpack.c.l.b16 %v60
  %v586 = vunpack.c.l.b16 %v61
  %v587 = vunpack.c.l.b16 %v62
  %v588 = vunpack.c.l.b16 %v63
  %v589 = vunpack.c.l.b16 %v64
  %v590 = vunpack.c.l.b16 %v65
  %v591 = vunpack.c.l.b16 %v66
  %v592 = vunpack.c.l.b16 %v67
  %v593 = vunpack.c.l.b16 %v68
  %v594 = vunpack.c.l.b16 %v69
  %v595 = vunpack.c.l.b16 %v70
  %v596 = vunpack.c.l.b16 %v71
  %v597 = vunpack.c.l.b16 %v72
  %v598 = vunpack.c.l.b16 %v73
  %v599 = vunpack.c.l.b16 %v74
  %v600 = vunpack.c.l.b16 %v75
  %v601 = vunpack.c.l.b16 %v76
  %v602 = vunpack.c.l.b16 %v77
  %v603 = vunpack.c.l.b16 %v78
  %v604 = vunpack.c.l.b16 %v79
  %v605 = vunpack.c.l.b16 %v80
  %v606 = vunpack.c.l.b16 %v81
  %v607 = vunpack.c.l.b16 %v82
  %v608 = vunpack.c.l.b16 %v83
  %v609 = vunpack.c.l.b16 %v84
  %v610 = vunpack.c.l.b16 %v85
  %v611 = vunpack.c.l.b16 %v86
  %v612 = vunpack.c.l.b16 %v87
  %v613 = vunpack.c.l.b16 %v88
  %v614 = vunpack.c.l.b16 %v89
  %v615 = vunpack.c.l.b16 %v90
  %v616 = vunpack.c.l.b16 %v91
  %v617 = vunpack.c.l.b16 %v92
  %v618 = vunpack.c.l.b16 %v93
  %v619 = vunpack.c.l.b16 %v94
  %v620 = vunpack.c.l.b16 %v95
  %v621 = vunpack.c.l.b16 %v96
  %v622 = vunpack.c.l.b16 %v97
  %v623 = vunpack.c.l.b16 %v98
  %v624 = vunpack.c.l.b16 %v99
  %v625 = vunpack.c.l.b16 %v100
  %v626 = vunpack.c.l.b16 %v101
  %v627 = vunpack.c.l.b16 %v102
  %v628 = vunpack.c.l.b16 %v103
  %v629 = vunpack.c.l.b16 %v104
  %v630 = vunpack.c.l.b16 %v105
  %v631 = vunpack.c.l.b16 %v106
  %v632 = vunpack.c.l.b16 %v107
  %v633 = vunpack.c.l.b16 %v108
  %v634 = vunpack.c.l.b16 %v109
  %v635 = vunpack.c.l.b16 %v110
  %v636 = vunpack.c.l.b16 %v111
  %v637 = vunpack.c.l.b16 %v112
  %v638 = vunpack.c.l.b16 %v113
  %v639 = vunpack.c.l.b16 %v114
  %v640 = vunpack.c.l.b16 %v115
  %v641 = vunpack.c.l.b16 %v116
  %v642 = vunpack.c.l.b16 %v117
  %v643 = vunpack.c.l.b16 %v118
  %v644 = vunpack.c.l.b16 %v119
  %v645 = vunpack.c.l.b16 %v120
  %v646 = vunpack.c.l.b16 %v121
  %v647 = vunpack.c.l.b16 %v122
  %v648 = vunpack.c.l.b16 %v123
  %v649 = vunpack.c.l.b16 %v124
  %v650 = vunpack.c.l.b16 %v125
  %v651 = vunpack.c.l.b16 %v126
  %v652 = vunpack.c.l.b16 %v127
  %v653 = vunpack.c.l.b16 %v128
  %v654 = vunpack.c.l.b16 %v129
  %v655 = vunpack.c.l.b16 %v130
  %v656 = vunpack.c.l.b16 %v131
  %v657 = vunpack.c.l.b16 %v132
  %v658 = vunpack.c.l.b16 %v133
  %v659 = vunpack.c.l.b16 %v134
  %v660 = vunpack.c.l.b16 %v135
  %v661 = vunpack.c.l.b16 %v136
  %v662 = vunpack.c.l.b16 %v137
  %v663 = vunpack.c.l.b16 %v138
  %v664 = vunpack.c.l.b16 %v139
  %v665 = vunpack.c.l.b16 %v140
  %v666 = vunpack.c.l.b16 %v141
  %v667 = vunpack.c.l.b16 %v142
  %v668 = vunpack.c.l.b16 %v143
  %v669 = vunpack.c.l.b16 %v144
  %v670 = vunpack.c.l.b16 %v145
  %v671 = vunpack.c.l.b16 %v146
  %v672 = vunpack.c.l.b16 %v147
  %v673 = vunpack.c.l.b16 %v148
  %v674 = vunpack.c.l.b16 %v149
  %v675 = vunpack.c.l.b16 %v150
  %v676 = vunpack.c.l.b16 %v151
  %v677 = vunpack.c.l.b16 %v152
  %v678 = vunpack.c.l.b16 %v153
  %v679 = vunpack.c.l.b16 %v154
  %v680 = vunpack.c.l.b16 %v155
  %v681 = vunpack.c.l.b16 %v156
  %v682 = vunpack.c.l.b16 %v157
  %v683 = vunpack.c.l.b16 %v158
  %v684 = vunpack.c.l.b16 %v159
  %v685 = vunpack.c.l.b16 %v160
  %v686 = vunpack.c.l.b16 %v161
  %v687 = vunpack.c.l.b16 %v162
  %v688 = vunpack.c.l.b16 %v163
  %v689 = vunpack.c.l.b16 %v164
  %v690 = vunpack.c.l.b16 %v165
  %v691 = vunpack.c.l.b16 %v166
  %v692 = vunpack.c.l.b16 %v167
  %v693 = vunpack.c.l.b16 %v168
  %v694 = vunpack.c.l.b16 %v169
  %v695 = vunpack.c.l.b16 %v170
  %v696 = vunpack.c.l.b16 %v171
  %v697 = vunpack.c.l.b16 %v172
  %v698 = vunpack.c.l.b16 %v173
  %v699 = vunpack.c.l.b16 %v174
  %v700 = vunpack.c.l.b16 %v175
  %v701 = vunpack.c.l.b16 %v176
  %v702 = vunpack.c.l.b16 %v177
  %v703 = vunpack.c.l.b16 %v178
  %v704 = vunpack.c.l.b16 %v179
  %v705 = vunpack.c.l.b16 %v180
  %v706 = vunpack.c.l.b16 %v181
  %v707 = vunpack.c.l.b16 %v182
  %v708 = vunpack.c.l.b16 %v183
  %v709 = vunpack.c.l.b16 %v184
  %v710 = vunpack.c.l.b16 %v185
  %v711 = vunpack.c.l.b16 %v186
  %v712 = vunpack.c.l.b16 %v187
  %v713 = vunpack.c.l.b16 %v188
  %v714 = vunpack.c.l.b16 %v189
  %v715 = vunpack.c.l.b16 %v190
  %v716 = vunpack.c.l.b16 %v191
  %v717 = vunpack.c.l.b16 %v192
  %v718 = vunpack.c.l.b16 %v193
  %v719 = vunpack.c.l.b16 %v194
  %v720 = vunpack.c.l.b16 %v195
  %v721 = vunpack.c.l.b16 %v196
  %v722 = vunpack.c.l.b16 %v197
  %v723 = vunpack.c.l.b16 %v198
  %v724 = vunpack.c.l.b16 %v199
  %v725 = vunpack.c.l.b16 %v200
  %v726 = vunpack.c.l.b16 %v201
  %v727 = vunpack.c.l.b16 %v202
  %v728 = vunpack.c.l.b16 %v203
  %v729 = vunpack.c.l.b16 %v204
  %v730 = vunpack.c.l.b16 %v205
  %v731 = vunpack.c.l.b16 %v206
  %v732 = vunpack.c.l.b16 %v207
  %v733 = vunpack.c.l.b16 %v208
  %v734 = vunpack.c.l.b16 %v209
  %v735 = vunpack.c.l.b16 %v210
  %v736 = vunpack.c.l.b16 %v211
  %v737 = vunpack.c.l.b16 %v212
  %v738 = vunpack.c.l.b16 %v213
  %v739 = vunpack.c.l.b16 %v214
  %v740 = vunpack.c.l.b16 %v215
  %v741 = vunpack.c.l.b16 %v216
  %v742 = vunpack.c.l.b16 %v217
  %v743 = vunpack.c.l.b16 %v218
  %v744 = vunpack.c.l.b16 %v219
  %v745 = vunpack.c.l.b16 %v220
  %v746 = vunpack.c.l.b16 %v221
  %v747 = vunpack.c.l.b16 %v222
  %v748 = vunpack.c.l.b16 %v223
  %v749 = vunpack.c.l.b16 %v224
  %v750 = vunpack.c.l.b16 %v225
  %v751 = vunpack.c.l.b16 %v226
  %v752 = vunpack.c.l.b16 %v227
  %v753 = vunpack.c.l.b16 %v228
  %v754 = vunpack.c.l.b16 %v229
  %v755 = vunpack.c.l.b16 %v230
  %v756 = vunpack.c.l.b16 %v231
  %v757 = vunpack.c.l.b16 %v232
  %v758 = vunpack.c.l.b16 %v233
  %v759 = vunpack.c.l.b16 %v234
  %v760 = vunpack.c.l.b16 %v235
  %v761 = vunpack.c.l.b16 %v236
  %v762 = vunpack.c.l.b16 %v237
  %v763 = vunpack.c.l.b16 %v238
  %v764 = vunpack.c.l.b16 %v239
  %v765 = vunpack.c.l.b16 %v240
  %v766 = vunpack.c.l.b16 %v241
  %v767 = vunpack.c.l.b16 %v242
  %v768 = vunpack.c.l.b16 %v243
  %v769 = vunpack.c.l.b16 %v244
  %v770 = vunpack.c.l.b16 %v245
  %v771 = vunpack.c.l.b16 %v246
  %v772 = vunpack.c.l.b16 %v247
  %v773 = vunpack.c.l.b16 %v248
  %v774 = vunpack.c.l.b16 %v249
  %v775 = vunpack.c.l.b16 %v250
  %v776 = vunpack.c.l.b16 %v251
  %v777 = vunpack.c.l.b16 %v252
  %v778 = vunpack.c.l.b16 %v253
  %v779 = vunpack.c.l.b16 %v254
  %v780 = vunpack.c.l.b16 %v255
  %v781 = vunpack.c.l.b16 %v256
  %v782 = vunpack.c.l.b16 %v257
  %v783 = vunpack.c.l.b16 %v258
  %v784 = vunpack.c.l.b16 %v259
  %v785 = vunpack.c.l.b16 %v260
  %v786 = vunpack.c.l.b16 %v261
  %v787 = vunpack.c.l.b16 %v262
  %v788 = vunpack.c.l.b16 %v263
  %v789 = vunpack.c.l.b16 %v264
  %v790 = vunpack.c.l.b16 %v265
  %v791 = vunpack.c.l.b16 %v266
  %v792 = vunpack.c.l.b16 %v267
  %v793 = vunpack.c.l.b16 %v268
  %v794 = vunpack.c.l.b16 %v269
  %v795 = vunpack.c.l.b16 %v270
  %v796 = vpack.c.b16 %v541, %v540
  %v797 = vpack.c.b16 %v543, %v542
  %v798 = vpack.c.b16 %v545, %v544
  %v799 = vpack.c.b16 %v547, %v546
  %v800 = vpack.c.b16 %v549, %v548
  %v801 = vpack.c.b16 %v551, %v550
  %v802 = vpack.c.b16 %v553, %v552
  %v803 = vpack.c.b16 %v555, %v554
  %v804 = vpack.c.b16 %v557, %v556
  %v805 = vpack.c.b16 %v559, %v558
  %v806 = vpack.c.b16 %v561, %v560
  %v807 = vpack.c.b16 %v563, %v562
  %v808 = vpack.c.b16 %v565, %v564
  %v809 = vpack.c.b16 %v567, %v566
  %v810 = vpack.c.b16 %v569, %v568
  %v811 = vpack.c.b16 %v571, %v570
  %v812 = vpack.c.b16 %v573, %v572
  %v813 = vpack.c.b16 %v575, %v574
  %v814 = vpack.c.b16 %v577, %v576
  %v815 = vpack.c.b16 %v579, %v578
  %v816 = vpack.c.b16 %v581, %v580
  %v817 = vpack.c.b16 %v583, %v582
  %v818 = vpack.c.b16 %v585, %v584
  %v819 = vpack.c.b16 %v587, %v586
  %v820 = vpack.c.b16 %v589, %v588
  %v821 = vpack.c.b16 %v591, %v590
  %v822 = vpack.c.b16 %v593, %v592
  %v823 = vpack.c.b16 %v595, %v594
  %v824 = vpack.c.b16 %v597, %v596
  %v825 = vpack.c.b16 %v599, %v598
  %v826 = vpack.c.b16 %v601, %v600
  %v827 = vpack.c.b16 %v603, %v602
  %v828 = vpack.c.b16 %v605, %v604
  %v829 = vpack.c.b16 %v607, %v606
  %v830 = vpack.c.b16 %v609, %v608
  %v831 = vpack.c.b16 %v611, %v610
  %v832 = vpack.c.b16 %v613, %v612
  %v833 = vpack.c.b16 %v615, %v614
  %v834 = vpack.c.b16 %v617, %v616
  %v835 = vpack.c.b16 %v619, %v618
  %v836 = vpack.c.b16 %v621, %v620
  %v837 = vpack.c.b16 %v623, %v622
  %v838 = vpack.c.b16 %v625, %v624
  %v839 = vpack.c.b16 %v627, %v626
  %v840 = vpack.c.b16 %v629, %v628
  %v841 = vpack.c.b16 %v631, %v630
  %v842 = vpack.c.b16 %v633, %v632
  %v843 = vpack.c.b16 %v635, %v634
  %v844 = vpack.c.b16 %v637, %v636
  %v845 = vpack.c.b16 %v639, %v638
  %v846 = vpack.c.b16 %v641, %v640
  %v847 = vpack.c.b16 %v643, %v642
  %v848 = vpack.c.b16 %v645, %v644
  %v849 = vpack.c.b16 %v647, %v646
  %v850 = vpack.c.b16 %v649, %v648
  %v851 = vpack.c.b16 %v651, %v650
  %v852 = vpack.c.b16 %v653, %v652
  %v853 = vpack.c.b16 %v655, %v654
  %v854 = vpack.c.b16 %v657, %v656
  %v855 = vpack.c.b16 %v659, %v658
  %v856 = vpack.c.b16 %v661, %v660
  %v857 = vpack.c.b16 %v663, %v662
  %v858 = vpack.c.b16 %v665, %v664
  %v859 = vpack.c.b16 %v667, %v666
  %v860 = vpack.c.b16 %v669, %v668
  %v861 = vpack.c.b16 %v671, %v670
  %v862 = vpack.c.b16 %v673, %v672
  %v863 = vpack.c.b16 %v675, %v674
  %v864 = vpack.c.b16 %v677, %v676
  %v865 = vpack.c.b16 %v679, %v678
  %v866 = vpack.c.b16 %v681, %v680
  %v867 = vpack.c.b16 %v683, %v682
  %v868 = vpack.c.b16 %v685, %v684
  %v869 = vpack.c.b16 %v687, %v686
  %v870 = vpack.c.b16 %v689, %v688
  %v871 = vpack.c.b16 %v691, %v690
  %v872 = vpack.c.b16 %v693, %v692
  %v873 = vpack.c.b16 %v695, %v694
  %v874 = vpack.c.b16 %v697, %v696
  %v875 = vpack.c.b16 %v699, %v698
  %v876 = vpack.c.b16 %v701, %v700
  %v877 = vpack.c.b16 %v703, %v702
  %v878 = vpack.c.b16 %v705, %v704
  %v879 = vpack.c.b16 %v707, %v706
  %v880 = vpack.c.b16 %v709, %v708
  %v881 = vpack.c.b16 %v711, %v710
  %v882 = vpack.c.b16 %v713, %v712
  %v883 = vpack.c.b16 %v715, %v714
  %v884 = vpack.c.b16 %v717, %v716
  %v885 = vpack.c.b16 %v719, %v718
  %v886 = vpack.c.b16 %v721, %v720
  %v887 = vpack.c.b16 %v723, %v722
  %v888 = vpack.c.b16 %v725, %v724
  %v889 = vpack.c.b16 %v727, %v726
  %v890 = vpack.c.b16 %v729, %v728
  %v891 = vpack.c.b16 %v731, %v730
  %v892 = vpack.c.b16 %v733, %v732
  %v893 = vpack.c.b16 %v735, %v734
  %v894 = vpack.c.b16 %v737, %v736
  %v895 = vpack.c.b16 %v739, %v738
  %v896 = vpack.c.b16 %v741, %v740
  %v897 = vpack.c.b16 %v743, %v742
  %v898 = vpack.c.b16 %v745, %v744
  %v899 = vpack.c.b16 %v747, %v746
  %v900 = vpack.c.b16 %v749, %v748
  %v901 = vpack.c.b16 %v751, %v750
  %v902 = vpack.c.b16 %v753, %v752
  %v903 = vpack.c.b16 %v755, %v754
  %v904 = vpack.c.b16 %v757, %v756
  %v905 = vpack.c.b16 %v759, %v758
  %v906 = vpack.c.b16 %v761, %v760
  %v907 = vpack.c.b16 %v763, %v762
  %v908 = vpack.c.b16 %v765, %v764
  %v909 = vpack.c.b16 %v767, %v766
  %v910 = vpack.c.b16 %v769, %v768
  %v911 = vpack.c.b16 %v771, %v770
  %v912 = vpack.c.b16 %v773, %v772
  %v913 = vpack.c.b16 %v775, %v774
  %v914 = vpack.c.b16 %v777, %v776
  %v915 = vpack.c.b16 %v779, %v778
  %v916 = vpack.c.b16 %v781, %v780
  %v917 = vpack.c.b16 %v783, %v782
  %v918 = vpack.c.b16 %v785, %v784
  %v919 = vpack.c.b16 %v787, %v786
  %v920 = vpack.c.b16 %v789, %v788
  %v921 = vpack.c.b16 %v791, %v790
  %v922 = vpack.c.b16 %v793, %v792
  %v923 = vpack.c.b16 %v795, %v794
  %v930 = vunpack.c.l.b16 %v271
  %v931 = vunpack.c.l.b16 %v272
  %v932 = vunpack.c.l.b16 %v273
  %v933 = vunpack.c.l.b16 %v274
  %v934 = vunpack.c.l.b16 %v275
  %v935 = vunpack.c.l.b16 %v276
  %v936 = vpack.c.b16 %v931, %v930
  %v937 = vpack.c.b16 %v933, %v932
  %v938 = vpack.c.b16 %v935, %v934
  %vm942 = vcmask 392192
  %v944 = vsel %vm942, %v796, 0
  %v947 = vsel %vm942, %v797, 0
  %v950 = vsel %vm942, %v798, 0
  %v953 = vsel %vm942, %v799, 0
  %v956 = vsel %vm942, %v800, 0
  %v959 = vsel %vm942, %v801, 0
  %v962 = vsel %vm942, %v802, 0
  %v965 = vsel %vm942, %v803, 0
  %v968 = vsel %vm942, %v804, 0
  %v971 = vsel %vm942, %v805, 0
  %v974 = vsel %vm942, %v806, 0
  %v977 = vsel %vm942, %v807, 0
  %v980 = vsel %vm942, %v808, 0
  %v983 = vsel %vm942, %v809, 0
  %v986 = vsel %vm942, %v810, 0
  %v989 = vsel %vm942, %v811, 0
  %v992 = vsel %vm942, %v812, 0
  %v995 = vsel %vm942, %v813, 0
  %v998 = vsel %vm942, %v814, 0
  %v1001 = vsel %vm942, %v815, 0
  %v1004 = vsel %vm942, %v816, 0
  %v1007 = vsel %vm942, %v817, 0
  %v1010 = vsel %vm942, %v818, 0
  %v1013 = vsel %vm942, %v819, 0
  %v1016 = vsel %vm942, %v820, 0
  %v1019 = vsel %vm942, %v821, 0
  %v1022 = vsel %vm942, %v822, 0
  %v1025 = vsel %vm942, %v823, 0
  %v1028 = vsel %vm942, %v824, 0
  %v1031 = vsel %vm942, %v825, 0
  %v1034 = vsel %vm942, %v826, 0
  %v1037 = vsel %vm942, %v827, 0
  %v1040 = vsel %vm942, %v828, 0
  %v1043 = vsel %vm942, %v829, 0
  %v1046 = vsel %vm942, %v830, 0
  %v1049 = vsel %vm942, %v831, 0
  %v1052 = vsel %vm942, %v832, 0
  %v1055 = vsel %vm942, %v833, 0
  %v1058 = vsel %vm942, %v834, 0
  %v1061 = vsel %vm942, %v835, 0
  %v1064 = vsel %vm942, %v836, 0
  %v1067 = vsel %vm942, %v837, 0
  %v1070 = vsel %vm942, %v838, 0
  %v1073 = vsel %vm942, %v839, 0
  %v1076 = vsel %vm942, %v840, 0
  %v1079 = vsel %vm942, %v841, 0
  %v1082 = vsel %vm942, %v842, 0
  %v1085 = vsel %vm942, %v843, 0
  %v1088 = vsel %vm942, %v844, 0
  %v1091 = vsel %vm942, %v845, 0
  %v1094 = vsel %vm942, %v846, 0
  %v1097 = vsel %vm942, %v847, 0
  %v1100 = vsel %vm942, %v848, 0
  %v1103 = vsel %vm942, %v849, 0
  %v1106 = vsel %vm942, %v850, 0
  %v1109 = vsel %vm942, %v851, 0
  %v1112 = vsel %vm942, %v852, 0
  %v1115 = vsel %vm942, %v853, 0
  %v1118 = vsel %vm942, %v854, 0
  %v1121 = vsel %vm942, %v855, 0
  %v1124 = vsel %vm942, %v856, 0
  %v1127 = vsel %vm942, %v857, 0
  %v1130 = vsel %vm942, %v858, 0
  %v1133 = vsel %vm942, %v859, 0
  %v1136 = vsel %vm942, %v860, 0
  %v1139 = vsel %vm942, %v861, 0
  %v1142 = vsel %vm942, %v862, 0
  %v1145 = vsel %vm942, %v863, 0
  %v1148 = vsel %vm942, %v864, 0
  %v1151 = vsel %vm942, %v865, 0
  %v1154 = vsel %vm942, %v866, 0
  %v1157 = vsel %vm942, %v867, 0
  %v1160 = vsel %vm942, %v868, 0
  %v1163 = vsel %vm942, %v869, 0
  %v1166 = vsel %vm942, %v870, 0
  %v1169 = vsel %vm942, %v871, 0
  %v1172 = vsel %vm942, %v872, 0
  %v1175 = vsel %vm942, %v873, 0
  %v1178 = vsel %vm942, %v874, 0
  %v1181 = vsel %vm942, %v875, 0
  %v1184 = vsel %vm942, %v876, 0
  %v1187 = vsel %vm942, %v877, 0
  %v1190 = vsel %vm942, %v878, 0
  %v1193 = vsel %vm942, %v879, 0
  %v1196 = vsel %vm942, %v880, 0
  %v1199 = vsel %vm942, %v881, 0
  %v1202 = vsel %vm942, %v882, 0
  %v1205 = vsel %vm942, %v883, 0
  %v1208 = vsel %vm942, %v884, 0
  %v1211 = vsel %vm942, %v885, 0
  %v1214 = vsel %vm942, %v886, 0
  %v1217 = vsel %vm942, %v887, 0
  %v1220 = vsel %vm942, %v888, 0
  %v1223 = vsel %vm942, %v889, 0
  %v1226 = vsel %vm942, %v890, 0
  %v1229 = vsel %vm942, %v891, 0
  %v1232 = vsel %vm942, %v892, 0
  %v1235 = vsel %vm942, %v893, 0
  %v1238 = vsel %vm942, %v894, 0
  %v1241 = vsel %vm942, %v895, 0
  %v1244 = vsel %vm942, %v896, 0
  %v1247 = vsel %vm942, %v897, 0
  %v1250 = vsel %vm942, %v898, 0
  %v1253 = vsel %vm942, %v899, 0
  %v1256 = vsel %vm942, %v900, 0
  %v1259 = vsel %vm942, %v901, 0
  %v1262 = vsel %vm942, %v902, 0
  %v1265 = vsel %vm942, %v903, 0
  %v1268 = vsel %vm942, %v904, 0
  %v1271 = vsel %vm942, %v905, 0
  %v1274 = vsel %vm942, %v906, 0
  %v1277 = vsel %vm942, %v907, 0
  %v1280 = vsel %vm942, %v908, 0
  %v1283 = vsel %vm942, %v909, 0
  %v1286 = vsel %vm942, %v910, 0
  %v1289 = vsel %vm942, %v911, 0
  %v1292 = vsel %vm942, %v912, 0
  %v1295 = vsel %vm942, %v913, 0
  %v1298 = vsel %vm942, %v914, 0
  %v1301 = vsel %vm942, %v915, 0
  %v1304 = vsel %vm942, %v916, 0
  %v1307 = vsel %vm942, %v917, 0
  %v1310 = vsel %vm942, %v918, 0
  %v1313 = vsel %vm942, %v919, 0
  %v1316 = vsel %vm942, %v920, 0
  %v1319 = vsel %vm942, %v921, 0
  %v1322 = vsel %vm942, %v922, 0
  %v1325 = vsel %vm942, %v923, 0
  %1327 = vmatprep.subr.bf16.mxu0 0
  %1328 = vmatpush1.bf16.msra.mxu0 %v936
  %1329 = vmatprep.subr.bf16.mxu0 0
  %1330 = vmatpush1.bf16.msra.mxu0 %v937
  %1331 = vmatprep.subr.bf16.mxu0 0
  %1332 = vmatpush1.bf16.msra.mxu0 %v938
  %1333 = vmatprep.subr.bf16.mxu0 0
  %1334 = vmatpush1.bf16.msra.mxu0 0
  %1335 = vmatprep.subr.bf16.mxu0 0
  %1336 = vmatpush1.bf16.msra.mxu0 0
  %1337 = vmatprep.subr.bf16.mxu0 0
  %1338 = vmatpush1.bf16.msra.mxu0 0
  %1339 = vmatprep.subr.bf16.mxu0 0
  %1340 = vmatpush1.bf16.msra.mxu0 0
  %1341 = vmatprep.subr.bf16.mxu0 0
  %1342 = vmatpush1.bf16.msra.mxu0 0
  %1343 = vmatprep.subr.bf16.mxu0 0
  %1344 = vmatpush1.bf16.msra.mxu0 0
  %1345 = vmatprep.subr.bf16.mxu0 0
  %1346 = vmatpush1.bf16.msra.mxu0 0
  %1347 = vmatprep.subr.bf16.mxu0 0
  %1348 = vmatpush1.bf16.msra.mxu0 0
  %1349 = vmatprep.subr.bf16.mxu0 0
  %1350 = vmatpush1.bf16.msra.mxu0 0
  %1351 = vmatprep.subr.bf16.mxu0 0
  %1352 = vmatpush1.bf16.msra.mxu0 0
  %1353 = vmatprep.subr.bf16.mxu0 0
  %1354 = vmatpush1.bf16.msra.mxu0 0
  %1355 = vmatprep.subr.bf16.mxu0 0
  %1356 = vmatpush1.bf16.msra.mxu0 0
  %1357 = vmatprep.subr.bf16.mxu0 0
  %1358 = vmatpush1.bf16.msra.mxu0 0
  %1359 = vmatprep.mubr.bf16.mxu0 0
  %1360 = vmatmul.mubr.bf16.gmra.mrb[0].mxu0 %v944
  %v1361 = vpop.f32.mrb[0].mxu0
  %v1362 = vadd.f32 %v282, %v1361
  %v1363 = vpop.f32.mrb[0].mxu0
  %v1364 = vpop.f32.mrb[0].mxu0
  %v1365 = vadd.f32 %v282, %v1364
  %v1366 = vpop.f32.mrb[0].mxu0
  %1367 = vmatprep.mubr.bf16.mxu0 0
  %1368 = vmatmul.mubr.bf16.gmra.mrb[0].mxu0 %v947
  %v1369 = vpop.f32.mrb[0].mxu0
  %v1370 = vadd.f32 %v282, %v1369
  %v1371 = vpop.f32.mrb[0].mxu0
  %v1372 = vpop.f32.mrb[0].mxu0
  %v1373 = vadd.f32 %v282, %v1372
  %v1374 = vpop.f32.mrb[0].mxu0
  %1375 = vmatprep.mubr.bf16.mxu0 0
  %1376 = vmatmul.mubr.bf16.gmra.mrb[0].mxu0 %v950
  %v1377 = vpop.f32.mrb[0].mxu0
  %v1378 = vadd.f32 %v282, %v1377
  %v1379 = vpop.f32.mrb[0].mxu0
  %v1380 = vpop.f32.mrb[0].mxu0
  %v1381 = vadd.f32 %v282, %v1380
  %v1382 = vpop.f32.mrb[0].mxu0
  %1383 = vmatprep.mubr.bf16.mxu0 0
  %1384 = vmatmul.mubr.bf16.gmra.mrb[0].mxu0 %v953
  %v1385 = vpop.f32.mrb[0].mxu0
  %v1386 = vadd.f32 %v282, %v1385
  %v1387 = vpop.f32.mrb[0].mxu0
  %v1388 = vpop.f32.mrb[0].mxu0
  %v1389 = vadd.f32 %v282, %v1388
  %v1390 = vpop.f32.mrb[0].mxu0
  %1391 = vmatprep.mubr.bf16.mxu0 0
  %1392 = vmatmul.mubr.bf16.gmra.mrb[0].mxu0 %v956
  %v1393 = vpop.f32.mrb[0].mxu0
  %v1394 = vadd.f32 %v282, %v1393
  %v1395 = vpop.f32.mrb[0].mxu0
  %v1396 = vpop.f32.mrb[0].mxu0
  %v1397 = vadd.f32 %v282, %v1396
  %v1398 = vpop.f32.mrb[0].mxu0
  %1399 = vmatprep.mubr.bf16.mxu0 0
  %1400 = vmatmul.mubr.bf16.gmra.mrb[0].mxu0 %v959
  %v1401 = vpop.f32.mrb[0].mxu0
  %v1402 = vadd.f32 %v282, %v1401
  %v1403 = vpop.f32.mrb[0].mxu0
  %v1404 = vpop.f32.mrb[0].mxu0
  %v1405 = vadd.f32 %v282, %v1404
  %v1406 = vpop.f32.mrb[0].mxu0
  %1407 = vmatprep.mubr.bf16.mxu0 0
  %1408 = vmatmul.mubr.bf16.gmra.mrb[0].mxu0 %v962
  %v1409 = vpop.f32.mrb[0].mxu0
  %v1410 = vadd.f32 %v282, %v1409
  %v1411 = vpop.f32.mrb[0].mxu0
  %v1412 = vpop.f32.mrb[0].mxu0
  %v1413 = vadd.f32 %v282, %v1412
  %v1414 = vpop.f32.mrb[0].mxu0
  %1415 = vmatprep.mubr.bf16.mxu0 0
  %1416 = vmatmul.mubr.bf16.gmra.mrb[0].mxu0 %v965
  %v1417 = vpop.f32.mrb[0].mxu0
  %v1418 = vadd.f32 %v282, %v1417
  %v1419 = vpop.f32.mrb[0].mxu0
  %v1420 = vpop.f32.mrb[0].mxu0
  %v1421 = vadd.f32 %v282, %v1420
  %v1422 = vpop.f32.mrb[0].mxu0
  %1423 = vmatprep.mubr.bf16.mxu0 0
  %1424 = vmatmul.mubr.bf16.gmra.mrb[0].mxu0 %v968
  %v1425 = vpop.f32.mrb[0].mxu0
  %v1426 = vadd.f32 %v282, %v1425
  %v1427 = vpop.f32.mrb[0].mxu0
  %v1428 = vpop.f32.mrb[0].mxu0
  %v1429 = vadd.f32 %v282, %v1428
  %v1430 = vpop.f32.mrb[0].mxu0
  %1431 = vmatprep.mubr.bf16.mxu0 0
  %1432 = vmatmul.mubr.bf16.gmra.mrb[0].mxu0 %v971
  %v1433 = vpop.f32.mrb[0].mxu0
  %v1434 = vadd.f32 %v282, %v1433
  %v1435 = vpop.f32.mrb[0].mxu0
  %v1436 = vpop.f32.mrb[0].mxu0
  %v1437 = vadd.f32 %v282, %v1436
  %v1438 = vpop.f32.mrb[0].mxu0
  %1439 = vmatprep.mubr.bf16.mxu0 0
  %1440 = vmatmul.mubr.bf16.gmra.mrb[0].mxu0 %v974
  %v1441 = vpop.f32.mrb[0].mxu0
  %v1442 = vadd.f32 %v282, %v1441
  %v1443 = vpop.f32.mrb[0].mxu0
  %v1444 = vpop.f32.mrb[0].mxu0
  %v1445 = vadd.f32 %v282, %v1444
  %v1446 = vpop.f32.mrb[0].mxu0
  %1447 = vmatprep.mubr.bf16.mxu0 0
  %1448 = vmatmul.mubr.bf16.gmra.mrb[0].mxu0 %v977
  %v1449 = vpop.f32.mrb[0].mxu0
  %v1450 = vadd.f32 %v282, %v1449
  %v1451 = vpop.f32.mrb[0].mxu0
  %v1452 = vpop.f32.mrb[0].mxu0
  %v1453 = vadd.f32 %v282, %v1452
  %v1454 = vpop.f32.mrb[0].mxu0
  %1455 = vmatprep.mubr.bf16.mxu0 0
  %1456 = vmatmul.mubr.bf16.gmra.mrb[0].mxu0 %v980
  %v1457 = vpop.f32.mrb[0].mxu0
  %v1458 = vadd.f32 %v282, %v1457
  %v1459 = vpop.f32.mrb[0].mxu0
  %v1460 = vpop.f32.mrb[0].mxu0
  %v1461 = vadd.f32 %v282, %v1460
  %v1462 = vpop.f32.mrb[0].mxu0
  %1463 = vmatprep.mubr.bf16.mxu0 0
  %1464 = vmatmul.mubr.bf16.gmra.mrb[0].mxu0 %v983
  %v1465 = vpop.f32.mrb[0].mxu0
  %v1466 = vadd.f32 %v282, %v1465
  %v1467 = vpop.f32.mrb[0].mxu0
  %v1468 = vpop.f32.mrb[0].mxu0
  %v1469 = vadd.f32 %v282, %v1468
  %v1470 = vpop.f32.mrb[0].mxu0
  %1471 = vmatprep.mubr.bf16.mxu0 0
  %1472 = vmatmul.mubr.bf16.gmra.mrb[0].mxu0 %v986
  %v1473 = vpop.f32.mrb[0].mxu0
  %v1474 = vadd.f32 %v282, %v1473
  %v1475 = vpop.f32.mrb[0].mxu0
  %v1476 = vpop.f32.mrb[0].mxu0
  %v1477 = vadd.f32 %v282, %v1476
  %v1478 = vpop.f32.mrb[0].mxu0
  %1479 = vmatprep.mubr.bf16.mxu0 0
  %1480 = vmatmul.mubr.bf16.gmra.mrb[0].mxu0 %v989
  %v1481 = vpop.f32.mrb[0].mxu0
  %v1482 = vadd.f32 %v282, %v1481
  %v1483 = vpop.f32.mrb[0].mxu0
  %v1484 = vpop.f32.mrb[0].mxu0
  %v1485 = vadd.f32 %v282, %v1484
  %v1486 = vpop.f32.mrb[0].mxu0
  %1487 = vmatprep.mubr.bf16.mxu0 0
  %1488 = vmatmul.mubr.bf16.gmra.mrb[0].mxu0 %v992
  %v1489 = vpop.f32.mrb[0].mxu0
  %v1490 = vadd.f32 %v282, %v1489
  %v1491 = vpop.f32.mrb[0].mxu0
  %v1492 = vpop.f32.mrb[0].mxu0
  %v1493 = vadd.f32 %v282, %v1492
  %v1494 = vpop.f32.mrb[0].mxu0
  %1495 = vmatprep.mubr.bf16.mxu0 0
  %1496 = vmatmul.mubr.bf16.gmra.mrb[0].mxu0 %v995
  %v1497 = vpop.f32.mrb[0].mxu0
  %v1498 = vadd.f32 %v282, %v1497
  %v1499 = vpop.f32.mrb[0].mxu0
  %v1500 = vpop.f32.mrb[0].mxu0
  %v1501 = vadd.f32 %v282, %v1500
  %v1502 = vpop.f32.mrb[0].mxu0
  %1503 = vmatprep.mubr.bf16.mxu0 0
  %1504 = vmatmul.mubr.bf16.gmra.mrb[0].mxu0 %v998
  %v1505 = vpop.f32.mrb[0].mxu0
  %v1506 = vadd.f32 %v282, %v1505
  %v1507 = vpop.f32.mrb[0].mxu0
  %v1508 = vpop.f32.mrb[0].mxu0
  %v1509 = vadd.f32 %v282, %v1508
  %v1510 = vpop.f32.mrb[0].mxu0
  %1511 = vmatprep.mubr.bf16.mxu0 0
  %1512 = vmatmul.mubr.bf16.gmra.mrb[0].mxu0 %v1001
  %v1513 = vpop.f32.mrb[0].mxu0
  %v1514 = vadd.f32 %v282, %v1513
  %v1515 = vpop.f32.mrb[0].mxu0
  %v1516 = vpop.f32.mrb[0].mxu0
  %v1517 = vadd.f32 %v282, %v1516
  %v1518 = vpop.f32.mrb[0].mxu0
  %1519 = vmatprep.mubr.bf16.mxu0 0
  %1520 = vmatmul.mubr.bf16.gmra.mrb[0].mxu0 %v1004
  %v1521 = vpop.f32.mrb[0].mxu0
  %v1522 = vadd.f32 %v282, %v1521
  %v1523 = vpop.f32.mrb[0].mxu0
  %v1524 = vpop.f32.mrb[0].mxu0
  %v1525 = vadd.f32 %v282, %v1524
  %v1526 = vpop.f32.mrb[0].mxu0
  %1527 = vmatprep.mubr.bf16.mxu0 0
  %1528 = vmatmul.mubr.bf16.gmra.mrb[0].mxu0 %v1007
  %v1529 = vpop.f32.mrb[0].mxu0
  %v1530 = vadd.f32 %v282, %v1529
  %v1531 = vpop.f32.mrb[0].mxu0
  %v1532 = vpop.f32.mrb[0].mxu0
  %v1533 = vadd.f32 %v282, %v1532
  %v1534 = vpop.f32.mrb[0].mxu0
  %1535 = vmatprep.mubr.bf16.mxu0 0
  %1536 = vmatmul.mubr.bf16.gmra.mrb[0].mxu0 %v1010
  %v1537 = vpop.f32.mrb[0].mxu0
  %v1538 = vadd.f32 %v282, %v1537
  %v1539 = vpop.f32.mrb[0].mxu0
  %v1540 = vpop.f32.mrb[0].mxu0
  %v1541 = vadd.f32 %v282, %v1540
  %v1542 = vpop.f32.mrb[0].mxu0
  %1543 = vmatprep.mubr.bf16.mxu0 0
  %1544 = vmatmul.mubr.bf16.gmra.mrb[0].mxu0 %v1013
  %v1545 = vpop.f32.mrb[0].mxu0
  %v1546 = vadd.f32 %v282, %v1545
  %v1547 = vpop.f32.mrb[0].mxu0
  %v1548 = vpop.f32.mrb[0].mxu0
  %v1549 = vadd.f32 %v282, %v1548
  %v1550 = vpop.f32.mrb[0].mxu0
  %1551 = vmatprep.mubr.bf16.mxu0 0
  %1552 = vmatmul.mubr.bf16.gmra.mrb[0].mxu0 %v1016
  %v1553 = vpop.f32.mrb[0].mxu0
  %v1554 = vadd.f32 %v282, %v1553
  %v1555 = vpop.f32.mrb[0].mxu0
  %v1556 = vpop.f32.mrb[0].mxu0
  %v1557 = vadd.f32 %v282, %v1556
  %v1558 = vpop.f32.mrb[0].mxu0
  %1559 = vmatprep.mubr.bf16.mxu0 0
  %1560 = vmatmul.mubr.bf16.gmra.mrb[0].mxu0 %v1019
  %v1561 = vpop.f32.mrb[0].mxu0
  %v1562 = vadd.f32 %v282, %v1561
  %v1563 = vpop.f32.mrb[0].mxu0
  %v1564 = vpop.f32.mrb[0].mxu0
  %v1565 = vadd.f32 %v282, %v1564
  %v1566 = vpop.f32.mrb[0].mxu0
  %1567 = vmatprep.mubr.bf16.mxu0 0
  %1568 = vmatmul.mubr.bf16.gmra.mrb[0].mxu0 %v1022
  %v1569 = vpop.f32.mrb[0].mxu0
  %v1570 = vadd.f32 %v282, %v1569
  %v1571 = vpop.f32.mrb[0].mxu0
  %v1572 = vpop.f32.mrb[0].mxu0
  %v1573 = vadd.f32 %v282, %v1572
  %v1574 = vpop.f32.mrb[0].mxu0
  %1575 = vmatprep.mubr.bf16.mxu0 0
  %1576 = vmatmul.mubr.bf16.gmra.mrb[0].mxu0 %v1025
  %v1577 = vpop.f32.mrb[0].mxu0
  %v1578 = vadd.f32 %v282, %v1577
  %v1579 = vpop.f32.mrb[0].mxu0
  %v1580 = vpop.f32.mrb[0].mxu0
  %v1581 = vadd.f32 %v282, %v1580
  %v1582 = vpop.f32.mrb[0].mxu0
  %1583 = vmatprep.mubr.bf16.mxu0 0
  %1584 = vmatmul.mubr.bf16.gmra.mrb[0].mxu0 %v1028
  %v1585 = vpop.f32.mrb[0].mxu0
  %v1586 = vadd.f32 %v282, %v1585
  %v1587 = vpop.f32.mrb[0].mxu0
  %v1588 = vpop.f32.mrb[0].mxu0
  %v1589 = vadd.f32 %v282, %v1588
  %v1590 = vpop.f32.mrb[0].mxu0
  %1591 = vmatprep.mubr.bf16.mxu0 0
  %1592 = vmatmul.mubr.bf16.gmra.mrb[0].mxu0 %v1031
  %v1593 = vpop.f32.mrb[0].mxu0
  %v1594 = vadd.f32 %v282, %v1593
  %v1595 = vpop.f32.mrb[0].mxu0
  %v1596 = vpop.f32.mrb[0].mxu0
  %v1597 = vadd.f32 %v282, %v1596
  %v1598 = vpop.f32.mrb[0].mxu0
  %1599 = vmatprep.mubr.bf16.mxu0 0
  %1600 = vmatmul.mubr.bf16.gmra.mrb[0].mxu0 %v1034
  %v1601 = vpop.f32.mrb[0].mxu0
  %v1602 = vadd.f32 %v282, %v1601
  %v1603 = vpop.f32.mrb[0].mxu0
  %v1604 = vpop.f32.mrb[0].mxu0
  %v1605 = vadd.f32 %v282, %v1604
  %v1606 = vpop.f32.mrb[0].mxu0
  %1607 = vmatprep.mubr.bf16.mxu0 0
  %1608 = vmatmul.mubr.bf16.gmra.mrb[0].mxu0 %v1037
  %v1609 = vpop.f32.mrb[0].mxu0
  %v1610 = vadd.f32 %v282, %v1609
  %v1611 = vpop.f32.mrb[0].mxu0
  %v1612 = vpop.f32.mrb[0].mxu0
  %v1613 = vadd.f32 %v282, %v1612
  %v1614 = vpop.f32.mrb[0].mxu0
  %1615 = vmatprep.mubr.bf16.mxu0 0
  %1616 = vmatmul.mubr.bf16.gmra.mrb[0].mxu0 %v1040
  %v1617 = vpop.f32.mrb[0].mxu0
  %v1618 = vadd.f32 %v282, %v1617
  %v1619 = vpop.f32.mrb[0].mxu0
  %v1620 = vpop.f32.mrb[0].mxu0
  %v1621 = vadd.f32 %v282, %v1620
  %v1622 = vpop.f32.mrb[0].mxu0
  %1623 = vmatprep.mubr.bf16.mxu0 0
  %1624 = vmatmul.mubr.bf16.gmra.mrb[0].mxu0 %v1043
  %v1625 = vpop.f32.mrb[0].mxu0
  %v1626 = vadd.f32 %v282, %v1625
  %v1627 = vpop.f32.mrb[0].mxu0
  %v1628 = vpop.f32.mrb[0].mxu0
  %v1629 = vadd.f32 %v282, %v1628
  %v1630 = vpop.f32.mrb[0].mxu0
  %1631 = vmatprep.mubr.bf16.mxu0 0
  %1632 = vmatmul.mubr.bf16.gmra.mrb[0].mxu0 %v1046
  %v1633 = vpop.f32.mrb[0].mxu0
  %v1634 = vadd.f32 %v282, %v1633
  %v1635 = vpop.f32.mrb[0].mxu0
  %v1636 = vpop.f32.mrb[0].mxu0
  %v1637 = vadd.f32 %v282, %v1636
  %v1638 = vpop.f32.mrb[0].mxu0
  %1639 = vmatprep.mubr.bf16.mxu0 0
  %1640 = vmatmul.mubr.bf16.gmra.mrb[0].mxu0 %v1049
  %v1641 = vpop.f32.mrb[0].mxu0
  %v1642 = vadd.f32 %v282, %v1641
  %v1643 = vpop.f32.mrb[0].mxu0
  %v1644 = vpop.f32.mrb[0].mxu0
  %v1645 = vadd.f32 %v282, %v1644
  %v1646 = vpop.f32.mrb[0].mxu0
  %1647 = vmatprep.mubr.bf16.mxu0 0
  %1648 = vmatmul.mubr.bf16.gmra.mrb[0].mxu0 %v1052
  %v1649 = vpop.f32.mrb[0].mxu0
  %v1650 = vadd.f32 %v282, %v1649
  %v1651 = vpop.f32.mrb[0].mxu0
  %v1652 = vpop.f32.mrb[0].mxu0
  %v1653 = vadd.f32 %v282, %v1652
  %v1654 = vpop.f32.mrb[0].mxu0
  %1655 = vmatprep.mubr.bf16.mxu0 0
  %1656 = vmatmul.mubr.bf16.gmra.mrb[0].mxu0 %v1055
  %v1657 = vpop.f32.mrb[0].mxu0
  %v1658 = vadd.f32 %v282, %v1657
  %v1659 = vpop.f32.mrb[0].mxu0
  %v1660 = vpop.f32.mrb[0].mxu0
  %v1661 = vadd.f32 %v282, %v1660
  %v1662 = vpop.f32.mrb[0].mxu0
  %1663 = vmatprep.mubr.bf16.mxu0 0
  %1664 = vmatmul.mubr.bf16.gmra.mrb[0].mxu0 %v1058
  %v1665 = vpop.f32.mrb[0].mxu0
  %v1666 = vadd.f32 %v282, %v1665
  %v1667 = vpop.f32.mrb[0].mxu0
  %v1668 = vpop.f32.mrb[0].mxu0
  %v1669 = vadd.f32 %v282, %v1668
  %v1670 = vpop.f32.mrb[0].mxu0
  %1671 = vmatprep.mubr.bf16.mxu0 0
  %1672 = vmatmul.mubr.bf16.gmra.mrb[0].mxu0 %v1061
  %v1673 = vpop.f32.mrb[0].mxu0
  %v1674 = vadd.f32 %v282, %v1673
  %v1675 = vpop.f32.mrb[0].mxu0
  %v1676 = vpop.f32.mrb[0].mxu0
  %v1677 = vadd.f32 %v282, %v1676
  %v1678 = vpop.f32.mrb[0].mxu0
  %1679 = vmatprep.mubr.bf16.mxu0 0
  %1680 = vmatmul.mubr.bf16.gmra.mrb[0].mxu0 %v1064
  %v1681 = vpop.f32.mrb[0].mxu0
  %v1682 = vadd.f32 %v282, %v1681
  %v1683 = vpop.f32.mrb[0].mxu0
  %v1684 = vpop.f32.mrb[0].mxu0
  %v1685 = vadd.f32 %v282, %v1684
  %v1686 = vpop.f32.mrb[0].mxu0
  %1687 = vmatprep.mubr.bf16.mxu0 0
  %1688 = vmatmul.mubr.bf16.gmra.mrb[0].mxu0 %v1067
  %v1689 = vpop.f32.mrb[0].mxu0
  %v1690 = vadd.f32 %v282, %v1689
  %v1691 = vpop.f32.mrb[0].mxu0
  %v1692 = vpop.f32.mrb[0].mxu0
  %v1693 = vadd.f32 %v282, %v1692
  %v1694 = vpop.f32.mrb[0].mxu0
  %1695 = vmatprep.mubr.bf16.mxu0 0
  %1696 = vmatmul.mubr.bf16.gmra.mrb[0].mxu0 %v1070
  %v1697 = vpop.f32.mrb[0].mxu0
  %v1698 = vadd.f32 %v282, %v1697
  %v1699 = vpop.f32.mrb[0].mxu0
  %v1700 = vpop.f32.mrb[0].mxu0
  %v1701 = vadd.f32 %v282, %v1700
  %v1702 = vpop.f32.mrb[0].mxu0
  %1703 = vmatprep.mubr.bf16.mxu0 0
  %1704 = vmatmul.mubr.bf16.gmra.mrb[0].mxu0 %v1073
  %v1705 = vpop.f32.mrb[0].mxu0
  %v1706 = vadd.f32 %v282, %v1705
  %v1707 = vpop.f32.mrb[0].mxu0
  %v1708 = vpop.f32.mrb[0].mxu0
  %v1709 = vadd.f32 %v282, %v1708
  %v1710 = vpop.f32.mrb[0].mxu0
  %1711 = vmatprep.mubr.bf16.mxu0 0
  %1712 = vmatmul.mubr.bf16.gmra.mrb[0].mxu0 %v1076
  %v1713 = vpop.f32.mrb[0].mxu0
  %v1714 = vadd.f32 %v282, %v1713
  %v1715 = vpop.f32.mrb[0].mxu0
  %v1716 = vpop.f32.mrb[0].mxu0
  %v1717 = vadd.f32 %v282, %v1716
  %v1718 = vpop.f32.mrb[0].mxu0
  %1719 = vmatprep.mubr.bf16.mxu0 0
  %1720 = vmatmul.mubr.bf16.gmra.mrb[0].mxu0 %v1079
  %v1721 = vpop.f32.mrb[0].mxu0
  %v1722 = vadd.f32 %v282, %v1721
  %v1723 = vpop.f32.mrb[0].mxu0
  %v1724 = vpop.f32.mrb[0].mxu0
  %v1725 = vadd.f32 %v282, %v1724
  %v1726 = vpop.f32.mrb[0].mxu0
  %1727 = vmatprep.mubr.bf16.mxu0 0
  %1728 = vmatmul.mubr.bf16.gmra.mrb[0].mxu0 %v1082
  %v1729 = vpop.f32.mrb[0].mxu0
  %v1730 = vadd.f32 %v282, %v1729
  %v1731 = vpop.f32.mrb[0].mxu0
  %v1732 = vpop.f32.mrb[0].mxu0
  %v1733 = vadd.f32 %v282, %v1732
  %v1734 = vpop.f32.mrb[0].mxu0
  %1735 = vmatprep.mubr.bf16.mxu0 0
  %1736 = vmatmul.mubr.bf16.gmra.mrb[0].mxu0 %v1085
  %v1737 = vpop.f32.mrb[0].mxu0
  %v1738 = vadd.f32 %v282, %v1737
  %v1739 = vpop.f32.mrb[0].mxu0
  %v1740 = vpop.f32.mrb[0].mxu0
  %v1741 = vadd.f32 %v282, %v1740
  %v1742 = vpop.f32.mrb[0].mxu0
  %1743 = vmatprep.mubr.bf16.mxu0 0
  %1744 = vmatmul.mubr.bf16.gmra.mrb[0].mxu0 %v1088
  %v1745 = vpop.f32.mrb[0].mxu0
  %v1746 = vadd.f32 %v282, %v1745
  %v1747 = vpop.f32.mrb[0].mxu0
  %v1748 = vpop.f32.mrb[0].mxu0
  %v1749 = vadd.f32 %v282, %v1748
  %v1750 = vpop.f32.mrb[0].mxu0
  %1751 = vmatprep.mubr.bf16.mxu0 0
  %1752 = vmatmul.mubr.bf16.gmra.mrb[0].mxu0 %v1091
  %v1753 = vpop.f32.mrb[0].mxu0
  %v1754 = vadd.f32 %v282, %v1753
  %v1755 = vpop.f32.mrb[0].mxu0
  %v1756 = vpop.f32.mrb[0].mxu0
  %v1757 = vadd.f32 %v282, %v1756
  %v1758 = vpop.f32.mrb[0].mxu0
  %1759 = vmatprep.mubr.bf16.mxu0 0
  %1760 = vmatmul.mubr.bf16.gmra.mrb[0].mxu0 %v1094
  %v1761 = vpop.f32.mrb[0].mxu0
  %v1762 = vadd.f32 %v282, %v1761
  %v1763 = vpop.f32.mrb[0].mxu0
  %v1764 = vpop.f32.mrb[0].mxu0
  %v1765 = vadd.f32 %v282, %v1764
  %v1766 = vpop.f32.mrb[0].mxu0
  %1767 = vmatprep.mubr.bf16.mxu0 0
  %1768 = vmatmul.mubr.bf16.gmra.mrb[0].mxu0 %v1097
  %v1769 = vpop.f32.mrb[0].mxu0
  %v1770 = vadd.f32 %v282, %v1769
  %v1771 = vpop.f32.mrb[0].mxu0
  %v1772 = vpop.f32.mrb[0].mxu0
  %v1773 = vadd.f32 %v282, %v1772
  %v1774 = vpop.f32.mrb[0].mxu0
  %1775 = vmatprep.mubr.bf16.mxu0 0
  %1776 = vmatmul.mubr.bf16.gmra.mrb[0].mxu0 %v1100
  %v1777 = vpop.f32.mrb[0].mxu0
  %v1778 = vadd.f32 %v282, %v1777
  %v1779 = vpop.f32.mrb[0].mxu0
  %v1780 = vpop.f32.mrb[0].mxu0
  %v1781 = vadd.f32 %v282, %v1780
  %v1782 = vpop.f32.mrb[0].mxu0
  %1783 = vmatprep.mubr.bf16.mxu0 0
  %1784 = vmatmul.mubr.bf16.gmra.mrb[0].mxu0 %v1103
  %v1785 = vpop.f32.mrb[0].mxu0
  %v1786 = vadd.f32 %v282, %v1785
  %v1787 = vpop.f32.mrb[0].mxu0
  %v1788 = vpop.f32.mrb[0].mxu0
  %v1789 = vadd.f32 %v282, %v1788
  %v1790 = vpop.f32.mrb[0].mxu0
  %1791 = vmatprep.mubr.bf16.mxu0 0
  %1792 = vmatmul.mubr.bf16.gmra.mrb[0].mxu0 %v1106
  %v1793 = vpop.f32.mrb[0].mxu0
  %v1794 = vadd.f32 %v282, %v1793
  %v1795 = vpop.f32.mrb[0].mxu0
  %v1796 = vpop.f32.mrb[0].mxu0
  %v1797 = vadd.f32 %v282, %v1796
  %v1798 = vpop.f32.mrb[0].mxu0
  %1799 = vmatprep.mubr.bf16.mxu0 0
  %1800 = vmatmul.mubr.bf16.gmra.mrb[0].mxu0 %v1109
  %v1801 = vpop.f32.mrb[0].mxu0
  %v1802 = vadd.f32 %v282, %v1801
  %v1803 = vpop.f32.mrb[0].mxu0
  %v1804 = vpop.f32.mrb[0].mxu0
  %v1805 = vadd.f32 %v282, %v1804
  %v1806 = vpop.f32.mrb[0].mxu0
  %1807 = vmatprep.mubr.bf16.mxu0 0
  %1808 = vmatmul.mubr.bf16.gmra.mrb[0].mxu0 %v1112
  %v1809 = vpop.f32.mrb[0].mxu0
  %v1810 = vadd.f32 %v282, %v1809
  %v1811 = vpop.f32.mrb[0].mxu0
  %v1812 = vpop.f32.mrb[0].mxu0
  %v1813 = vadd.f32 %v282, %v1812
  %v1814 = vpop.f32.mrb[0].mxu0
  %1815 = vmatprep.mubr.bf16.mxu0 0
  %1816 = vmatmul.mubr.bf16.gmra.mrb[0].mxu0 %v1115
  %v1817 = vpop.f32.mrb[0].mxu0
  %v1818 = vadd.f32 %v282, %v1817
  %v1819 = vpop.f32.mrb[0].mxu0
  %v1820 = vpop.f32.mrb[0].mxu0
  %v1821 = vadd.f32 %v282, %v1820
  %v1822 = vpop.f32.mrb[0].mxu0
  %1823 = vmatprep.mubr.bf16.mxu0 0
  %1824 = vmatmul.mubr.bf16.gmra.mrb[0].mxu0 %v1118
  %v1825 = vpop.f32.mrb[0].mxu0
  %v1826 = vadd.f32 %v282, %v1825
  %v1827 = vpop.f32.mrb[0].mxu0
  %v1828 = vpop.f32.mrb[0].mxu0
  %v1829 = vadd.f32 %v282, %v1828
  %v1830 = vpop.f32.mrb[0].mxu0
  %1831 = vmatprep.mubr.bf16.mxu0 0
  %1832 = vmatmul.mubr.bf16.gmra.mrb[0].mxu0 %v1121
  %v1833 = vpop.f32.mrb[0].mxu0
  %v1834 = vadd.f32 %v282, %v1833
  %v1835 = vpop.f32.mrb[0].mxu0
  %v1836 = vpop.f32.mrb[0].mxu0
  %v1837 = vadd.f32 %v282, %v1836
  %v1838 = vpop.f32.mrb[0].mxu0
  %1839 = vmatprep.mubr.bf16.mxu0 0
  %1840 = vmatmul.mubr.bf16.gmra.mrb[0].mxu0 %v1124
  %v1841 = vpop.f32.mrb[0].mxu0
  %v1842 = vadd.f32 %v282, %v1841
  %v1843 = vpop.f32.mrb[0].mxu0
  %v1844 = vpop.f32.mrb[0].mxu0
  %v1845 = vadd.f32 %v282, %v1844
  %v1846 = vpop.f32.mrb[0].mxu0
  %1847 = vmatprep.mubr.bf16.mxu0 0
  %1848 = vmatmul.mubr.bf16.gmra.mrb[0].mxu0 %v1127
  %v1849 = vpop.f32.mrb[0].mxu0
  %v1850 = vadd.f32 %v282, %v1849
  %v1851 = vpop.f32.mrb[0].mxu0
  %v1852 = vpop.f32.mrb[0].mxu0
  %v1853 = vadd.f32 %v282, %v1852
  %v1854 = vpop.f32.mrb[0].mxu0
  %1855 = vmatprep.mubr.bf16.mxu0 0
  %1856 = vmatmul.mubr.bf16.gmra.mrb[0].mxu0 %v1130
  %v1857 = vpop.f32.mrb[0].mxu0
  %v1858 = vadd.f32 %v282, %v1857
  %v1859 = vpop.f32.mrb[0].mxu0
  %v1860 = vpop.f32.mrb[0].mxu0
  %v1861 = vadd.f32 %v282, %v1860
  %v1862 = vpop.f32.mrb[0].mxu0
  %1863 = vmatprep.mubr.bf16.mxu0 0
  %1864 = vmatmul.mubr.bf16.gmra.mrb[0].mxu0 %v1133
  %v1865 = vpop.f32.mrb[0].mxu0
  %v1866 = vadd.f32 %v282, %v1865
  %v1867 = vpop.f32.mrb[0].mxu0
  %v1868 = vpop.f32.mrb[0].mxu0
  %v1869 = vadd.f32 %v282, %v1868
  %v1870 = vpop.f32.mrb[0].mxu0
  %1871 = vmatprep.mubr.bf16.mxu0 0
  %1872 = vmatmul.mubr.bf16.gmra.mrb[0].mxu0 %v1136
  %v1873 = vpop.f32.mrb[0].mxu0
  %v1874 = vadd.f32 %v282, %v1873
  %v1875 = vpop.f32.mrb[0].mxu0
  %v1876 = vpop.f32.mrb[0].mxu0
  %v1877 = vadd.f32 %v282, %v1876
  %v1878 = vpop.f32.mrb[0].mxu0
  %1879 = vmatprep.mubr.bf16.mxu0 0
  %1880 = vmatmul.mubr.bf16.gmra.mrb[0].mxu0 %v1139
  %v1881 = vpop.f32.mrb[0].mxu0
  %v1882 = vadd.f32 %v282, %v1881
  %v1883 = vpop.f32.mrb[0].mxu0
  %v1884 = vpop.f32.mrb[0].mxu0
  %v1885 = vadd.f32 %v282, %v1884
  %v1886 = vpop.f32.mrb[0].mxu0
  %1887 = vmatprep.mubr.bf16.mxu0 0
  %1888 = vmatmul.mubr.bf16.gmra.mrb[0].mxu0 %v1142
  %v1889 = vpop.f32.mrb[0].mxu0
  %v1890 = vadd.f32 %v282, %v1889
  %v1891 = vpop.f32.mrb[0].mxu0
  %v1892 = vpop.f32.mrb[0].mxu0
  %v1893 = vadd.f32 %v282, %v1892
  %v1894 = vpop.f32.mrb[0].mxu0
  %1895 = vmatprep.mubr.bf16.mxu0 0
  %1896 = vmatmul.mubr.bf16.gmra.mrb[0].mxu0 %v1145
  %v1897 = vpop.f32.mrb[0].mxu0
  %v1898 = vadd.f32 %v282, %v1897
  %v1899 = vpop.f32.mrb[0].mxu0
  %v1900 = vpop.f32.mrb[0].mxu0
  %v1901 = vadd.f32 %v282, %v1900
  %v1902 = vpop.f32.mrb[0].mxu0
  %1903 = vmatprep.mubr.bf16.mxu0 0
  %1904 = vmatmul.mubr.bf16.gmra.mrb[0].mxu0 %v1148
  %v1905 = vpop.f32.mrb[0].mxu0
  %v1906 = vadd.f32 %v282, %v1905
  %v1907 = vpop.f32.mrb[0].mxu0
  %v1908 = vpop.f32.mrb[0].mxu0
  %v1909 = vadd.f32 %v282, %v1908
  %v1910 = vpop.f32.mrb[0].mxu0
  %1911 = vmatprep.mubr.bf16.mxu0 0
  %1912 = vmatmul.mubr.bf16.gmra.mrb[0].mxu0 %v1151
  %v1913 = vpop.f32.mrb[0].mxu0
  %v1914 = vadd.f32 %v282, %v1913
  %v1915 = vpop.f32.mrb[0].mxu0
  %v1916 = vpop.f32.mrb[0].mxu0
  %v1917 = vadd.f32 %v282, %v1916
  %v1918 = vpop.f32.mrb[0].mxu0
  %1919 = vmatprep.mubr.bf16.mxu0 0
  %1920 = vmatmul.mubr.bf16.gmra.mrb[0].mxu0 %v1154
  %v1921 = vpop.f32.mrb[0].mxu0
  %v1922 = vadd.f32 %v282, %v1921
  %v1923 = vpop.f32.mrb[0].mxu0
  %v1924 = vpop.f32.mrb[0].mxu0
  %v1925 = vadd.f32 %v282, %v1924
  %v1926 = vpop.f32.mrb[0].mxu0
  %1927 = vmatprep.mubr.bf16.mxu0 0
  %1928 = vmatmul.mubr.bf16.gmra.mrb[0].mxu0 %v1157
  %v1929 = vpop.f32.mrb[0].mxu0
  %v1930 = vadd.f32 %v282, %v1929
  %v1931 = vpop.f32.mrb[0].mxu0
  %v1932 = vpop.f32.mrb[0].mxu0
  %v1933 = vadd.f32 %v282, %v1932
  %v1934 = vpop.f32.mrb[0].mxu0
  %1935 = vmatprep.mubr.bf16.mxu0 0
  %1936 = vmatmul.mubr.bf16.gmra.mrb[0].mxu0 %v1160
  %v1937 = vpop.f32.mrb[0].mxu0
  %v1938 = vadd.f32 %v282, %v1937
  %v1939 = vpop.f32.mrb[0].mxu0
  %v1940 = vpop.f32.mrb[0].mxu0
  %v1941 = vadd.f32 %v282, %v1940
  %v1942 = vpop.f32.mrb[0].mxu0
  %1943 = vmatprep.mubr.bf16.mxu0 0
  %1944 = vmatmul.mubr.bf16.gmra.mrb[0].mxu0 %v1163
  %v1945 = vpop.f32.mrb[0].mxu0
  %v1946 = vadd.f32 %v282, %v1945
  %v1947 = vpop.f32.mrb[0].mxu0
  %v1948 = vpop.f32.mrb[0].mxu0
  %v1949 = vadd.f32 %v282, %v1948
  %v1950 = vpop.f32.mrb[0].mxu0
  %1951 = vmatprep.mubr.bf16.mxu0 0
  %1952 = vmatmul.mubr.bf16.gmra.mrb[0].mxu0 %v1166
  %v1953 = vpop.f32.mrb[0].mxu0
  %v1954 = vadd.f32 %v282, %v1953
  %v1955 = vpop.f32.mrb[0].mxu0
  %v1956 = vpop.f32.mrb[0].mxu0
  %v1957 = vadd.f32 %v282, %v1956
  %v1958 = vpop.f32.mrb[0].mxu0
  %1959 = vmatprep.mubr.bf16.mxu0 0
  %1960 = vmatmul.mubr.bf16.gmra.mrb[0].mxu0 %v1169
  %v1961 = vpop.f32.mrb[0].mxu0
  %v1962 = vadd.f32 %v282, %v1961
  %v1963 = vpop.f32.mrb[0].mxu0
  %v1964 = vpop.f32.mrb[0].mxu0
  %v1965 = vadd.f32 %v282, %v1964
  %v1966 = vpop.f32.mrb[0].mxu0
  %1967 = vmatprep.mubr.bf16.mxu0 0
  %1968 = vmatmul.mubr.bf16.gmra.mrb[0].mxu0 %v1172
  %v1969 = vpop.f32.mrb[0].mxu0
  %v1970 = vadd.f32 %v282, %v1969
  %v1971 = vpop.f32.mrb[0].mxu0
  %v1972 = vpop.f32.mrb[0].mxu0
  %v1973 = vadd.f32 %v282, %v1972
  %v1974 = vpop.f32.mrb[0].mxu0
  %1975 = vmatprep.mubr.bf16.mxu0 0
  %1976 = vmatmul.mubr.bf16.gmra.mrb[0].mxu0 %v1175
  %v1977 = vpop.f32.mrb[0].mxu0
  %v1978 = vadd.f32 %v282, %v1977
  %v1979 = vpop.f32.mrb[0].mxu0
  %v1980 = vpop.f32.mrb[0].mxu0
  %v1981 = vadd.f32 %v282, %v1980
  %v1982 = vpop.f32.mrb[0].mxu0
  %1983 = vmatprep.mubr.bf16.mxu0 0
  %1984 = vmatmul.mubr.bf16.gmra.mrb[0].mxu0 %v1178
  %v1985 = vpop.f32.mrb[0].mxu0
  %v1986 = vadd.f32 %v282, %v1985
  %v1987 = vpop.f32.mrb[0].mxu0
  %v1988 = vpop.f32.mrb[0].mxu0
  %v1989 = vadd.f32 %v282, %v1988
  %v1990 = vpop.f32.mrb[0].mxu0
  %1991 = vmatprep.mubr.bf16.mxu0 0
  %1992 = vmatmul.mubr.bf16.gmra.mrb[0].mxu0 %v1181
  %v1993 = vpop.f32.mrb[0].mxu0
  %v1994 = vadd.f32 %v282, %v1993
  %v1995 = vpop.f32.mrb[0].mxu0
  %v1996 = vpop.f32.mrb[0].mxu0
  %v1997 = vadd.f32 %v282, %v1996
  %v1998 = vpop.f32.mrb[0].mxu0
  %1999 = vmatprep.mubr.bf16.mxu0 0
  %2000 = vmatmul.mubr.bf16.gmra.mrb[0].mxu0 %v1184
  %v2001 = vpop.f32.mrb[0].mxu0
  %v2002 = vadd.f32 %v282, %v2001
  %v2003 = vpop.f32.mrb[0].mxu0
  %v2004 = vpop.f32.mrb[0].mxu0
  %v2005 = vadd.f32 %v282, %v2004
  %v2006 = vpop.f32.mrb[0].mxu0
  %2007 = vmatprep.mubr.bf16.mxu0 0
  %2008 = vmatmul.mubr.bf16.gmra.mrb[0].mxu0 %v1187
  %v2009 = vpop.f32.mrb[0].mxu0
  %v2010 = vadd.f32 %v282, %v2009
  %v2011 = vpop.f32.mrb[0].mxu0
  %v2012 = vpop.f32.mrb[0].mxu0
  %v2013 = vadd.f32 %v282, %v2012
  %v2014 = vpop.f32.mrb[0].mxu0
  %2015 = vmatprep.mubr.bf16.mxu0 0
  %2016 = vmatmul.mubr.bf16.gmra.mrb[0].mxu0 %v1190
  %v2017 = vpop.f32.mrb[0].mxu0
  %v2018 = vadd.f32 %v282, %v2017
  %v2019 = vpop.f32.mrb[0].mxu0
  %v2020 = vpop.f32.mrb[0].mxu0
  %v2021 = vadd.f32 %v282, %v2020
  %v2022 = vpop.f32.mrb[0].mxu0
  %2023 = vmatprep.mubr.bf16.mxu0 0
  %2024 = vmatmul.mubr.bf16.gmra.mrb[0].mxu0 %v1193
  %v2025 = vpop.f32.mrb[0].mxu0
  %v2026 = vadd.f32 %v282, %v2025
  %v2027 = vpop.f32.mrb[0].mxu0
  %v2028 = vpop.f32.mrb[0].mxu0
  %v2029 = vadd.f32 %v282, %v2028
  %v2030 = vpop.f32.mrb[0].mxu0
  %2031 = vmatprep.mubr.bf16.mxu0 0
  %2032 = vmatmul.mubr.bf16.gmra.mrb[0].mxu0 %v1196
  %v2033 = vpop.f32.mrb[0].mxu0
  %v2034 = vadd.f32 %v282, %v2033
  %v2035 = vpop.f32.mrb[0].mxu0
  %v2036 = vpop.f32.mrb[0].mxu0
  %v2037 = vadd.f32 %v282, %v2036
  %v2038 = vpop.f32.mrb[0].mxu0
  %2039 = vmatprep.mubr.bf16.mxu0 0
  %2040 = vmatmul.mubr.bf16.gmra.mrb[0].mxu0 %v1199
  %v2041 = vpop.f32.mrb[0].mxu0
  %v2042 = vadd.f32 %v282, %v2041
  %v2043 = vpop.f32.mrb[0].mxu0
  %v2044 = vpop.f32.mrb[0].mxu0
  %v2045 = vadd.f32 %v282, %v2044
  %v2046 = vpop.f32.mrb[0].mxu0
  %2047 = vmatprep.mubr.bf16.mxu0 0
  %2048 = vmatmul.mubr.bf16.gmra.mrb[0].mxu0 %v1202
  %v2049 = vpop.f32.mrb[0].mxu0
  %v2050 = vadd.f32 %v282, %v2049
  %v2051 = vpop.f32.mrb[0].mxu0
  %v2052 = vpop.f32.mrb[0].mxu0
  %v2053 = vadd.f32 %v282, %v2052
  %v2054 = vpop.f32.mrb[0].mxu0
  %2055 = vmatprep.mubr.bf16.mxu0 0
  %2056 = vmatmul.mubr.bf16.gmra.mrb[0].mxu0 %v1205
  %v2057 = vpop.f32.mrb[0].mxu0
  %v2058 = vadd.f32 %v282, %v2057
  %v2059 = vpop.f32.mrb[0].mxu0
  %v2060 = vpop.f32.mrb[0].mxu0
  %v2061 = vadd.f32 %v282, %v2060
  %v2062 = vpop.f32.mrb[0].mxu0
  %2063 = vmatprep.mubr.bf16.mxu0 0
  %2064 = vmatmul.mubr.bf16.gmra.mrb[0].mxu0 %v1208
  %v2065 = vpop.f32.mrb[0].mxu0
  %v2066 = vadd.f32 %v282, %v2065
  %v2067 = vpop.f32.mrb[0].mxu0
  %v2068 = vpop.f32.mrb[0].mxu0
  %v2069 = vadd.f32 %v282, %v2068
  %v2070 = vpop.f32.mrb[0].mxu0
  %2071 = vmatprep.mubr.bf16.mxu0 0
  %2072 = vmatmul.mubr.bf16.gmra.mrb[0].mxu0 %v1211
  %v2073 = vpop.f32.mrb[0].mxu0
  %v2074 = vadd.f32 %v282, %v2073
  %v2075 = vpop.f32.mrb[0].mxu0
  %v2076 = vpop.f32.mrb[0].mxu0
  %v2077 = vadd.f32 %v282, %v2076
  %v2078 = vpop.f32.mrb[0].mxu0
  %2079 = vmatprep.mubr.bf16.mxu0 0
  %2080 = vmatmul.mubr.bf16.gmra.mrb[0].mxu0 %v1214
  %v2081 = vpop.f32.mrb[0].mxu0
  %v2082 = vadd.f32 %v282, %v2081
  %v2083 = vpop.f32.mrb[0].mxu0
  %v2084 = vpop.f32.mrb[0].mxu0
  %v2085 = vadd.f32 %v282, %v2084
  %v2086 = vpop.f32.mrb[0].mxu0
  %2087 = vmatprep.mubr.bf16.mxu0 0
  %2088 = vmatmul.mubr.bf16.gmra.mrb[0].mxu0 %v1217
  %v2089 = vpop.f32.mrb[0].mxu0
  %v2090 = vadd.f32 %v282, %v2089
  %v2091 = vpop.f32.mrb[0].mxu0
  %v2092 = vpop.f32.mrb[0].mxu0
  %v2093 = vadd.f32 %v282, %v2092
  %v2094 = vpop.f32.mrb[0].mxu0
  %2095 = vmatprep.mubr.bf16.mxu0 0
  %2096 = vmatmul.mubr.bf16.gmra.mrb[0].mxu0 %v1220
  %v2097 = vpop.f32.mrb[0].mxu0
  %v2098 = vadd.f32 %v282, %v2097
  %v2099 = vpop.f32.mrb[0].mxu0
  %v2100 = vpop.f32.mrb[0].mxu0
  %v2101 = vadd.f32 %v282, %v2100
  %v2102 = vpop.f32.mrb[0].mxu0
  %2103 = vmatprep.mubr.bf16.mxu0 0
  %2104 = vmatmul.mubr.bf16.gmra.mrb[0].mxu0 %v1223
  %v2105 = vpop.f32.mrb[0].mxu0
  %v2106 = vadd.f32 %v282, %v2105
  %v2107 = vpop.f32.mrb[0].mxu0
  %v2108 = vpop.f32.mrb[0].mxu0
  %v2109 = vadd.f32 %v282, %v2108
  %v2110 = vpop.f32.mrb[0].mxu0
  %2111 = vmatprep.mubr.bf16.mxu0 0
  %2112 = vmatmul.mubr.bf16.gmra.mrb[0].mxu0 %v1226
  %v2113 = vpop.f32.mrb[0].mxu0
  %v2114 = vadd.f32 %v282, %v2113
  %v2115 = vpop.f32.mrb[0].mxu0
  %v2116 = vpop.f32.mrb[0].mxu0
  %v2117 = vadd.f32 %v282, %v2116
  %v2118 = vpop.f32.mrb[0].mxu0
  %2119 = vmatprep.mubr.bf16.mxu0 0
  %2120 = vmatmul.mubr.bf16.gmra.mrb[0].mxu0 %v1229
  %v2121 = vpop.f32.mrb[0].mxu0
  %v2122 = vadd.f32 %v282, %v2121
  %v2123 = vpop.f32.mrb[0].mxu0
  %v2124 = vpop.f32.mrb[0].mxu0
  %v2125 = vadd.f32 %v282, %v2124
  %v2126 = vpop.f32.mrb[0].mxu0
  %2127 = vmatprep.mubr.bf16.mxu0 0
  %2128 = vmatmul.mubr.bf16.gmra.mrb[0].mxu0 %v1232
  %v2129 = vpop.f32.mrb[0].mxu0
  %v2130 = vadd.f32 %v282, %v2129
  %v2131 = vpop.f32.mrb[0].mxu0
  %v2132 = vpop.f32.mrb[0].mxu0
  %v2133 = vadd.f32 %v282, %v2132
  %v2134 = vpop.f32.mrb[0].mxu0
  %2135 = vmatprep.mubr.bf16.mxu0 0
  %2136 = vmatmul.mubr.bf16.gmra.mrb[0].mxu0 %v1235
  %v2137 = vpop.f32.mrb[0].mxu0
  %v2138 = vadd.f32 %v282, %v2137
  %v2139 = vpop.f32.mrb[0].mxu0
  %v2140 = vpop.f32.mrb[0].mxu0
  %v2141 = vadd.f32 %v282, %v2140
  %v2142 = vpop.f32.mrb[0].mxu0
  %2143 = vmatprep.mubr.bf16.mxu0 0
  %2144 = vmatmul.mubr.bf16.gmra.mrb[0].mxu0 %v1238
  %v2145 = vpop.f32.mrb[0].mxu0
  %v2146 = vadd.f32 %v282, %v2145
  %v2147 = vpop.f32.mrb[0].mxu0
  %v2148 = vpop.f32.mrb[0].mxu0
  %v2149 = vadd.f32 %v282, %v2148
  %v2150 = vpop.f32.mrb[0].mxu0
  %2151 = vmatprep.mubr.bf16.mxu0 0
  %2152 = vmatmul.mubr.bf16.gmra.mrb[0].mxu0 %v1241
  %v2153 = vpop.f32.mrb[0].mxu0
  %v2154 = vadd.f32 %v282, %v2153
  %v2155 = vpop.f32.mrb[0].mxu0
  %v2156 = vpop.f32.mrb[0].mxu0
  %v2157 = vadd.f32 %v282, %v2156
  %v2158 = vpop.f32.mrb[0].mxu0
  %2159 = vmatprep.mubr.bf16.mxu0 0
  %2160 = vmatmul.mubr.bf16.gmra.mrb[0].mxu0 %v1244
  %v2161 = vpop.f32.mrb[0].mxu0
  %v2162 = vadd.f32 %v282, %v2161
  %v2163 = vpop.f32.mrb[0].mxu0
  %v2164 = vpop.f32.mrb[0].mxu0
  %v2165 = vadd.f32 %v282, %v2164
  %v2166 = vpop.f32.mrb[0].mxu0
  %2167 = vmatprep.mubr.bf16.mxu0 0
  %2168 = vmatmul.mubr.bf16.gmra.mrb[0].mxu0 %v1247
  %v2169 = vpop.f32.mrb[0].mxu0
  %v2170 = vadd.f32 %v282, %v2169
  %v2171 = vpop.f32.mrb[0].mxu0
  %v2172 = vpop.f32.mrb[0].mxu0
  %v2173 = vadd.f32 %v282, %v2172
  %v2174 = vpop.f32.mrb[0].mxu0
  %2175 = vmatprep.mubr.bf16.mxu0 0
  %2176 = vmatmul.mubr.bf16.gmra.mrb[0].mxu0 %v1250
  %v2177 = vpop.f32.mrb[0].mxu0
  %v2178 = vadd.f32 %v282, %v2177
  %v2179 = vpop.f32.mrb[0].mxu0
  %v2180 = vpop.f32.mrb[0].mxu0
  %v2181 = vadd.f32 %v282, %v2180
  %v2182 = vpop.f32.mrb[0].mxu0
  %2183 = vmatprep.mubr.bf16.mxu0 0
  %2184 = vmatmul.mubr.bf16.gmra.mrb[0].mxu0 %v1253
  %v2185 = vpop.f32.mrb[0].mxu0
  %v2186 = vadd.f32 %v282, %v2185
  %v2187 = vpop.f32.mrb[0].mxu0
  %v2188 = vpop.f32.mrb[0].mxu0
  %v2189 = vadd.f32 %v282, %v2188
  %v2190 = vpop.f32.mrb[0].mxu0
  %2191 = vmatprep.mubr.bf16.mxu0 0
  %2192 = vmatmul.mubr.bf16.gmra.mrb[0].mxu0 %v1256
  %v2193 = vpop.f32.mrb[0].mxu0
  %v2194 = vadd.f32 %v282, %v2193
  %v2195 = vpop.f32.mrb[0].mxu0
  %v2196 = vpop.f32.mrb[0].mxu0
  %v2197 = vadd.f32 %v282, %v2196
  %v2198 = vpop.f32.mrb[0].mxu0
  %2199 = vmatprep.mubr.bf16.mxu0 0
  %2200 = vmatmul.mubr.bf16.gmra.mrb[0].mxu0 %v1259
  %v2201 = vpop.f32.mrb[0].mxu0
  %v2202 = vadd.f32 %v282, %v2201
  %v2203 = vpop.f32.mrb[0].mxu0
  %v2204 = vpop.f32.mrb[0].mxu0
  %v2205 = vadd.f32 %v282, %v2204
  %v2206 = vpop.f32.mrb[0].mxu0
  %2207 = vmatprep.mubr.bf16.mxu0 0
  %2208 = vmatmul.mubr.bf16.gmra.mrb[0].mxu0 %v1262
  %v2209 = vpop.f32.mrb[0].mxu0
  %v2210 = vadd.f32 %v282, %v2209
  %v2211 = vpop.f32.mrb[0].mxu0
  %v2212 = vpop.f32.mrb[0].mxu0
  %v2213 = vadd.f32 %v282, %v2212
  %v2214 = vpop.f32.mrb[0].mxu0
  %2215 = vmatprep.mubr.bf16.mxu0 0
  %2216 = vmatmul.mubr.bf16.gmra.mrb[0].mxu0 %v1265
  %v2217 = vpop.f32.mrb[0].mxu0
  %v2218 = vadd.f32 %v282, %v2217
  %v2219 = vpop.f32.mrb[0].mxu0
  %v2220 = vpop.f32.mrb[0].mxu0
  %v2221 = vadd.f32 %v282, %v2220
  %v2222 = vpop.f32.mrb[0].mxu0
  %2223 = vmatprep.mubr.bf16.mxu0 0
  %2224 = vmatmul.mubr.bf16.gmra.mrb[0].mxu0 %v1268
  %v2225 = vpop.f32.mrb[0].mxu0
  %v2226 = vadd.f32 %v282, %v2225
  %v2227 = vpop.f32.mrb[0].mxu0
  %v2228 = vpop.f32.mrb[0].mxu0
  %v2229 = vadd.f32 %v282, %v2228
  %v2230 = vpop.f32.mrb[0].mxu0
  %2231 = vmatprep.mubr.bf16.mxu0 0
  %2232 = vmatmul.mubr.bf16.gmra.mrb[0].mxu0 %v1271
  %v2233 = vpop.f32.mrb[0].mxu0
  %v2234 = vadd.f32 %v282, %v2233
  %v2235 = vpop.f32.mrb[0].mxu0
  %v2236 = vpop.f32.mrb[0].mxu0
  %v2237 = vadd.f32 %v282, %v2236
  %v2238 = vpop.f32.mrb[0].mxu0
  %2239 = vmatprep.mubr.bf16.mxu0 0
  %2240 = vmatmul.mubr.bf16.gmra.mrb[0].mxu0 %v1274
  %v2241 = vpop.f32.mrb[0].mxu0
  %v2242 = vadd.f32 %v282, %v2241
  %v2243 = vpop.f32.mrb[0].mxu0
  %v2244 = vpop.f32.mrb[0].mxu0
  %v2245 = vadd.f32 %v282, %v2244
  %v2246 = vpop.f32.mrb[0].mxu0
  %2247 = vmatprep.mubr.bf16.mxu0 0
  %2248 = vmatmul.mubr.bf16.gmra.mrb[0].mxu0 %v1277
  %v2249 = vpop.f32.mrb[0].mxu0
  %v2250 = vadd.f32 %v282, %v2249
  %v2251 = vpop.f32.mrb[0].mxu0
  %v2252 = vpop.f32.mrb[0].mxu0
  %v2253 = vadd.f32 %v282, %v2252
  %v2254 = vpop.f32.mrb[0].mxu0
  %2255 = vmatprep.mubr.bf16.mxu0 0
  %2256 = vmatmul.mubr.bf16.gmra.mrb[0].mxu0 %v1280
  %v2257 = vpop.f32.mrb[0].mxu0
  %v2258 = vadd.f32 %v282, %v2257
  %v2259 = vpop.f32.mrb[0].mxu0
  %v2260 = vpop.f32.mrb[0].mxu0
  %v2261 = vadd.f32 %v282, %v2260
  %v2262 = vpop.f32.mrb[0].mxu0
  %2263 = vmatprep.mubr.bf16.mxu0 0
  %2264 = vmatmul.mubr.bf16.gmra.mrb[0].mxu0 %v1283
  %v2265 = vpop.f32.mrb[0].mxu0
  %v2266 = vadd.f32 %v282, %v2265
  %v2267 = vpop.f32.mrb[0].mxu0
  %v2268 = vpop.f32.mrb[0].mxu0
  %v2269 = vadd.f32 %v282, %v2268
  %v2270 = vpop.f32.mrb[0].mxu0
  %2271 = vmatprep.mubr.bf16.mxu0 0
  %2272 = vmatmul.mubr.bf16.gmra.mrb[0].mxu0 %v1286
  %v2273 = vpop.f32.mrb[0].mxu0
  %v2274 = vadd.f32 %v282, %v2273
  %v2275 = vpop.f32.mrb[0].mxu0
  %v2276 = vpop.f32.mrb[0].mxu0
  %v2277 = vadd.f32 %v282, %v2276
  %v2278 = vpop.f32.mrb[0].mxu0
  %2279 = vmatprep.mubr.bf16.mxu0 0
  %2280 = vmatmul.mubr.bf16.gmra.mrb[0].mxu0 %v1289
  %v2281 = vpop.f32.mrb[0].mxu0
  %v2282 = vadd.f32 %v282, %v2281
  %v2283 = vpop.f32.mrb[0].mxu0
  %v2284 = vpop.f32.mrb[0].mxu0
  %v2285 = vadd.f32 %v282, %v2284
  %v2286 = vpop.f32.mrb[0].mxu0
  %2287 = vmatprep.mubr.bf16.mxu0 0
  %2288 = vmatmul.mubr.bf16.gmra.mrb[0].mxu0 %v1292
  %v2289 = vpop.f32.mrb[0].mxu0
  %v2290 = vadd.f32 %v282, %v2289
  %v2291 = vpop.f32.mrb[0].mxu0
  %v2292 = vpop.f32.mrb[0].mxu0
  %v2293 = vadd.f32 %v282, %v2292
  %v2294 = vpop.f32.mrb[0].mxu0
  %2295 = vmatprep.mubr.bf16.mxu0 0
  %2296 = vmatmul.mubr.bf16.gmra.mrb[0].mxu0 %v1295
  %v2297 = vpop.f32.mrb[0].mxu0
  %v2298 = vadd.f32 %v282, %v2297
  %v2299 = vpop.f32.mrb[0].mxu0
  %v2300 = vpop.f32.mrb[0].mxu0
  %v2301 = vadd.f32 %v282, %v2300
  %v2302 = vpop.f32.mrb[0].mxu0
  %2303 = vmatprep.mubr.bf16.mxu0 0
  %2304 = vmatmul.mubr.bf16.gmra.mrb[0].mxu0 %v1298
  %v2305 = vpop.f32.mrb[0].mxu0
  %v2306 = vadd.f32 %v282, %v2305
  %v2307 = vpop.f32.mrb[0].mxu0
  %v2308 = vpop.f32.mrb[0].mxu0
  %v2309 = vadd.f32 %v282, %v2308
  %v2310 = vpop.f32.mrb[0].mxu0
  %2311 = vmatprep.mubr.bf16.mxu0 0
  %2312 = vmatmul.mubr.bf16.gmra.mrb[0].mxu0 %v1301
  %v2313 = vpop.f32.mrb[0].mxu0
  %v2314 = vadd.f32 %v282, %v2313
  %v2315 = vpop.f32.mrb[0].mxu0
  %v2316 = vpop.f32.mrb[0].mxu0
  %v2317 = vadd.f32 %v282, %v2316
  %v2318 = vpop.f32.mrb[0].mxu0
  %2319 = vmatprep.mubr.bf16.mxu0 0
  %2320 = vmatmul.mubr.bf16.gmra.mrb[0].mxu0 %v1304
  %v2321 = vpop.f32.mrb[0].mxu0
  %v2322 = vadd.f32 %v282, %v2321
  %v2323 = vpop.f32.mrb[0].mxu0
  %v2324 = vpop.f32.mrb[0].mxu0
  %v2325 = vadd.f32 %v282, %v2324
  %v2326 = vpop.f32.mrb[0].mxu0
  %2327 = vmatprep.mubr.bf16.mxu0 0
  %2328 = vmatmul.mubr.bf16.gmra.mrb[0].mxu0 %v1307
  %v2329 = vpop.f32.mrb[0].mxu0
  %v2330 = vadd.f32 %v282, %v2329
  %v2331 = vpop.f32.mrb[0].mxu0
  %v2332 = vpop.f32.mrb[0].mxu0
  %v2333 = vadd.f32 %v282, %v2332
  %v2334 = vpop.f32.mrb[0].mxu0
  %2335 = vmatprep.mubr.bf16.mxu0 0
  %2336 = vmatmul.mubr.bf16.gmra.mrb[0].mxu0 %v1310
  %v2337 = vpop.f32.mrb[0].mxu0
  %v2338 = vadd.f32 %v282, %v2337
  %v2339 = vpop.f32.mrb[0].mxu0
  %v2340 = vpop.f32.mrb[0].mxu0
  %v2341 = vadd.f32 %v282, %v2340
  %v2342 = vpop.f32.mrb[0].mxu0
  %2343 = vmatprep.mubr.bf16.mxu0 0
  %2344 = vmatmul.mubr.bf16.gmra.mrb[0].mxu0 %v1313
  %v2345 = vpop.f32.mrb[0].mxu0
  %v2346 = vadd.f32 %v282, %v2345
  %v2347 = vpop.f32.mrb[0].mxu0
  %v2348 = vpop.f32.mrb[0].mxu0
  %v2349 = vadd.f32 %v282, %v2348
  %v2350 = vpop.f32.mrb[0].mxu0
  %2351 = vmatprep.mubr.bf16.mxu0 0
  %2352 = vmatmul.mubr.bf16.gmra.mrb[0].mxu0 %v1316
  %v2353 = vpop.f32.mrb[0].mxu0
  %v2354 = vadd.f32 %v282, %v2353
  %v2355 = vpop.f32.mrb[0].mxu0
  %v2356 = vpop.f32.mrb[0].mxu0
  %v2357 = vadd.f32 %v282, %v2356
  %v2358 = vpop.f32.mrb[0].mxu0
  %2359 = vmatprep.mubr.bf16.mxu0 0
  %2360 = vmatmul.mubr.bf16.gmra.mrb[0].mxu0 %v1319
  %v2361 = vpop.f32.mrb[0].mxu0
  %v2362 = vadd.f32 %v282, %v2361
  %v2363 = vpop.f32.mrb[0].mxu0
  %v2364 = vpop.f32.mrb[0].mxu0
  %v2365 = vadd.f32 %v282, %v2364
  %v2366 = vpop.f32.mrb[0].mxu0
  %2367 = vmatprep.mubr.bf16.mxu0 0
  %2368 = vmatmul.mubr.bf16.gmra.mrb[0].mxu0 %v1322
  %v2369 = vpop.f32.mrb[0].mxu0
  %v2370 = vadd.f32 %v282, %v2369
  %v2371 = vpop.f32.mrb[0].mxu0
  %v2372 = vpop.f32.mrb[0].mxu0
  %v2373 = vadd.f32 %v282, %v2372
  %v2374 = vpop.f32.mrb[0].mxu0
  %2375 = vmatprep.mubr.bf16.mxu0 0
  %2376 = vmatmul.mubr.bf16.gmra.mrb[0].mxu0 %v1325
  %v2377 = vpop.f32.mrb[0].mxu0
  %v2378 = vadd.f32 %v282, %v2377
  %v2379 = vpop.f32.mrb[0].mxu0
  %v2380 = vpop.f32.mrb[0].mxu0
  %v2381 = vadd.f32 %v282, %v2380
  %v2382 = vpop.f32.mrb[0].mxu0
  %2383 = vdwg.mxu0
  %v2384 = vmax.f32 %v1362, 0.0
  %v2385 = vmax.f32 %v1365, 0.0
  %v2386 = vmax.f32 %v1370, 0.0
  %v2387 = vmax.f32 %v1373, 0.0
  %v2388 = vmax.f32 %v1378, 0.0
  %v2389 = vmax.f32 %v1381, 0.0
  %v2390 = vmax.f32 %v1386, 0.0
  %v2391 = vmax.f32 %v1389, 0.0
  %v2392 = vmax.f32 %v1394, 0.0
  %v2393 = vmax.f32 %v1397, 0.0
  %v2394 = vmax.f32 %v1402, 0.0
  %v2395 = vmax.f32 %v1405, 0.0
  %v2396 = vmax.f32 %v1410, 0.0
  %v2397 = vmax.f32 %v1413, 0.0
  %v2398 = vmax.f32 %v1418, 0.0
  %v2399 = vmax.f32 %v1421, 0.0
  %v2400 = vmax.f32 %v1426, 0.0
  %v2401 = vmax.f32 %v1429, 0.0
  %v2402 = vmax.f32 %v1434, 0.0
  %v2403 = vmax.f32 %v1437, 0.0
  %v2404 = vmax.f32 %v1442, 0.0
  %v2405 = vmax.f32 %v1445, 0.0
  %v2406 = vmax.f32 %v1450, 0.0
  %v2407 = vmax.f32 %v1453, 0.0
  %v2408 = vmax.f32 %v1458, 0.0
  %v2409 = vmax.f32 %v1461, 0.0
  %v2410 = vmax.f32 %v1466, 0.0
  %v2411 = vmax.f32 %v1469, 0.0
  %v2412 = vmax.f32 %v1474, 0.0
  %v2413 = vmax.f32 %v1477, 0.0
  %v2414 = vmax.f32 %v1482, 0.0
  %v2415 = vmax.f32 %v1485, 0.0
  %v2416 = vmax.f32 %v1490, 0.0
  %v2417 = vmax.f32 %v1493, 0.0
  %v2418 = vmax.f32 %v1498, 0.0
  %v2419 = vmax.f32 %v1501, 0.0
  %v2420 = vmax.f32 %v1506, 0.0
  %v2421 = vmax.f32 %v1509, 0.0
  %v2422 = vmax.f32 %v1514, 0.0
  %v2423 = vmax.f32 %v1517, 0.0
  %v2424 = vmax.f32 %v1522, 0.0
  %v2425 = vmax.f32 %v1525, 0.0
  %v2426 = vmax.f32 %v1530, 0.0
  %v2427 = vmax.f32 %v1533, 0.0
  %v2428 = vmax.f32 %v1538, 0.0
  %v2429 = vmax.f32 %v1541, 0.0
  %v2430 = vmax.f32 %v1546, 0.0
  %v2431 = vmax.f32 %v1549, 0.0
  %v2432 = vmax.f32 %v1554, 0.0
  %v2433 = vmax.f32 %v1557, 0.0
  %v2434 = vmax.f32 %v1562, 0.0
  %v2435 = vmax.f32 %v1565, 0.0
  %v2436 = vmax.f32 %v1570, 0.0
  %v2437 = vmax.f32 %v1573, 0.0
  %v2438 = vmax.f32 %v1578, 0.0
  %v2439 = vmax.f32 %v1581, 0.0
  %v2440 = vmax.f32 %v1586, 0.0
  %v2441 = vmax.f32 %v1589, 0.0
  %v2442 = vmax.f32 %v1594, 0.0
  %v2443 = vmax.f32 %v1597, 0.0
  %v2444 = vmax.f32 %v1602, 0.0
  %v2445 = vmax.f32 %v1605, 0.0
  %v2446 = vmax.f32 %v1610, 0.0
  %v2447 = vmax.f32 %v1613, 0.0
  %v2448 = vmax.f32 %v1618, 0.0
  %v2449 = vmax.f32 %v1621, 0.0
  %v2450 = vmax.f32 %v1626, 0.0
  %v2451 = vmax.f32 %v1629, 0.0
  %v2452 = vmax.f32 %v1634, 0.0
  %v2453 = vmax.f32 %v1637, 0.0
  %v2454 = vmax.f32 %v1642, 0.0
  %v2455 = vmax.f32 %v1645, 0.0
  %v2456 = vmax.f32 %v1650, 0.0
  %v2457 = vmax.f32 %v1653, 0.0
  %v2458 = vmax.f32 %v1658, 0.0
  %v2459 = vmax.f32 %v1661, 0.0
  %v2460 = vmax.f32 %v1666, 0.0
  %v2461 = vmax.f32 %v1669, 0.0
  %v2462 = vmax.f32 %v1674, 0.0
  %v2463 = vmax.f32 %v1677, 0.0
  %v2464 = vmax.f32 %v1682, 0.0
  %v2465 = vmax.f32 %v1685, 0.0
  %v2466 = vmax.f32 %v1690, 0.0
  %v2467 = vmax.f32 %v1693, 0.0
  %v2468 = vmax.f32 %v1698, 0.0
  %v2469 = vmax.f32 %v1701, 0.0
  %v2470 = vmax.f32 %v1706, 0.0
  %v2471 = vmax.f32 %v1709, 0.0
  %v2472 = vmax.f32 %v1714, 0.0
  %v2473 = vmax.f32 %v1717, 0.0
  %v2474 = vmax.f32 %v1722, 0.0
  %v2475 = vmax.f32 %v1725, 0.0
  %v2476 = vmax.f32 %v1730, 0.0
  %v2477 = vmax.f32 %v1733, 0.0
  %v2478 = vmax.f32 %v1738, 0.0
  %v2479 = vmax.f32 %v1741, 0.0
  %v2480 = vmax.f32 %v1746, 0.0
  %v2481 = vmax.f32 %v1749, 0.0
  %v2482 = vmax.f32 %v1754, 0.0
  %v2483 = vmax.f32 %v1757, 0.0
  %v2484 = vmax.f32 %v1762, 0.0
  %v2485 = vmax.f32 %v1765, 0.0
  %v2486 = vmax.f32 %v1770, 0.0
  %v2487 = vmax.f32 %v1773, 0.0
  %v2488 = vmax.f32 %v1778, 0.0
  %v2489 = vmax.f32 %v1781, 0.0
  %v2490 = vmax.f32 %v1786, 0.0
  %v2491 = vmax.f32 %v1789, 0.0
  %v2492 = vmax.f32 %v1794, 0.0
  %v2493 = vmax.f32 %v1797, 0.0
  %v2494 = vmax.f32 %v1802, 0.0
  %v2495 = vmax.f32 %v1805, 0.0
  %v2496 = vmax.f32 %v1810, 0.0
  %v2497 = vmax.f32 %v1813, 0.0
  %v2498 = vmax.f32 %v1818, 0.0
  %v2499 = vmax.f32 %v1821, 0.0
  %v2500 = vmax.f32 %v1826, 0.0
  %v2501 = vmax.f32 %v1829, 0.0
  %v2502 = vmax.f32 %v1834, 0.0
  %v2503 = vmax.f32 %v1837, 0.0
  %v2504 = vmax.f32 %v1842, 0.0
  %v2505 = vmax.f32 %v1845, 0.0
  %v2506 = vmax.f32 %v1850, 0.0
  %v2507 = vmax.f32 %v1853, 0.0
  %v2508 = vmax.f32 %v1858, 0.0
  %v2509 = vmax.f32 %v1861, 0.0
  %v2510 = vmax.f32 %v1866, 0.0
  %v2511 = vmax.f32 %v1869, 0.0
  %v2512 = vmax.f32 %v1874, 0.0
  %v2513 = vmax.f32 %v1877, 0.0
  %v2514 = vmax.f32 %v1882, 0.0
  %v2515 = vmax.f32 %v1885, 0.0
  %v2516 = vmax.f32 %v1890, 0.0
  %v2517 = vmax.f32 %v1893, 0.0
  %v2518 = vmax.f32 %v1898, 0.0
  %v2519 = vmax.f32 %v1901, 0.0
  %v2520 = vmax.f32 %v1906, 0.0
  %v2521 = vmax.f32 %v1909, 0.0
  %v2522 = vmax.f32 %v1914, 0.0
  %v2523 = vmax.f32 %v1917, 0.0
  %v2524 = vmax.f32 %v1922, 0.0
  %v2525 = vmax.f32 %v1925, 0.0
  %v2526 = vmax.f32 %v1930, 0.0
  %v2527 = vmax.f32 %v1933, 0.0
  %v2528 = vmax.f32 %v1938, 0.0
  %v2529 = vmax.f32 %v1941, 0.0
  %v2530 = vmax.f32 %v1946, 0.0
  %v2531 = vmax.f32 %v1949, 0.0
  %v2532 = vmax.f32 %v1954, 0.0
  %v2533 = vmax.f32 %v1957, 0.0
  %v2534 = vmax.f32 %v1962, 0.0
  %v2535 = vmax.f32 %v1965, 0.0
  %v2536 = vmax.f32 %v1970, 0.0
  %v2537 = vmax.f32 %v1973, 0.0
  %v2538 = vmax.f32 %v1978, 0.0
  %v2539 = vmax.f32 %v1981, 0.0
  %v2540 = vmax.f32 %v1986, 0.0
  %v2541 = vmax.f32 %v1989, 0.0
  %v2542 = vmax.f32 %v1994, 0.0
  %v2543 = vmax.f32 %v1997, 0.0
  %v2544 = vmax.f32 %v2002, 0.0
  %v2545 = vmax.f32 %v2005, 0.0
  %v2546 = vmax.f32 %v2010, 0.0
  %v2547 = vmax.f32 %v2013, 0.0
  %v2548 = vmax.f32 %v2018, 0.0
  %v2549 = vmax.f32 %v2021, 0.0
  %v2550 = vmax.f32 %v2026, 0.0
  %v2551 = vmax.f32 %v2029, 0.0
  %v2552 = vmax.f32 %v2034, 0.0
  %v2553 = vmax.f32 %v2037, 0.0
  %v2554 = vmax.f32 %v2042, 0.0
  %v2555 = vmax.f32 %v2045, 0.0
  %v2556 = vmax.f32 %v2050, 0.0
  %v2557 = vmax.f32 %v2053, 0.0
  %v2558 = vmax.f32 %v2058, 0.0
  %v2559 = vmax.f32 %v2061, 0.0
  %v2560 = vmax.f32 %v2066, 0.0
  %v2561 = vmax.f32 %v2069, 0.0
  %v2562 = vmax.f32 %v2074, 0.0
  %v2563 = vmax.f32 %v2077, 0.0
  %v2564 = vmax.f32 %v2082, 0.0
  %v2565 = vmax.f32 %v2085, 0.0
  %v2566 = vmax.f32 %v2090, 0.0
  %v2567 = vmax.f32 %v2093, 0.0
  %v2568 = vmax.f32 %v2098, 0.0
  %v2569 = vmax.f32 %v2101, 0.0
  %v2570 = vmax.f32 %v2106, 0.0
  %v2571 = vmax.f32 %v2109, 0.0
  %v2572 = vmax.f32 %v2114, 0.0
  %v2573 = vmax.f32 %v2117, 0.0
  %v2574 = vmax.f32 %v2122, 0.0
  %v2575 = vmax.f32 %v2125, 0.0
  %v2576 = vmax.f32 %v2130, 0.0
  %v2577 = vmax.f32 %v2133, 0.0
  %v2578 = vmax.f32 %v2138, 0.0
  %v2579 = vmax.f32 %v2141, 0.0
  %v2580 = vmax.f32 %v2146, 0.0
  %v2581 = vmax.f32 %v2149, 0.0
  %v2582 = vmax.f32 %v2154, 0.0
  %v2583 = vmax.f32 %v2157, 0.0
  %v2584 = vmax.f32 %v2162, 0.0
  %v2585 = vmax.f32 %v2165, 0.0
  %v2586 = vmax.f32 %v2170, 0.0
  %v2587 = vmax.f32 %v2173, 0.0
  %v2588 = vmax.f32 %v2178, 0.0
  %v2589 = vmax.f32 %v2181, 0.0
  %v2590 = vmax.f32 %v2186, 0.0
  %v2591 = vmax.f32 %v2189, 0.0
  %v2592 = vmax.f32 %v2194, 0.0
  %v2593 = vmax.f32 %v2197, 0.0
  %v2594 = vmax.f32 %v2202, 0.0
  %v2595 = vmax.f32 %v2205, 0.0
  %v2596 = vmax.f32 %v2210, 0.0
  %v2597 = vmax.f32 %v2213, 0.0
  %v2598 = vmax.f32 %v2218, 0.0
  %v2599 = vmax.f32 %v2221, 0.0
  %v2600 = vmax.f32 %v2226, 0.0
  %v2601 = vmax.f32 %v2229, 0.0
  %v2602 = vmax.f32 %v2234, 0.0
  %v2603 = vmax.f32 %v2237, 0.0
  %v2604 = vmax.f32 %v2242, 0.0
  %v2605 = vmax.f32 %v2245, 0.0
  %v2606 = vmax.f32 %v2250, 0.0
  %v2607 = vmax.f32 %v2253, 0.0
  %v2608 = vmax.f32 %v2258, 0.0
  %v2609 = vmax.f32 %v2261, 0.0
  %v2610 = vmax.f32 %v2266, 0.0
  %v2611 = vmax.f32 %v2269, 0.0
  %v2612 = vmax.f32 %v2274, 0.0
  %v2613 = vmax.f32 %v2277, 0.0
  %v2614 = vmax.f32 %v2282, 0.0
  %v2615 = vmax.f32 %v2285, 0.0
  %v2616 = vmax.f32 %v2290, 0.0
  %v2617 = vmax.f32 %v2293, 0.0
  %v2618 = vmax.f32 %v2298, 0.0
  %v2619 = vmax.f32 %v2301, 0.0
  %v2620 = vmax.f32 %v2306, 0.0
  %v2621 = vmax.f32 %v2309, 0.0
  %v2622 = vmax.f32 %v2314, 0.0
  %v2623 = vmax.f32 %v2317, 0.0
  %v2624 = vmax.f32 %v2322, 0.0
  %v2625 = vmax.f32 %v2325, 0.0
  %v2626 = vmax.f32 %v2330, 0.0
  %v2627 = vmax.f32 %v2333, 0.0
  %v2628 = vmax.f32 %v2338, 0.0
  %v2629 = vmax.f32 %v2341, 0.0
  %v2630 = vmax.f32 %v2346, 0.0
  %v2631 = vmax.f32 %v2349, 0.0
  %v2632 = vmax.f32 %v2354, 0.0
  %v2633 = vmax.f32 %v2357, 0.0
  %v2634 = vmax.f32 %v2362, 0.0
  %v2635 = vmax.f32 %v2365, 0.0
  %v2636 = vmax.f32 %v2370, 0.0
  %v2637 = vmax.f32 %v2373, 0.0
  %v2638 = vmax.f32 %v2378, 0.0
  %v2639 = vmax.f32 %v2381, 0.0
  %v2640 = vpack.c.bf16 %v2385, %v2384
  %v2641 = vpack.c.bf16 %v2387, %v2386
  %v2642 = vpack.c.bf16 %v2389, %v2388
  %v2643 = vpack.c.bf16 %v2391, %v2390
  %v2644 = vpack.c.bf16 %v2393, %v2392
  %v2645 = vpack.c.bf16 %v2395, %v2394
  %v2646 = vpack.c.bf16 %v2397, %v2396
  %v2647 = vpack.c.bf16 %v2399, %v2398
  %v2648 = vpack.c.bf16 %v2401, %v2400
  %v2649 = vpack.c.bf16 %v2403, %v2402
  %v2650 = vpack.c.bf16 %v2405, %v2404
  %v2651 = vpack.c.bf16 %v2407, %v2406
  %v2652 = vpack.c.bf16 %v2409, %v2408
  %v2653 = vpack.c.bf16 %v2411, %v2410
  %v2654 = vpack.c.bf16 %v2413, %v2412
  %v2655 = vpack.c.bf16 %v2415, %v2414
  %v2656 = vpack.c.bf16 %v2417, %v2416
  %v2657 = vpack.c.bf16 %v2419, %v2418
  %v2658 = vpack.c.bf16 %v2421, %v2420
  %v2659 = vpack.c.bf16 %v2423, %v2422
  %v2660 = vpack.c.bf16 %v2425, %v2424
  %v2661 = vpack.c.bf16 %v2427, %v2426
  %v2662 = vpack.c.bf16 %v2429, %v2428
  %v2663 = vpack.c.bf16 %v2431, %v2430
  %v2664 = vpack.c.bf16 %v2433, %v2432
  %v2665 = vpack.c.bf16 %v2435, %v2434
  %v2666 = vpack.c.bf16 %v2437, %v2436
  %v2667 = vpack.c.bf16 %v2439, %v2438
  %v2668 = vpack.c.bf16 %v2441, %v2440
  %v2669 = vpack.c.bf16 %v2443, %v2442
  %v2670 = vpack.c.bf16 %v2445, %v2444
  %v2671 = vpack.c.bf16 %v2447, %v2446
  %v2672 = vpack.c.bf16 %v2449, %v2448
  %v2673 = vpack.c.bf16 %v2451, %v2450
  %v2674 = vpack.c.bf16 %v2453, %v2452
  %v2675 = vpack.c.bf16 %v2455, %v2454
  %v2676 = vpack.c.bf16 %v2457, %v2456
  %v2677 = vpack.c.bf16 %v2459, %v2458
  %v2678 = vpack.c.bf16 %v2461, %v2460
  %v2679 = vpack.c.bf16 %v2463, %v2462
  %v2680 = vpack.c.bf16 %v2465, %v2464
  %v2681 = vpack.c.bf16 %v2467, %v2466
  %v2682 = vpack.c.bf16 %v2469, %v2468
  %v2683 = vpack.c.bf16 %v2471, %v2470
  %v2684 = vpack.c.bf16 %v2473, %v2472
  %v2685 = vpack.c.bf16 %v2475, %v2474
  %v2686 = vpack.c.bf16 %v2477, %v2476
  %v2687 = vpack.c.bf16 %v2479, %v2478
  %v2688 = vpack.c.bf16 %v2481, %v2480
  %v2689 = vpack.c.bf16 %v2483, %v2482
  %v2690 = vpack.c.bf16 %v2485, %v2484
  %v2691 = vpack.c.bf16 %v2487, %v2486
  %v2692 = vpack.c.bf16 %v2489, %v2488
  %v2693 = vpack.c.bf16 %v2491, %v2490
  %v2694 = vpack.c.bf16 %v2493, %v2492
  %v2695 = vpack.c.bf16 %v2495, %v2494
  %v2696 = vpack.c.bf16 %v2497, %v2496
  %v2697 = vpack.c.bf16 %v2499, %v2498
  %v2698 = vpack.c.bf16 %v2501, %v2500
  %v2699 = vpack.c.bf16 %v2503, %v2502
  %v2700 = vpack.c.bf16 %v2505, %v2504
  %v2701 = vpack.c.bf16 %v2507, %v2506
  %v2702 = vpack.c.bf16 %v2509, %v2508
  %v2703 = vpack.c.bf16 %v2511, %v2510
  %v2704 = vpack.c.bf16 %v2513, %v2512
  %v2705 = vpack.c.bf16 %v2515, %v2514
  %v2706 = vpack.c.bf16 %v2517, %v2516
  %v2707 = vpack.c.bf16 %v2519, %v2518
  %v2708 = vpack.c.bf16 %v2521, %v2520
  %v2709 = vpack.c.bf16 %v2523, %v2522
  %v2710 = vpack.c.bf16 %v2525, %v2524
  %v2711 = vpack.c.bf16 %v2527, %v2526
  %v2712 = vpack.c.bf16 %v2529, %v2528
  %v2713 = vpack.c.bf16 %v2531, %v2530
  %v2714 = vpack.c.bf16 %v2533, %v2532
  %v2715 = vpack.c.bf16 %v2535, %v2534
  %v2716 = vpack.c.bf16 %v2537, %v2536
  %v2717 = vpack.c.bf16 %v2539, %v2538
  %v2718 = vpack.c.bf16 %v2541, %v2540
  %v2719 = vpack.c.bf16 %v2543, %v2542
  %v2720 = vpack.c.bf16 %v2545, %v2544
  %v2721 = vpack.c.bf16 %v2547, %v2546
  %v2722 = vpack.c.bf16 %v2549, %v2548
  %v2723 = vpack.c.bf16 %v2551, %v2550
  %v2724 = vpack.c.bf16 %v2553, %v2552
  %v2725 = vpack.c.bf16 %v2555, %v2554
  %v2726 = vpack.c.bf16 %v2557, %v2556
  %v2727 = vpack.c.bf16 %v2559, %v2558
  %v2728 = vpack.c.bf16 %v2561, %v2560
  %v2729 = vpack.c.bf16 %v2563, %v2562
  %v2730 = vpack.c.bf16 %v2565, %v2564
  %v2731 = vpack.c.bf16 %v2567, %v2566
  %v2732 = vpack.c.bf16 %v2569, %v2568
  %v2733 = vpack.c.bf16 %v2571, %v2570
  %v2734 = vpack.c.bf16 %v2573, %v2572
  %v2735 = vpack.c.bf16 %v2575, %v2574
  %v2736 = vpack.c.bf16 %v2577, %v2576
  %v2737 = vpack.c.bf16 %v2579, %v2578
  %v2738 = vpack.c.bf16 %v2581, %v2580
  %v2739 = vpack.c.bf16 %v2583, %v2582
  %v2740 = vpack.c.bf16 %v2585, %v2584
  %v2741 = vpack.c.bf16 %v2587, %v2586
  %v2742 = vpack.c.bf16 %v2589, %v2588
  %v2743 = vpack.c.bf16 %v2591, %v2590
  %v2744 = vpack.c.bf16 %v2593, %v2592
  %v2745 = vpack.c.bf16 %v2595, %v2594
  %v2746 = vpack.c.bf16 %v2597, %v2596
  %v2747 = vpack.c.bf16 %v2599, %v2598
  %v2748 = vpack.c.bf16 %v2601, %v2600
  %v2749 = vpack.c.bf16 %v2603, %v2602
  %v2750 = vpack.c.bf16 %v2605, %v2604
  %v2751 = vpack.c.bf16 %v2607, %v2606
  %v2752 = vpack.c.bf16 %v2609, %v2608
  %v2753 = vpack.c.bf16 %v2611, %v2610
  %v2754 = vpack.c.bf16 %v2613, %v2612
  %v2755 = vpack.c.bf16 %v2615, %v2614
  %v2756 = vpack.c.bf16 %v2617, %v2616
  %v2757 = vpack.c.bf16 %v2619, %v2618
  %v2758 = vpack.c.bf16 %v2621, %v2620
  %v2759 = vpack.c.bf16 %v2623, %v2622
  %v2760 = vpack.c.bf16 %v2625, %v2624
  %v2761 = vpack.c.bf16 %v2627, %v2626
  %v2762 = vpack.c.bf16 %v2629, %v2628
  %v2763 = vpack.c.bf16 %v2631, %v2630
  %v2764 = vpack.c.bf16 %v2633, %v2632
  %v2765 = vpack.c.bf16 %v2635, %v2634
  %v2766 = vpack.c.bf16 %v2637, %v2636
  %v2767 = vpack.c.bf16 %v2639, %v2638
  %v2896 = vunpack.c.l.b16 %v2640
  %v2897 = vunpack.c.h.b16 %v2640
  %v2898 = vunpack.c.l.b16 %v2641
  %v2899 = vunpack.c.h.b16 %v2641
  %v2900 = vunpack.c.l.b16 %v2642
  %v2901 = vunpack.c.h.b16 %v2642
  %v2902 = vunpack.c.l.b16 %v2643
  %v2903 = vunpack.c.h.b16 %v2643
  %v2904 = vunpack.c.l.b16 %v2644
  %v2905 = vunpack.c.h.b16 %v2644
  %v2906 = vunpack.c.l.b16 %v2645
  %v2907 = vunpack.c.h.b16 %v2645
  %v2908 = vunpack.c.l.b16 %v2646
  %v2909 = vunpack.c.h.b16 %v2646
  %v2910 = vunpack.c.l.b16 %v2647
  %v2911 = vunpack.c.h.b16 %v2647
  %v2912 = vunpack.c.l.b16 %v2648
  %v2913 = vunpack.c.h.b16 %v2648
  %v2914 = vunpack.c.l.b16 %v2649
  %v2915 = vunpack.c.h.b16 %v2649
  %v2916 = vunpack.c.l.b16 %v2650
  %v2917 = vunpack.c.h.b16 %v2650
  %v2918 = vunpack.c.l.b16 %v2651
  %v2919 = vunpack.c.h.b16 %v2651
  %v2920 = vunpack.c.l.b16 %v2652
  %v2921 = vunpack.c.h.b16 %v2652
  %v2922 = vunpack.c.l.b16 %v2653
  %v2923 = vunpack.c.h.b16 %v2653
  %v2924 = vunpack.c.l.b16 %v2654
  %v2925 = vunpack.c.h.b16 %v2654
  %v2926 = vunpack.c.l.b16 %v2655
  %v2927 = vunpack.c.h.b16 %v2655
  %v2928 = vunpack.c.l.b16 %v2656
  %v2929 = vunpack.c.h.b16 %v2656
  %v2930 = vunpack.c.l.b16 %v2657
  %v2931 = vunpack.c.h.b16 %v2657
  %v2932 = vunpack.c.l.b16 %v2658
  %v2933 = vunpack.c.h.b16 %v2658
  %v2934 = vunpack.c.l.b16 %v2659
  %v2935 = vunpack.c.h.b16 %v2659
  %v2936 = vunpack.c.l.b16 %v2660
  %v2937 = vunpack.c.h.b16 %v2660
  %v2938 = vunpack.c.l.b16 %v2661
  %v2939 = vunpack.c.h.b16 %v2661
  %v2940 = vunpack.c.l.b16 %v2662
  %v2941 = vunpack.c.h.b16 %v2662
  %v2942 = vunpack.c.l.b16 %v2663
  %v2943 = vunpack.c.h.b16 %v2663
  %v2944 = vunpack.c.l.b16 %v2664
  %v2945 = vunpack.c.h.b16 %v2664
  %v2946 = vunpack.c.l.b16 %v2665
  %v2947 = vunpack.c.h.b16 %v2665
  %v2948 = vunpack.c.l.b16 %v2666
  %v2949 = vunpack.c.h.b16 %v2666
  %v2950 = vunpack.c.l.b16 %v2667
  %v2951 = vunpack.c.h.b16 %v2667
  %v2952 = vunpack.c.l.b16 %v2668
  %v2953 = vunpack.c.h.b16 %v2668
  %v2954 = vunpack.c.l.b16 %v2669
  %v2955 = vunpack.c.h.b16 %v2669
  %v2956 = vunpack.c.l.b16 %v2670
  %v2957 = vunpack.c.h.b16 %v2670
  %v2958 = vunpack.c.l.b16 %v2671
  %v2959 = vunpack.c.h.b16 %v2671
  %v2960 = vunpack.c.l.b16 %v2672
  %v2961 = vunpack.c.h.b16 %v2672
  %v2962 = vunpack.c.l.b16 %v2673
  %v2963 = vunpack.c.h.b16 %v2673
  %v2964 = vunpack.c.l.b16 %v2674
  %v2965 = vunpack.c.h.b16 %v2674
  %v2966 = vunpack.c.l.b16 %v2675
  %v2967 = vunpack.c.h.b16 %v2675
  %v2968 = vunpack.c.l.b16 %v2676
  %v2969 = vunpack.c.h.b16 %v2676
  %v2970 = vunpack.c.l.b16 %v2677
  %v2971 = vunpack.c.h.b16 %v2677
  %v2972 = vunpack.c.l.b16 %v2678
  %v2973 = vunpack.c.h.b16 %v2678
  %v2974 = vunpack.c.l.b16 %v2679
  %v2975 = vunpack.c.h.b16 %v2679
  %v2976 = vunpack.c.l.b16 %v2680
  %v2977 = vunpack.c.h.b16 %v2680
  %v2978 = vunpack.c.l.b16 %v2681
  %v2979 = vunpack.c.h.b16 %v2681
  %v2980 = vunpack.c.l.b16 %v2682
  %v2981 = vunpack.c.h.b16 %v2682
  %v2982 = vunpack.c.l.b16 %v2683
  %v2983 = vunpack.c.h.b16 %v2683
  %v2984 = vunpack.c.l.b16 %v2684
  %v2985 = vunpack.c.h.b16 %v2684
  %v2986 = vunpack.c.l.b16 %v2685
  %v2987 = vunpack.c.h.b16 %v2685
  %v2988 = vunpack.c.l.b16 %v2686
  %v2989 = vunpack.c.h.b16 %v2686
  %v2990 = vunpack.c.l.b16 %v2687
  %v2991 = vunpack.c.h.b16 %v2687
  %v2992 = vunpack.c.l.b16 %v2688
  %v2993 = vunpack.c.h.b16 %v2688
  %v2994 = vunpack.c.l.b16 %v2689
  %v2995 = vunpack.c.h.b16 %v2689
  %v2996 = vunpack.c.l.b16 %v2690
  %v2997 = vunpack.c.h.b16 %v2690
  %v2998 = vunpack.c.l.b16 %v2691
  %v2999 = vunpack.c.h.b16 %v2691
  %v3000 = vunpack.c.l.b16 %v2692
  %v3001 = vunpack.c.h.b16 %v2692
  %v3002 = vunpack.c.l.b16 %v2693
  %v3003 = vunpack.c.h.b16 %v2693
  %v3004 = vunpack.c.l.b16 %v2694
  %v3005 = vunpack.c.h.b16 %v2694
  %v3006 = vunpack.c.l.b16 %v2695
  %v3007 = vunpack.c.h.b16 %v2695
  %v3008 = vunpack.c.l.b16 %v2696
  %v3009 = vunpack.c.h.b16 %v2696
  %v3010 = vunpack.c.l.b16 %v2697
  %v3011 = vunpack.c.h.b16 %v2697
  %v3012 = vunpack.c.l.b16 %v2698
  %v3013 = vunpack.c.h.b16 %v2698
  %v3014 = vunpack.c.l.b16 %v2699
  %v3015 = vunpack.c.h.b16 %v2699
  %v3016 = vunpack.c.l.b16 %v2700
  %v3017 = vunpack.c.h.b16 %v2700
  %v3018 = vunpack.c.l.b16 %v2701
  %v3019 = vunpack.c.h.b16 %v2701
  %v3020 = vunpack.c.l.b16 %v2702
  %v3021 = vunpack.c.h.b16 %v2702
  %v3022 = vunpack.c.l.b16 %v2703
  %v3023 = vunpack.c.h.b16 %v2703
  %v3024 = vunpack.c.l.b16 %v2704
  %v3025 = vunpack.c.h.b16 %v2704
  %v3026 = vunpack.c.l.b16 %v2705
  %v3027 = vunpack.c.h.b16 %v2705
  %v3028 = vunpack.c.l.b16 %v2706
  %v3029 = vunpack.c.h.b16 %v2706
  %v3030 = vunpack.c.l.b16 %v2707
  %v3031 = vunpack.c.h.b16 %v2707
  %v3032 = vunpack.c.l.b16 %v2708
  %v3033 = vunpack.c.h.b16 %v2708
  %v3034 = vunpack.c.l.b16 %v2709
  %v3035 = vunpack.c.h.b16 %v2709
  %v3036 = vunpack.c.l.b16 %v2710
  %v3037 = vunpack.c.h.b16 %v2710
  %v3038 = vunpack.c.l.b16 %v2711
  %v3039 = vunpack.c.h.b16 %v2711
  %v3040 = vunpack.c.l.b16 %v2712
  %v3041 = vunpack.c.h.b16 %v2712
  %v3042 = vunpack.c.l.b16 %v2713
  %v3043 = vunpack.c.h.b16 %v2713
  %v3044 = vunpack.c.l.b16 %v2714
  %v3045 = vunpack.c.h.b16 %v2714
  %v3046 = vunpack.c.l.b16 %v2715
  %v3047 = vunpack.c.h.b16 %v2715
  %v3048 = vunpack.c.l.b16 %v2716
  %v3049 = vunpack.c.h.b16 %v2716
  %v3050 = vunpack.c.l.b16 %v2717
  %v3051 = vunpack.c.h.b16 %v2717
  %v3052 = vunpack.c.l.b16 %v2718
  %v3053 = vunpack.c.h.b16 %v2718
  %v3054 = vunpack.c.l.b16 %v2719
  %v3055 = vunpack.c.h.b16 %v2719
  %v3056 = vunpack.c.l.b16 %v2720
  %v3057 = vunpack.c.h.b16 %v2720
  %v3058 = vunpack.c.l.b16 %v2721
  %v3059 = vunpack.c.h.b16 %v2721
  %v3060 = vunpack.c.l.b16 %v2722
  %v3061 = vunpack.c.h.b16 %v2722
  %v3062 = vunpack.c.l.b16 %v2723
  %v3063 = vunpack.c.h.b16 %v2723
  %v3064 = vunpack.c.l.b16 %v2724
  %v3065 = vunpack.c.h.b16 %v2724
  %v3066 = vunpack.c.l.b16 %v2725
  %v3067 = vunpack.c.h.b16 %v2725
  %v3068 = vunpack.c.l.b16 %v2726
  %v3069 = vunpack.c.h.b16 %v2726
  %v3070 = vunpack.c.l.b16 %v2727
  %v3071 = vunpack.c.h.b16 %v2727
  %v3072 = vunpack.c.l.b16 %v2728
  %v3073 = vunpack.c.h.b16 %v2728
  %v3074 = vunpack.c.l.b16 %v2729
  %v3075 = vunpack.c.h.b16 %v2729
  %v3076 = vunpack.c.l.b16 %v2730
  %v3077 = vunpack.c.h.b16 %v2730
  %v3078 = vunpack.c.l.b16 %v2731
  %v3079 = vunpack.c.h.b16 %v2731
  %v3080 = vunpack.c.l.b16 %v2732
  %v3081 = vunpack.c.h.b16 %v2732
  %v3082 = vunpack.c.l.b16 %v2733
  %v3083 = vunpack.c.h.b16 %v2733
  %v3084 = vunpack.c.l.b16 %v2734
  %v3085 = vunpack.c.h.b16 %v2734
  %v3086 = vunpack.c.l.b16 %v2735
  %v3087 = vunpack.c.h.b16 %v2735
  %v3088 = vunpack.c.l.b16 %v2736
  %v3089 = vunpack.c.h.b16 %v2736
  %v3090 = vunpack.c.l.b16 %v2737
  %v3091 = vunpack.c.h.b16 %v2737
  %v3092 = vunpack.c.l.b16 %v2738
  %v3093 = vunpack.c.h.b16 %v2738
  %v3094 = vunpack.c.l.b16 %v2739
  %v3095 = vunpack.c.h.b16 %v2739
  %v3096 = vunpack.c.l.b16 %v2740
  %v3097 = vunpack.c.h.b16 %v2740
  %v3098 = vunpack.c.l.b16 %v2741
  %v3099 = vunpack.c.h.b16 %v2741
  %v3100 = vunpack.c.l.b16 %v2742
  %v3101 = vunpack.c.h.b16 %v2742
  %v3102 = vunpack.c.l.b16 %v2743
  %v3103 = vunpack.c.h.b16 %v2743
  %v3104 = vunpack.c.l.b16 %v2744
  %v3105 = vunpack.c.h.b16 %v2744
  %v3106 = vunpack.c.l.b16 %v2745
  %v3107 = vunpack.c.h.b16 %v2745
  %v3108 = vunpack.c.l.b16 %v2746
  %v3109 = vunpack.c.h.b16 %v2746
  %v3110 = vunpack.c.l.b16 %v2747
  %v3111 = vunpack.c.h.b16 %v2747
  %v3112 = vunpack.c.l.b16 %v2748
  %v3113 = vunpack.c.h.b16 %v2748
  %v3114 = vunpack.c.l.b16 %v2749
  %v3115 = vunpack.c.h.b16 %v2749
  %v3116 = vunpack.c.l.b16 %v2750
  %v3117 = vunpack.c.h.b16 %v2750
  %v3118 = vunpack.c.l.b16 %v2751
  %v3119 = vunpack.c.h.b16 %v2751
  %v3120 = vunpack.c.l.b16 %v2752
  %v3121 = vunpack.c.h.b16 %v2752
  %v3122 = vunpack.c.l.b16 %v2753
  %v3123 = vunpack.c.h.b16 %v2753
  %v3124 = vunpack.c.l.b16 %v2754
  %v3125 = vunpack.c.h.b16 %v2754
  %v3126 = vunpack.c.l.b16 %v2755
  %v3127 = vunpack.c.h.b16 %v2755
  %v3128 = vunpack.c.l.b16 %v2756
  %v3129 = vunpack.c.h.b16 %v2756
  %v3130 = vunpack.c.l.b16 %v2757
  %v3131 = vunpack.c.h.b16 %v2757
  %v3132 = vunpack.c.l.b16 %v2758
  %v3133 = vunpack.c.h.b16 %v2758
  %v3134 = vunpack.c.l.b16 %v2759
  %v3135 = vunpack.c.h.b16 %v2759
  %v3136 = vunpack.c.l.b16 %v2760
  %v3137 = vunpack.c.h.b16 %v2760
  %v3138 = vunpack.c.l.b16 %v2761
  %v3139 = vunpack.c.h.b16 %v2761
  %v3140 = vunpack.c.l.b16 %v2762
  %v3141 = vunpack.c.h.b16 %v2762
  %v3142 = vunpack.c.l.b16 %v2763
  %v3143 = vunpack.c.h.b16 %v2763
  %v3144 = vunpack.c.l.b16 %v2764
  %v3145 = vunpack.c.h.b16 %v2764
  %v3146 = vunpack.c.l.b16 %v2765
  %v3147 = vunpack.c.h.b16 %v2765
  %v3148 = vunpack.c.l.b16 %v2766
  %v3149 = vunpack.c.h.b16 %v2766
  %v3150 = vunpack.c.l.b16 %v2767
  %v3151 = vunpack.c.h.b16 %v2767
  %v3152 = vpack.c.b16 %v2896, %v2896
  %v3153 = vpack.c.b16 %v2897, %v2897
  %v3154 = vpack.c.b16 %v2898, %v2898
  %v3155 = vpack.c.b16 %v2899, %v2899
  %v3156 = vpack.c.b16 %v2900, %v2900
  %v3157 = vpack.c.b16 %v2901, %v2901
  %v3158 = vpack.c.b16 %v2902, %v2902
  %v3159 = vpack.c.b16 %v2903, %v2903
  %v3160 = vpack.c.b16 %v2904, %v2904
  %v3161 = vpack.c.b16 %v2905, %v2905
  %v3162 = vpack.c.b16 %v2906, %v2906
  %v3163 = vpack.c.b16 %v2907, %v2907
  %v3164 = vpack.c.b16 %v2908, %v2908
  %v3165 = vpack.c.b16 %v2909, %v2909
  %v3166 = vpack.c.b16 %v2910, %v2910
  %v3167 = vpack.c.b16 %v2911, %v2911
  %v3168 = vpack.c.b16 %v2912, %v2912
  %v3169 = vpack.c.b16 %v2913, %v2913
  %v3170 = vpack.c.b16 %v2914, %v2914
  %v3171 = vpack.c.b16 %v2915, %v2915
  %v3172 = vpack.c.b16 %v2916, %v2916
  %v3173 = vpack.c.b16 %v2917, %v2917
  %v3174 = vpack.c.b16 %v2918, %v2918
  %v3175 = vpack.c.b16 %v2919, %v2919
  %v3176 = vpack.c.b16 %v2920, %v2920
  %v3177 = vpack.c.b16 %v2921, %v2921
  %v3178 = vpack.c.b16 %v2922, %v2922
  %v3179 = vpack.c.b16 %v2923, %v2923
  %v3180 = vpack.c.b16 %v2924, %v2924
  %v3181 = vpack.c.b16 %v2925, %v2925
  %v3182 = vpack.c.b16 %v2926, %v2926
  %v3183 = vpack.c.b16 %v2927, %v2927
  %v3184 = vpack.c.b16 %v2928, %v2928
  %v3185 = vpack.c.b16 %v2929, %v2929
  %v3186 = vpack.c.b16 %v2930, %v2930
  %v3187 = vpack.c.b16 %v2931, %v2931
  %v3188 = vpack.c.b16 %v2932, %v2932
  %v3189 = vpack.c.b16 %v2933, %v2933
  %v3190 = vpack.c.b16 %v2934, %v2934
  %v3191 = vpack.c.b16 %v2935, %v2935
  %v3192 = vpack.c.b16 %v2936, %v2936
  %v3193 = vpack.c.b16 %v2937, %v2937
  %v3194 = vpack.c.b16 %v2938, %v2938
  %v3195 = vpack.c.b16 %v2939, %v2939
  %v3196 = vpack.c.b16 %v2940, %v2940
  %v3197 = vpack.c.b16 %v2941, %v2941
  %v3198 = vpack.c.b16 %v2942, %v2942
  %v3199 = vpack.c.b16 %v2943, %v2943
  %v3200 = vpack.c.b16 %v2944, %v2944
  %v3201 = vpack.c.b16 %v2945, %v2945
  %v3202 = vpack.c.b16 %v2946, %v2946
  %v3203 = vpack.c.b16 %v2947, %v2947
  %v3204 = vpack.c.b16 %v2948, %v2948
  %v3205 = vpack.c.b16 %v2949, %v2949
  %v3206 = vpack.c.b16 %v2950, %v2950
  %v3207 = vpack.c.b16 %v2951, %v2951
  %v3208 = vpack.c.b16 %v2952, %v2952
  %v3209 = vpack.c.b16 %v2953, %v2953
  %v3210 = vpack.c.b16 %v2954, %v2954
  %v3211 = vpack.c.b16 %v2955, %v2955
  %v3212 = vpack.c.b16 %v2956, %v2956
  %v3213 = vpack.c.b16 %v2957, %v2957
  %v3214 = vpack.c.b16 %v2958, %v2958
  %v3215 = vpack.c.b16 %v2959, %v2959
  %v3216 = vpack.c.b16 %v2960, %v2960
  %v3217 = vpack.c.b16 %v2961, %v2961
  %v3218 = vpack.c.b16 %v2962, %v2962
  %v3219 = vpack.c.b16 %v2963, %v2963
  %v3220 = vpack.c.b16 %v2964, %v2964
  %v3221 = vpack.c.b16 %v2965, %v2965
  %v3222 = vpack.c.b16 %v2966, %v2966
  %v3223 = vpack.c.b16 %v2967, %v2967
  %v3224 = vpack.c.b16 %v2968, %v2968
  %v3225 = vpack.c.b16 %v2969, %v2969
  %v3226 = vpack.c.b16 %v2970, %v2970
  %v3227 = vpack.c.b16 %v2971, %v2971
  %v3228 = vpack.c.b16 %v2972, %v2972
  %v3229 = vpack.c.b16 %v2973, %v2973
  %v3230 = vpack.c.b16 %v2974, %v2974
  %v3231 = vpack.c.b16 %v2975, %v2975
  %v3232 = vpack.c.b16 %v2976, %v2976
  %v3233 = vpack.c.b16 %v2977, %v2977
  %v3234 = vpack.c.b16 %v2978, %v2978
  %v3235 = vpack.c.b16 %v2979, %v2979
  %v3236 = vpack.c.b16 %v2980, %v2980
  %v3237 = vpack.c.b16 %v2981, %v2981
  %v3238 = vpack.c.b16 %v2982, %v2982
  %v3239 = vpack.c.b16 %v2983, %v2983
  %v3240 = vpack.c.b16 %v2984, %v2984
  %v3241 = vpack.c.b16 %v2985, %v2985
  %v3242 = vpack.c.b16 %v2986, %v2986
  %v3243 = vpack.c.b16 %v2987, %v2987
  %v3244 = vpack.c.b16 %v2988, %v2988
  %v3245 = vpack.c.b16 %v2989, %v2989
  %v3246 = vpack.c.b16 %v2990, %v2990
  %v3247 = vpack.c.b16 %v2991, %v2991
  %v3248 = vpack.c.b16 %v2992, %v2992
  %v3249 = vpack.c.b16 %v2993, %v2993
  %v3250 = vpack.c.b16 %v2994, %v2994
  %v3251 = vpack.c.b16 %v2995, %v2995
  %v3252 = vpack.c.b16 %v2996, %v2996
  %v3253 = vpack.c.b16 %v2997, %v2997
  %v3254 = vpack.c.b16 %v2998, %v2998
  %v3255 = vpack.c.b16 %v2999, %v2999
  %v3256 = vpack.c.b16 %v3000, %v3000
  %v3257 = vpack.c.b16 %v3001, %v3001
  %v3258 = vpack.c.b16 %v3002, %v3002
  %v3259 = vpack.c.b16 %v3003, %v3003
  %v3260 = vpack.c.b16 %v3004, %v3004
  %v3261 = vpack.c.b16 %v3005, %v3005
  %v3262 = vpack.c.b16 %v3006, %v3006
  %v3263 = vpack.c.b16 %v3007, %v3007
  %v3264 = vpack.c.b16 %v3008, %v3008
  %v3265 = vpack.c.b16 %v3009, %v3009
  %v3266 = vpack.c.b16 %v3010, %v3010
  %v3267 = vpack.c.b16 %v3011, %v3011
  %v3268 = vpack.c.b16 %v3012, %v3012
  %v3269 = vpack.c.b16 %v3013, %v3013
  %v3270 = vpack.c.b16 %v3014, %v3014
  %v3271 = vpack.c.b16 %v3015, %v3015
  %v3272 = vpack.c.b16 %v3016, %v3016
  %v3273 = vpack.c.b16 %v3017, %v3017
  %v3274 = vpack.c.b16 %v3018, %v3018
  %v3275 = vpack.c.b16 %v3019, %v3019
  %v3276 = vpack.c.b16 %v3020, %v3020
  %v3277 = vpack.c.b16 %v3021, %v3021
  %v3278 = vpack.c.b16 %v3022, %v3022
  %v3279 = vpack.c.b16 %v3023, %v3023
  %v3280 = vpack.c.b16 %v3024, %v3024
  %v3281 = vpack.c.b16 %v3025, %v3025
  %v3282 = vpack.c.b16 %v3026, %v3026
  %v3283 = vpack.c.b16 %v3027, %v3027
  %v3284 = vpack.c.b16 %v3028, %v3028
  %v3285 = vpack.c.b16 %v3029, %v3029
  %v3286 = vpack.c.b16 %v3030, %v3030
  %v3287 = vpack.c.b16 %v3031, %v3031
  %v3288 = vpack.c.b16 %v3032, %v3032
  %v3289 = vpack.c.b16 %v3033, %v3033
  %v3290 = vpack.c.b16 %v3034, %v3034
  %v3291 = vpack.c.b16 %v3035, %v3035
  %v3292 = vpack.c.b16 %v3036, %v3036
  %v3293 = vpack.c.b16 %v3037, %v3037
  %v3294 = vpack.c.b16 %v3038, %v3038
  %v3295 = vpack.c.b16 %v3039, %v3039
  %v3296 = vpack.c.b16 %v3040, %v3040
  %v3297 = vpack.c.b16 %v3041, %v3041
  %v3298 = vpack.c.b16 %v3042, %v3042
  %v3299 = vpack.c.b16 %v3043, %v3043
  %v3300 = vpack.c.b16 %v3044, %v3044
  %v3301 = vpack.c.b16 %v3045, %v3045
  %v3302 = vpack.c.b16 %v3046, %v3046
  %v3303 = vpack.c.b16 %v3047, %v3047
  %v3304 = vpack.c.b16 %v3048, %v3048
  %v3305 = vpack.c.b16 %v3049, %v3049
  %v3306 = vpack.c.b16 %v3050, %v3050
  %v3307 = vpack.c.b16 %v3051, %v3051
  %v3308 = vpack.c.b16 %v3052, %v3052
  %v3309 = vpack.c.b16 %v3053, %v3053
  %v3310 = vpack.c.b16 %v3054, %v3054
  %v3311 = vpack.c.b16 %v3055, %v3055
  %v3312 = vpack.c.b16 %v3056, %v3056
  %v3313 = vpack.c.b16 %v3057, %v3057
  %v3314 = vpack.c.b16 %v3058, %v3058
  %v3315 = vpack.c.b16 %v3059, %v3059
  %v3316 = vpack.c.b16 %v3060, %v3060
  %v3317 = vpack.c.b16 %v3061, %v3061
  %v3318 = vpack.c.b16 %v3062, %v3062
  %v3319 = vpack.c.b16 %v3063, %v3063
  %v3320 = vpack.c.b16 %v3064, %v3064
  %v3321 = vpack.c.b16 %v3065, %v3065
  %v3322 = vpack.c.b16 %v3066, %v3066
  %v3323 = vpack.c.b16 %v3067, %v3067
  %v3324 = vpack.c.b16 %v3068, %v3068
  %v3325 = vpack.c.b16 %v3069, %v3069
  %v3326 = vpack.c.b16 %v3070, %v3070
  %v3327 = vpack.c.b16 %v3071, %v3071
  %v3328 = vpack.c.b16 %v3072, %v3072
  %v3329 = vpack.c.b16 %v3073, %v3073
  %v3330 = vpack.c.b16 %v3074, %v3074
  %v3331 = vpack.c.b16 %v3075, %v3075
  %v3332 = vpack.c.b16 %v3076, %v3076
  %v3333 = vpack.c.b16 %v3077, %v3077
  %v3334 = vpack.c.b16 %v3078, %v3078
  %v3335 = vpack.c.b16 %v3079, %v3079
  %v3336 = vpack.c.b16 %v3080, %v3080
  %v3337 = vpack.c.b16 %v3081, %v3081
  %v3338 = vpack.c.b16 %v3082, %v3082
  %v3339 = vpack.c.b16 %v3083, %v3083
  %v3340 = vpack.c.b16 %v3084, %v3084
  %v3341 = vpack.c.b16 %v3085, %v3085
  %v3342 = vpack.c.b16 %v3086, %v3086
  %v3343 = vpack.c.b16 %v3087, %v3087
  %v3344 = vpack.c.b16 %v3088, %v3088
  %v3345 = vpack.c.b16 %v3089, %v3089
  %v3346 = vpack.c.b16 %v3090, %v3090
  %v3347 = vpack.c.b16 %v3091, %v3091
  %v3348 = vpack.c.b16 %v3092, %v3092
  %v3349 = vpack.c.b16 %v3093, %v3093
  %v3350 = vpack.c.b16 %v3094, %v3094
  %v3351 = vpack.c.b16 %v3095, %v3095
  %v3352 = vpack.c.b16 %v3096, %v3096
  %v3353 = vpack.c.b16 %v3097, %v3097
  %v3354 = vpack.c.b16 %v3098, %v3098
  %v3355 = vpack.c.b16 %v3099, %v3099
  %v3356 = vpack.c.b16 %v3100, %v3100
  %v3357 = vpack.c.b16 %v3101, %v3101
  %v3358 = vpack.c.b16 %v3102, %v3102
  %v3359 = vpack.c.b16 %v3103, %v3103
  %v3360 = vpack.c.b16 %v3104, %v3104
  %v3361 = vpack.c.b16 %v3105, %v3105
  %v3362 = vpack.c.b16 %v3106, %v3106
  %v3363 = vpack.c.b16 %v3107, %v3107
  %v3364 = vpack.c.b16 %v3108, %v3108
  %v3365 = vpack.c.b16 %v3109, %v3109
  %v3366 = vpack.c.b16 %v3110, %v3110
  %v3367 = vpack.c.b16 %v3111, %v3111
  %v3368 = vpack.c.b16 %v3112, %v3112
  %v3369 = vpack.c.b16 %v3113, %v3113
  %v3370 = vpack.c.b16 %v3114, %v3114
  %v3371 = vpack.c.b16 %v3115, %v3115
  %v3372 = vpack.c.b16 %v3116, %v3116
  %v3373 = vpack.c.b16 %v3117, %v3117
  %v3374 = vpack.c.b16 %v3118, %v3118
  %v3375 = vpack.c.b16 %v3119, %v3119
  %v3376 = vpack.c.b16 %v3120, %v3120
  %v3377 = vpack.c.b16 %v3121, %v3121
  %v3378 = vpack.c.b16 %v3122, %v3122
  %v3379 = vpack.c.b16 %v3123, %v3123
  %v3380 = vpack.c.b16 %v3124, %v3124
  %v3381 = vpack.c.b16 %v3125, %v3125
  %v3382 = vpack.c.b16 %v3126, %v3126
  %v3383 = vpack.c.b16 %v3127, %v3127
  %v3384 = vpack.c.b16 %v3128, %v3128
  %v3385 = vpack.c.b16 %v3129, %v3129
  %v3386 = vpack.c.b16 %v3130, %v3130
  %v3387 = vpack.c.b16 %v3131, %v3131
  %v3388 = vpack.c.b16 %v3132, %v3132
  %v3389 = vpack.c.b16 %v3133, %v3133
  %v3390 = vpack.c.b16 %v3134, %v3134
  %v3391 = vpack.c.b16 %v3135, %v3135
  %v3392 = vpack.c.b16 %v3136, %v3136
  %v3393 = vpack.c.b16 %v3137, %v3137
  %v3394 = vpack.c.b16 %v3138, %v3138
  %v3395 = vpack.c.b16 %v3139, %v3139
  %v3396 = vpack.c.b16 %v3140, %v3140
  %v3397 = vpack.c.b16 %v3141, %v3141
  %v3398 = vpack.c.b16 %v3142, %v3142
  %v3399 = vpack.c.b16 %v3143, %v3143
  %v3400 = vpack.c.b16 %v3144, %v3144
  %v3401 = vpack.c.b16 %v3145, %v3145
  %v3402 = vpack.c.b16 %v3146, %v3146
  %v3403 = vpack.c.b16 %v3147, %v3147
  %v3404 = vpack.c.b16 %v3148, %v3148
  %v3405 = vpack.c.b16 %v3149, %v3149
  %v3406 = vpack.c.b16 %v3150, %v3150
  %v3407 = vpack.c.b16 %v3151, %v3151
  %3664 = vst [vmem:[%s3] sm:$0xf] %v3152
  %3665 = vst [vmem:[%s3 + $0x4] sm:$0xf] %v3153
  %3666 = vst [vmem:[%s3 + $0x8] sm:$0xf] %v3154
  %3667 = vst [vmem:[%s3 + $0xc] sm:$0xf] %v3155
  %3668 = vst [vmem:[%s3 + $0x10] sm:$0xf] %v3156
  %3669 = vst [vmem:[%s3 + $0x14] sm:$0xf] %v3157
  %3670 = vst [vmem:[%s3 + $0x18] sm:$0xf] %v3158
  %3671 = vst [vmem:[%s3 + $0x1c] sm:$0xf] %v3159
  %3672 = vst [vmem:[%s3 + $0x20] sm:$0xf] %v3160
  %3673 = vst [vmem:[%s3 + $0x24] sm:$0xf] %v3161
  %3674 = vst [vmem:[%s3 + $0x28] sm:$0xf] %v3162
  %3675 = vst [vmem:[%s3 + $0x2c] sm:$0xf] %v3163
  %3676 = vst [vmem:[%s3 + $0x30] sm:$0xf] %v3164
  %3677 = vst [vmem:[%s3 + $0x34] sm:$0xf] %v3165
  %3678 = vst [vmem:[%s3 + $0x38] sm:$0xf] %v3166
  %3679 = vst [vmem:[%s3 + $0x3c] sm:$0xf] %v3167
  %3680 = vst [vmem:[%s3 + $0x40] sm:$0xf] %v3168
  %3681 = vst [vmem:[%s3 + $0x44] sm:$0xf] %v3169
  %3682 = vst [vmem:[%s3 + $0x48] sm:$0xf] %v3170
  %3683 = vst [vmem:[%s3 + $0x4c] sm:$0xf] %v3171
  %3684 = vst [vmem:[%s3 + $0x50] sm:$0xf] %v3172
  %3685 = vst [vmem:[%s3 + $0x54] sm:$0xf] %v3173
  %3686 = vst [vmem:[%s3 + $0x58] sm:$0xf] %v3174
  %3687 = vst [vmem:[%s3 + $0x5c] sm:$0xf] %v3175
  %3688 = vst [vmem:[%s3 + $0x60] sm:$0xf] %v3176
  %3689 = vst [vmem:[%s3 + $0x64] sm:$0xf] %v3177
  %3690 = vst [vmem:[%s3 + $0x68] sm:$0xf] %v3178
  %3691 = vst [vmem:[%s3 + $0x6c] sm:$0xf] %v3179
  %3692 = vst [vmem:[%s3 + $0x70] sm:$0xf] %v3180
  %3693 = vst [vmem:[%s3 + $0x74] sm:$0xf] %v3181
  %3694 = vst [vmem:[%s3 + $0x78] sm:$0xf] %v3182
  %3695 = vst [vmem:[%s3 + $0x7c] sm:$0xf] %v3183
  %3696 = vst [vmem:[%s3 + $0x80] sm:$0xf] %v3184
  %3697 = vst [vmem:[%s3 + $0x84] sm:$0xf] %v3185
  %3698 = vst [vmem:[%s3 + $0x88] sm:$0xf] %v3186
  %3699 = vst [vmem:[%s3 + $0x8c] sm:$0xf] %v3187
  %3700 = vst [vmem:[%s3 + $0x90] sm:$0xf] %v3188
  %3701 = vst [vmem:[%s3 + $0x94] sm:$0xf] %v3189
  %3702 = vst [vmem:[%s3 + $0x98] sm:$0xf] %v3190
  %3703 = vst [vmem:[%s3 + $0x9c] sm:$0xf] %v3191
  %3704 = vst [vmem:[%s3 + $0xa0] sm:$0xf] %v3192
  %3705 = vst [vmem:[%s3 + $0xa4] sm:$0xf] %v3193
  %3706 = vst [vmem:[%s3 + $0xa8] sm:$0xf] %v3194
  %3707 = vst [vmem:[%s3 + $0xac] sm:$0xf] %v3195
  %3708 = vst [vmem:[%s3 + $0xb0] sm:$0xf] %v3196
  %3709 = vst [vmem:[%s3 + $0xb4] sm:$0xf] %v3197
  %3710 = vst [vmem:[%s3 + $0xb8] sm:$0xf] %v3198
  %3711 = vst [vmem:[%s3 + $0xbc] sm:$0xf] %v3199
  %3712 = vst [vmem:[%s3 + $0xc0] sm:$0xf] %v3200
  %3713 = vst [vmem:[%s3 + $0xc4] sm:$0xf] %v3201
  %3714 = vst [vmem:[%s3 + $0xc8] sm:$0xf] %v3202
  %3715 = vst [vmem:[%s3 + $0xcc] sm:$0xf] %v3203
  %3716 = vst [vmem:[%s3 + $0xd0] sm:$0xf] %v3204
  %3717 = vst [vmem:[%s3 + $0xd4] sm:$0xf] %v3205
  %3718 = vst [vmem:[%s3 + $0xd8] sm:$0xf] %v3206
  %3719 = vst [vmem:[%s3 + $0xdc] sm:$0xf] %v3207
  %3720 = vst [vmem:[%s3 + $0xe0] sm:$0xf] %v3208
  %3721 = vst [vmem:[%s3 + $0xe4] sm:$0xf] %v3209
  %3722 = vst [vmem:[%s3 + $0xe8] sm:$0xf] %v3210
  %3723 = vst [vmem:[%s3 + $0xec] sm:$0xf] %v3211
  %3724 = vst [vmem:[%s3 + $0xf0] sm:$0xf] %v3212
  %3725 = vst [vmem:[%s3 + $0xf4] sm:$0xf] %v3213
  %3726 = vst [vmem:[%s3 + $0xf8] sm:$0xf] %v3214
  %3727 = vst [vmem:[%s3 + $0xfc] sm:$0xf] %v3215
  %3728 = vst [vmem:[%s3 + $0x100] sm:$0xf] %v3216
  %3729 = vst [vmem:[%s3 + $0x104] sm:$0xf] %v3217
  %3730 = vst [vmem:[%s3 + $0x108] sm:$0xf] %v3218
  %3731 = vst [vmem:[%s3 + $0x10c] sm:$0xf] %v3219
  %3732 = vst [vmem:[%s3 + $0x110] sm:$0xf] %v3220
  %3733 = vst [vmem:[%s3 + $0x114] sm:$0xf] %v3221
  %3734 = vst [vmem:[%s3 + $0x118] sm:$0xf] %v3222
  %3735 = vst [vmem:[%s3 + $0x11c] sm:$0xf] %v3223
  %3736 = vst [vmem:[%s3 + $0x120] sm:$0xf] %v3224
  %3737 = vst [vmem:[%s3 + $0x124] sm:$0xf] %v3225
  %3738 = vst [vmem:[%s3 + $0x128] sm:$0xf] %v3226
  %3739 = vst [vmem:[%s3 + $0x12c] sm:$0xf] %v3227
  %3740 = vst [vmem:[%s3 + $0x130] sm:$0xf] %v3228
  %3741 = vst [vmem:[%s3 + $0x134] sm:$0xf] %v3229
  %3742 = vst [vmem:[%s3 + $0x138] sm:$0xf] %v3230
  %3743 = vst [vmem:[%s3 + $0x13c] sm:$0xf] %v3231
  %3744 = vst [vmem:[%s3 + $0x140] sm:$0xf] %v3232
  %3745 = vst [vmem:[%s3 + $0x144] sm:$0xf] %v3233
  %3746 = vst [vmem:[%s3 + $0x148] sm:$0xf] %v3234
  %3747 = vst [vmem:[%s3 + $0x14c] sm:$0xf] %v3235
  %3748 = vst [vmem:[%s3 + $0x150] sm:$0xf] %v3236
  %3749 = vst [vmem:[%s3 + $0x154] sm:$0xf] %v3237
  %3750 = vst [vmem:[%s3 + $0x158] sm:$0xf] %v3238
  %3751 = vst [vmem:[%s3 + $0x15c] sm:$0xf] %v3239
  %3752 = vst [vmem:[%s3 + $0x160] sm:$0xf] %v3240
  %3753 = vst [vmem:[%s3 + $0x164] sm:$0xf] %v3241
  %3754 = vst [vmem:[%s3 + $0x168] sm:$0xf] %v3242
  %3755 = vst [vmem:[%s3 + $0x16c] sm:$0xf] %v3243
  %3756 = vst [vmem:[%s3 + $0x170] sm:$0xf] %v3244
  %3757 = vst [vmem:[%s3 + $0x174] sm:$0xf] %v3245
  %3758 = vst [vmem:[%s3 + $0x178] sm:$0xf] %v3246
  %3759 = vst [vmem:[%s3 + $0x17c] sm:$0xf] %v3247
  %3760 = vst [vmem:[%s3 + $0x180] sm:$0xf] %v3248
  %3761 = vst [vmem:[%s3 + $0x184] sm:$0xf] %v3249
  %3762 = vst [vmem:[%s3 + $0x188] sm:$0xf] %v3250
  %3763 = vst [vmem:[%s3 + $0x18c] sm:$0xf] %v3251
  %3764 = vst [vmem:[%s3 + $0x190] sm:$0xf] %v3252
  %3765 = vst [vmem:[%s3 + $0x194] sm:$0xf] %v3253
  %3766 = vst [vmem:[%s3 + $0x198] sm:$0xf] %v3254
  %3767 = vst [vmem:[%s3 + $0x19c] sm:$0xf] %v3255
  %3768 = vst [vmem:[%s3 + $0x1a0] sm:$0xf] %v3256
  %3769 = vst [vmem:[%s3 + $0x1a4] sm:$0xf] %v3257
  %3770 = vst [vmem:[%s3 + $0x1a8] sm:$0xf] %v3258
  %3771 = vst [vmem:[%s3 + $0x1ac] sm:$0xf] %v3259
  %3772 = vst [vmem:[%s3 + $0x1b0] sm:$0xf] %v3260
  %3773 = vst [vmem:[%s3 + $0x1b4] sm:$0xf] %v3261
  %3774 = vst [vmem:[%s3 + $0x1b8] sm:$0xf] %v3262
  %3775 = vst [vmem:[%s3 + $0x1bc] sm:$0xf] %v3263
  %3776 = vst [vmem:[%s3 + $0x1c0] sm:$0xf] %v3264
  %3777 = vst [vmem:[%s3 + $0x1c4] sm:$0xf] %v3265
  %3778 = vst [vmem:[%s3 + $0x1c8] sm:$0xf] %v3266
  %3779 = vst [vmem:[%s3 + $0x1cc] sm:$0xf] %v3267
  %3780 = vst [vmem:[%s3 + $0x1d0] sm:$0xf] %v3268
  %3781 = vst [vmem:[%s3 + $0x1d4] sm:$0xf] %v3269
  %3782 = vst [vmem:[%s3 + $0x1d8] sm:$0xf] %v3270
  %3783 = vst [vmem:[%s3 + $0x1dc] sm:$0xf] %v3271
  %3784 = vst [vmem:[%s3 + $0x1e0] sm:$0xf] %v3272
  %3785 = vst [vmem:[%s3 + $0x1e4] sm:$0xf] %v3273
  %3786 = vst [vmem:[%s3 + $0x1e8] sm:$0xf] %v3274
  %3787 = vst [vmem:[%s3 + $0x1ec] sm:$0xf] %v3275
  %3788 = vst [vmem:[%s3 + $0x1f0] sm:$0xf] %v3276
  %3789 = vst [vmem:[%s3 + $0x1f4] sm:$0xf] %v3277
  %3790 = vst [vmem:[%s3 + $0x1f8] sm:$0xf] %v3278
  %3791 = vst [vmem:[%s3 + $0x1fc] sm:$0xf] %v3279
  %3792 = vst [vmem:[%s3 + $0x200] sm:$0xf] %v3280
  %3793 = vst [vmem:[%s3 + $0x204] sm:$0xf] %v3281
  %3794 = vst [vmem:[%s3 + $0x208] sm:$0xf] %v3282
  %3795 = vst [vmem:[%s3 + $0x20c] sm:$0xf] %v3283
  %3796 = vst [vmem:[%s3 + $0x210] sm:$0xf] %v3284
  %3797 = vst [vmem:[%s3 + $0x214] sm:$0xf] %v3285
  %3798 = vst [vmem:[%s3 + $0x218] sm:$0xf] %v3286
  %3799 = vst [vmem:[%s3 + $0x21c] sm:$0xf] %v3287
  %3800 = vst [vmem:[%s3 + $0x220] sm:$0xf] %v3288
  %3801 = vst [vmem:[%s3 + $0x224] sm:$0xf] %v3289
  %3802 = vst [vmem:[%s3 + $0x228] sm:$0xf] %v3290
  %3803 = vst [vmem:[%s3 + $0x22c] sm:$0xf] %v3291
  %3804 = vst [vmem:[%s3 + $0x230] sm:$0xf] %v3292
  %3805 = vst [vmem:[%s3 + $0x234] sm:$0xf] %v3293
  %3806 = vst [vmem:[%s3 + $0x238] sm:$0xf] %v3294
  %3807 = vst [vmem:[%s3 + $0x23c] sm:$0xf] %v3295
  %3808 = vst [vmem:[%s3 + $0x240] sm:$0xf] %v3296
  %3809 = vst [vmem:[%s3 + $0x244] sm:$0xf] %v3297
  %3810 = vst [vmem:[%s3 + $0x248] sm:$0xf] %v3298
  %3811 = vst [vmem:[%s3 + $0x24c] sm:$0xf] %v3299
  %3812 = vst [vmem:[%s3 + $0x250] sm:$0xf] %v3300
  %3813 = vst [vmem:[%s3 + $0x254] sm:$0xf] %v3301
  %3814 = vst [vmem:[%s3 + $0x258] sm:$0xf] %v3302
  %3815 = vst [vmem:[%s3 + $0x25c] sm:$0xf] %v3303
  %3816 = vst [vmem:[%s3 + $0x260] sm:$0xf] %v3304
  %3817 = vst [vmem:[%s3 + $0x264] sm:$0xf] %v3305
  %3818 = vst [vmem:[%s3 + $0x268] sm:$0xf] %v3306
  %3819 = vst [vmem:[%s3 + $0x26c] sm:$0xf] %v3307
  %3820 = vst [vmem:[%s3 + $0x270] sm:$0xf] %v3308
  %3821 = vst [vmem:[%s3 + $0x274] sm:$0xf] %v3309
  %3822 = vst [vmem:[%s3 + $0x278] sm:$0xf] %v3310
  %3823 = vst [vmem:[%s3 + $0x27c] sm:$0xf] %v3311
  %3824 = vst [vmem:[%s3 + $0x280] sm:$0xf] %v3312
  %3825 = vst [vmem:[%s3 + $0x284] sm:$0xf] %v3313
  %3826 = vst [vmem:[%s3 + $0x288] sm:$0xf] %v3314
  %3827 = vst [vmem:[%s3 + $0x28c] sm:$0xf] %v3315
  %3828 = vst [vmem:[%s3 + $0x290] sm:$0xf] %v3316
  %3829 = vst [vmem:[%s3 + $0x294] sm:$0xf] %v3317
  %3830 = vst [vmem:[%s3 + $0x298] sm:$0xf] %v3318
  %3831 = vst [vmem:[%s3 + $0x29c] sm:$0xf] %v3319
  %3832 = vst [vmem:[%s3 + $0x2a0] sm:$0xf] %v3320
  %3833 = vst [vmem:[%s3 + $0x2a4] sm:$0xf] %v3321
  %3834 = vst [vmem:[%s3 + $0x2a8] sm:$0xf] %v3322
  %3835 = vst [vmem:[%s3 + $0x2ac] sm:$0xf] %v3323
  %3836 = vst [vmem:[%s3 + $0x2b0] sm:$0xf] %v3324
  %3837 = vst [vmem:[%s3 + $0x2b4] sm:$0xf] %v3325
  %3838 = vst [vmem:[%s3 + $0x2b8] sm:$0xf] %v3326
  %3839 = vst [vmem:[%s3 + $0x2bc] sm:$0xf] %v3327
  %3840 = vst [vmem:[%s3 + $0x2c0] sm:$0xf] %v3328
  %3841 = vst [vmem:[%s3 + $0x2c4] sm:$0xf] %v3329
  %3842 = vst [vmem:[%s3 + $0x2c8] sm:$0xf] %v3330
  %3843 = vst [vmem:[%s3 + $0x2cc] sm:$0xf] %v3331
  %3844 = vst [vmem:[%s3 + $0x2d0] sm:$0xf] %v3332
  %3845 = vst [vmem:[%s3 + $0x2d4] sm:$0xf] %v3333
  %3846 = vst [vmem:[%s3 + $0x2d8] sm:$0xf] %v3334
  %3847 = vst [vmem:[%s3 + $0x2dc] sm:$0xf] %v3335
  %3848 = vst [vmem:[%s3 + $0x2e0] sm:$0xf] %v3336
  %3849 = vst [vmem:[%s3 + $0x2e4] sm:$0xf] %v3337
  %3850 = vst [vmem:[%s3 + $0x2e8] sm:$0xf] %v3338
  %3851 = vst [vmem:[%s3 + $0x2ec] sm:$0xf] %v3339
  %3852 = vst [vmem:[%s3 + $0x2f0] sm:$0xf] %v3340
  %3853 = vst [vmem:[%s3 + $0x2f4] sm:$0xf] %v3341
  %3854 = vst [vmem:[%s3 + $0x2f8] sm:$0xf] %v3342
  %3855 = vst [vmem:[%s3 + $0x2fc] sm:$0xf] %v3343
  %3856 = vst [vmem:[%s3 + $0x300] sm:$0xf] %v3344
  %3857 = vst [vmem:[%s3 + $0x304] sm:$0xf] %v3345
  %3858 = vst [vmem:[%s3 + $0x308] sm:$0xf] %v3346
  %3859 = vst [vmem:[%s3 + $0x30c] sm:$0xf] %v3347
  %3860 = vst [vmem:[%s3 + $0x310] sm:$0xf] %v3348
  %3861 = vst [vmem:[%s3 + $0x314] sm:$0xf] %v3349
  %3862 = vst [vmem:[%s3 + $0x318] sm:$0xf] %v3350
  %3863 = vst [vmem:[%s3 + $0x31c] sm:$0xf] %v3351
  %3864 = vst [vmem:[%s3 + $0x320] sm:$0xf] %v3352
  %3865 = vst [vmem:[%s3 + $0x324] sm:$0xf] %v3353
  %3866 = vst [vmem:[%s3 + $0x328] sm:$0xf] %v3354
  %3867 = vst [vmem:[%s3 + $0x32c] sm:$0xf] %v3355
  %3868 = vst [vmem:[%s3 + $0x330] sm:$0xf] %v3356
  %3869 = vst [vmem:[%s3 + $0x334] sm:$0xf] %v3357
  %3870 = vst [vmem:[%s3 + $0x338] sm:$0xf] %v3358
  %3871 = vst [vmem:[%s3 + $0x33c] sm:$0xf] %v3359
  %3872 = vst [vmem:[%s3 + $0x340] sm:$0xf] %v3360
  %3873 = vst [vmem:[%s3 + $0x344] sm:$0xf] %v3361
  %3874 = vst [vmem:[%s3 + $0x348] sm:$0xf] %v3362
  %3875 = vst [vmem:[%s3 + $0x34c] sm:$0xf] %v3363
  %3876 = vst [vmem:[%s3 + $0x350] sm:$0xf] %v3364
  %3877 = vst [vmem:[%s3 + $0x354] sm:$0xf] %v3365
  %3878 = vst [vmem:[%s3 + $0x358] sm:$0xf] %v3366
  %3879 = vst [vmem:[%s3 + $0x35c] sm:$0xf] %v3367
  %3880 = vst [vmem:[%s3 + $0x360] sm:$0xf] %v3368
  %3881 = vst [vmem:[%s3 + $0x364] sm:$0xf] %v3369
  %3882 = vst [vmem:[%s3 + $0x368] sm:$0xf] %v3370
  %3883 = vst [vmem:[%s3 + $0x36c] sm:$0xf] %v3371
  %3884 = vst [vmem:[%s3 + $0x370] sm:$0xf] %v3372
  %3885 = vst [vmem:[%s3 + $0x374] sm:$0xf] %v3373
  %3886 = vst [vmem:[%s3 + $0x378] sm:$0xf] %v3374
  %3887 = vst [vmem:[%s3 + $0x37c] sm:$0xf] %v3375
  %3888 = vst [vmem:[%s3 + $0x380] sm:$0xf] %v3376
  %3889 = vst [vmem:[%s3 + $0x384] sm:$0xf] %v3377
  %3890 = vst [vmem:[%s3 + $0x388] sm:$0xf] %v3378
  %3891 = vst [vmem:[%s3 + $0x38c] sm:$0xf] %v3379
  %3892 = vst [vmem:[%s3 + $0x390] sm:$0xf] %v3380
  %3893 = vst [vmem:[%s3 + $0x394] sm:$0xf] %v3381
  %3894 = vst [vmem:[%s3 + $0x398] sm:$0xf] %v3382
  %3895 = vst [vmem:[%s3 + $0x39c] sm:$0xf] %v3383
  %3896 = vst [vmem:[%s3 + $0x3a0] sm:$0xf] %v3384
  %3897 = vst [vmem:[%s3 + $0x3a4] sm:$0xf] %v3385
  %3898 = vst [vmem:[%s3 + $0x3a8] sm:$0xf] %v3386
  %3899 = vst [vmem:[%s3 + $0x3ac] sm:$0xf] %v3387
  %3900 = vst [vmem:[%s3 + $0x3b0] sm:$0xf] %v3388
  %3901 = vst [vmem:[%s3 + $0x3b4] sm:$0xf] %v3389
  %3902 = vst [vmem:[%s3 + $0x3b8] sm:$0xf] %v3390
  %3903 = vst [vmem:[%s3 + $0x3bc] sm:$0xf] %v3391
  %3904 = vst [vmem:[%s3 + $0x3c0] sm:$0xf] %v3392
  %3905 = vst [vmem:[%s3 + $0x3c4] sm:$0xf] %v3393
  %3906 = vst [vmem:[%s3 + $0x3c8] sm:$0xf] %v3394
  %3907 = vst [vmem:[%s3 + $0x3cc] sm:$0xf] %v3395
  %3908 = vst [vmem:[%s3 + $0x3d0] sm:$0xf] %v3396
  %3909 = vst [vmem:[%s3 + $0x3d4] sm:$0xf] %v3397
  %3910 = vst [vmem:[%s3 + $0x3d8] sm:$0xf] %v3398
  %3911 = vst [vmem:[%s3 + $0x3dc] sm:$0xf] %v3399
  %3912 = vst [vmem:[%s3 + $0x3e0] sm:$0xf] %v3400
  %3913 = vst [vmem:[%s3 + $0x3e4] sm:$0xf] %v3401
  %3914 = vst [vmem:[%s3 + $0x3e8] sm:$0xf] %v3402
  %3915 = vst [vmem:[%s3 + $0x3ec] sm:$0xf] %v3403
  %3916 = vst [vmem:[%s3 + $0x3f0] sm:$0xf] %v3404
  %3917 = vst [vmem:[%s3 + $0x3f4] sm:$0xf] %v3405
  %3918 = vst [vmem:[%s3 + $0x3f8] sm:$0xf] %v3406
  %3919 = vst [vmem:[%s3 + $0x3fc] sm:$0xf] %v3407
  // Predicated region
  $region14: #{_forward_impl.4} parent=0 // pred_check
    _
  $region15: #{_forward_impl.4} parent=0 // pred_check_branch
    %3921 = sbr.rel (0) target = $region17
  $region16: #{_forward_impl.4} parent=0 // pred_region
    _
  $region17: #{_forward_impl.4} parent=0 // pred_fallthru
    _
  // Predicated region
  $region18: #{_forward_impl.4} parent=0 // pred_check
    _
  $region19: #{_forward_impl.4} parent=0 // pred_check_branch
    %3923 = sbr.rel (0) target = $region21
  $region20: #{_forward_impl.4} parent=0 // pred_region
    _
  $region21: #{_forward_impl.4} parent=0 // pred_fallthru
    _

// kernel: _forward_impl.5
$region0: #{_forward_impl.5}
  #allocation0 [shape = 'u32[]', space=smem, size = 0x4, offset = 0x4, fixed_abs, tag = 'smem constant byte address 0x4 - core index']
  #allocation1 [shape = 'u32[144,128]{1,0:T(1,128)}', space=vmem, size = 0x12000, scoped, tag = 'internal scratch']
  %s0 = inlined_call_operand.vmem [shape: bf16[400,128], index: 0, kind: input, shape index: {}]
  %s1 = inlined_call_operand.vmem [shape: bf16[128,128], index: 1, kind: input, shape index: {}]
  %s2 = inlined_call_operand.vmem [shape: f32[1,128], index: 2, kind: input, shape index: {}]
  %s3 = inlined_call_operand.vmem [shape: bf16[400,128], index: 3, kind: output, shape index: {}]
  %s4 = sld [smem:[#allocation0]]
  $region22: #{_forward_impl.5} parent=0
    _
  %s6 = ssub.s32 1, %s4
  %s7 = scalar_select 0, %s6, %s4
  // Predicated region
  $region2: #{_forward_impl.5} parent=0 // pred_check
    _
  $region3: #{_forward_impl.5} parent=0 // pred_check_branch
    %9 = sbr.rel (0) target = $region5
  $region4: #{_forward_impl.5} parent=0 // pred_region
    _
  $region5: #{_forward_impl.5} parent=0 // pred_fallthru
    _
  // Predicated region
  $region6: #{_forward_impl.5} parent=0 // pred_check
    _
  $region7: #{_forward_impl.5} parent=0 // pred_check_branch
    %11 = sbr.rel (0) target = $region9
  $region8: #{_forward_impl.5} parent=0 // pred_region
    _
  $region9: #{_forward_impl.5} parent=0 // pred_fallthru
    _
  // Predicated region
  $region10: #{_forward_impl.5} parent=0 // pred_check
    _
  $region11: #{_forward_impl.5} parent=0 // pred_check_branch
    %13 = sbr.rel (0) target = $region13
  $region12: #{_forward_impl.5} parent=0 // pred_region
    _
  $region13: #{_forward_impl.5} parent=0 // pred_fallthru
    _
  %v15 = vld [vmem:[%s0] sm:$0xf]
  %v16 = vld [vmem:[%s0 + $0x4] sm:$0xf]
  %v17 = vld [vmem:[%s0 + $0x8] sm:$0xf]
  %v18 = vld [vmem:[%s0 + $0xc] sm:$0xf]
  %v19 = vld [vmem:[%s0 + $0x10] sm:$0xf]
  %v20 = vld [vmem:[%s0 + $0x14] sm:$0xf]
  %v21 = vld [vmem:[%s0 + $0x18] sm:$0xf]
  %v22 = vld [vmem:[%s0 + $0x1c] sm:$0xf]
  %v23 = vld [vmem:[%s0 + $0x20] sm:$0xf]
  %v24 = vld [vmem:[%s0 + $0x24] sm:$0xf]
  %v25 = vld [vmem:[%s0 + $0x28] sm:$0xf]
  %v26 = vld [vmem:[%s0 + $0x2c] sm:$0xf]
  %v27 = vld [vmem:[%s0 + $0x30] sm:$0xf]
  %v28 = vld [vmem:[%s0 + $0x34] sm:$0xf]
  %v29 = vld [vmem:[%s0 + $0x38] sm:$0xf]
  %v30 = vld [vmem:[%s0 + $0x3c] sm:$0xf]
  %v31 = vld [vmem:[%s0 + $0x40] sm:$0xf]
  %v32 = vld [vmem:[%s0 + $0x44] sm:$0xf]
  %v33 = vld [vmem:[%s0 + $0x48] sm:$0xf]
  %v34 = vld [vmem:[%s0 + $0x4c] sm:$0xf]
  %v35 = vld [vmem:[%s0 + $0x50] sm:$0xf]
  %v36 = vld [vmem:[%s0 + $0x54] sm:$0xf]
  %v37 = vld [vmem:[%s0 + $0x58] sm:$0xf]
  %v38 = vld [vmem:[%s0 + $0x5c] sm:$0xf]
  %v39 = vld [vmem:[%s0 + $0x60] sm:$0xf]
  %v40 = vld [vmem:[%s0 + $0x64] sm:$0xf]
  %v41 = vld [vmem:[%s0 + $0x68] sm:$0xf]
  %v42 = vld [vmem:[%s0 + $0x6c] sm:$0xf]
  %v43 = vld [vmem:[%s0 + $0x70] sm:$0xf]
  %v44 = vld [vmem:[%s0 + $0x74] sm:$0xf]
  %v45 = vld [vmem:[%s0 + $0x78] sm:$0xf]
  %v46 = vld [vmem:[%s0 + $0x7c] sm:$0xf]
  %v47 = vld [vmem:[%s0 + $0x80] sm:$0xf]
  %v48 = vld [vmem:[%s0 + $0x84] sm:$0xf]
  %v49 = vld [vmem:[%s0 + $0x88] sm:$0xf]
  %v50 = vld [vmem:[%s0 + $0x8c] sm:$0xf]
  %v51 = vld [vmem:[%s0 + $0x90] sm:$0xf]
  %v52 = vld [vmem:[%s0 + $0x94] sm:$0xf]
  %v53 = vld [vmem:[%s0 + $0x98] sm:$0xf]
  %v54 = vld [vmem:[%s0 + $0x9c] sm:$0xf]
  %v55 = vld [vmem:[%s0 + $0xa0] sm:$0xf]
  %v56 = vld [vmem:[%s0 + $0xa4] sm:$0xf]
  %v57 = vld [vmem:[%s0 + $0xa8] sm:$0xf]
  %v58 = vld [vmem:[%s0 + $0xac] sm:$0xf]
  %v59 = vld [vmem:[%s0 + $0xb0] sm:$0xf]
  %v60 = vld [vmem:[%s0 + $0xb4] sm:$0xf]
  %v61 = vld [vmem:[%s0 + $0xb8] sm:$0xf]
  %v62 = vld [vmem:[%s0 + $0xbc] sm:$0xf]
  %v63 = vld [vmem:[%s0 + $0xc0] sm:$0xf]
  %v64 = vld [vmem:[%s0 + $0xc4] sm:$0xf]
  %v65 = vld [vmem:[%s1] sm:$0xf]
  %v66 = vld [vmem:[%s1 + $0x4] sm:$0xf]
  %v67 = vld [vmem:[%s1 + $0x8] sm:$0xf]
  %v68 = vld [vmem:[%s1 + $0xc] sm:$0xf]
  %v69 = vld [vmem:[%s1 + $0x10] sm:$0xf]
  %v70 = vld [vmem:[%s1 + $0x14] sm:$0xf]
  %v71 = vld [vmem:[%s1 + $0x18] sm:$0xf]
  %v72 = vld [vmem:[%s1 + $0x1c] sm:$0xf]
  %v73 = vld [vmem:[%s1 + $0x20] sm:$0xf]
  %v74 = vld [vmem:[%s1 + $0x24] sm:$0xf]
  %v75 = vld [vmem:[%s1 + $0x28] sm:$0xf]
  %v76 = vld [vmem:[%s1 + $0x2c] sm:$0xf]
  %v77 = vld [vmem:[%s1 + $0x30] sm:$0xf]
  %v78 = vld [vmem:[%s1 + $0x34] sm:$0xf]
  %v79 = vld [vmem:[%s1 + $0x38] sm:$0xf]
  %v80 = vld [vmem:[%s1 + $0x3c] sm:$0xf]
  %v81 = vld [vmem:[%s2] sm:$0x1]
  %v83 = vlaneseq
  %v84 = vshrl.u32 %v83, 7
  %v85 = vsub.s32 0, %v84
  %v86 = vrot.slane %v81, %v85
  %v138 = vunpack.c.l.b16 %v15
  %v139 = vunpack.c.l.b16 %v16
  %v140 = vunpack.c.l.b16 %v17
  %v141 = vunpack.c.l.b16 %v18
  %v142 = vunpack.c.l.b16 %v19
  %v143 = vunpack.c.l.b16 %v20
  %v144 = vunpack.c.l.b16 %v21
  %v145 = vunpack.c.l.b16 %v22
  %v146 = vunpack.c.l.b16 %v23
  %v147 = vunpack.c.l.b16 %v24
  %v148 = vunpack.c.l.b16 %v25
  %v149 = vunpack.c.l.b16 %v26
  %v150 = vunpack.c.l.b16 %v27
  %v151 = vunpack.c.l.b16 %v28
  %v152 = vunpack.c.l.b16 %v29
  %v153 = vunpack.c.l.b16 %v30
  %v154 = vunpack.c.l.b16 %v31
  %v155 = vunpack.c.l.b16 %v32
  %v156 = vunpack.c.l.b16 %v33
  %v157 = vunpack.c.l.b16 %v34
  %v158 = vunpack.c.l.b16 %v35
  %v159 = vunpack.c.l.b16 %v36
  %v160 = vunpack.c.l.b16 %v37
  %v161 = vunpack.c.l.b16 %v38
  %v162 = vunpack.c.l.b16 %v39
  %v163 = vunpack.c.l.b16 %v40
  %v164 = vunpack.c.l.b16 %v41
  %v165 = vunpack.c.l.b16 %v42
  %v166 = vunpack.c.l.b16 %v43
  %v167 = vunpack.c.l.b16 %v44
  %v168 = vunpack.c.l.b16 %v45
  %v169 = vunpack.c.l.b16 %v46
  %v170 = vunpack.c.l.b16 %v47
  %v171 = vunpack.c.l.b16 %v48
  %v172 = vunpack.c.l.b16 %v49
  %v173 = vunpack.c.l.b16 %v50
  %v174 = vunpack.c.l.b16 %v51
  %v175 = vunpack.c.l.b16 %v52
  %v176 = vunpack.c.l.b16 %v53
  %v177 = vunpack.c.l.b16 %v54
  %v178 = vunpack.c.l.b16 %v55
  %v179 = vunpack.c.l.b16 %v56
  %v180 = vunpack.c.l.b16 %v57
  %v181 = vunpack.c.l.b16 %v58
  %v182 = vunpack.c.l.b16 %v59
  %v183 = vunpack.c.l.b16 %v60
  %v184 = vunpack.c.l.b16 %v61
  %v185 = vunpack.c.l.b16 %v62
  %v186 = vunpack.c.l.b16 %v63
  %v187 = vunpack.c.l.b16 %v64
  %v188 = vpack.c.b16 %v139, %v138
  %v189 = vpack.c.b16 %v141, %v140
  %v190 = vpack.c.b16 %v143, %v142
  %v191 = vpack.c.b16 %v145, %v144
  %v192 = vpack.c.b16 %v147, %v146
  %v193 = vpack.c.b16 %v149, %v148
  %v194 = vpack.c.b16 %v151, %v150
  %v195 = vpack.c.b16 %v153, %v152
  %v196 = vpack.c.b16 %v155, %v154
  %v197 = vpack.c.b16 %v157, %v156
  %v198 = vpack.c.b16 %v159, %v158
  %v199 = vpack.c.b16 %v161, %v160
  %v200 = vpack.c.b16 %v163, %v162
  %v201 = vpack.c.b16 %v165, %v164
  %v202 = vpack.c.b16 %v167, %v166
  %v203 = vpack.c.b16 %v169, %v168
  %v204 = vpack.c.b16 %v171, %v170
  %v205 = vpack.c.b16 %v173, %v172
  %v206 = vpack.c.b16 %v175, %v174
  %v207 = vpack.c.b16 %v177, %v176
  %v208 = vpack.c.b16 %v179, %v178
  %v209 = vpack.c.b16 %v181, %v180
  %v210 = vpack.c.b16 %v183, %v182
  %v211 = vpack.c.b16 %v185, %v184
  %v212 = vpack.c.b16 %v187, %v186
  %v254 = vunpack.c.l.b16 %v65
  %v255 = vunpack.c.l.b16 %v66
  %v256 = vunpack.c.l.b16 %v67
  %v257 = vunpack.c.l.b16 %v68
  %v258 = vunpack.c.l.b16 %v69
  %v259 = vunpack.c.l.b16 %v70
  %v260 = vunpack.c.l.b16 %v71
  %v261 = vunpack.c.l.b16 %v72
  %v262 = vunpack.c.l.b16 %v73
  %v263 = vunpack.c.l.b16 %v74
  %v264 = vunpack.c.l.b16 %v75
  %v265 = vunpack.c.l.b16 %v76
  %v266 = vunpack.c.l.b16 %v77
  %v267 = vunpack.c.l.b16 %v78
  %v268 = vunpack.c.l.b16 %v79
  %v269 = vunpack.c.l.b16 %v80
  %v270 = vpack.c.b16 %v255, %v254
  %v271 = vpack.c.b16 %v257, %v256
  %v272 = vpack.c.b16 %v259, %v258
  %v273 = vpack.c.b16 %v261, %v260
  %v274 = vpack.c.b16 %v263, %v262
  %v275 = vpack.c.b16 %v265, %v264
  %v276 = vpack.c.b16 %v267, %v266
  %v277 = vpack.c.b16 %v269, %v268
  %286 = vmatprep.subr.bf16.mxu0 0
  %287 = vmatpush1.bf16.msra.mxu0 %v270
  %288 = vmatprep.subr.bf16.mxu0 0
  %289 = vmatpush1.bf16.msra.mxu0 %v271
  %290 = vmatprep.subr.bf16.mxu0 0
  %291 = vmatpush1.bf16.msra.mxu0 %v272
  %292 = vmatprep.subr.bf16.mxu0 0
  %293 = vmatpush1.bf16.msra.mxu0 %v273
  %294 = vmatprep.subr.bf16.mxu0 0
  %295 = vmatpush1.bf16.msra.mxu0 %v274
  %296 = vmatprep.subr.bf16.mxu0 0
  %297 = vmatpush1.bf16.msra.mxu0 %v275
  %298 = vmatprep.subr.bf16.mxu0 0
  %299 = vmatpush1.bf16.msra.mxu0 %v276
  %300 = vmatprep.subr.bf16.mxu0 0
  %301 = vmatpush1.bf16.msra.mxu0 %v277
  %302 = vmatprep.subr.bf16.mxu0 0
  %303 = vmatpush1.bf16.msra.mxu0 0
  %304 = vmatprep.subr.bf16.mxu0 0
  %305 = vmatpush1.bf16.msra.mxu0 0
  %306 = vmatprep.subr.bf16.mxu0 0
  %307 = vmatpush1.bf16.msra.mxu0 0
  %308 = vmatprep.subr.bf16.mxu0 0
  %309 = vmatpush1.bf16.msra.mxu0 0
  %310 = vmatprep.subr.bf16.mxu0 0
  %311 = vmatpush1.bf16.msra.mxu0 0
  %312 = vmatprep.subr.bf16.mxu0 0
  %313 = vmatpush1.bf16.msra.mxu0 0
  %314 = vmatprep.subr.bf16.mxu0 0
  %315 = vmatpush1.bf16.msra.mxu0 0
  %316 = vmatprep.subr.bf16.mxu0 0
  %317 = vmatpush1.bf16.msra.mxu0 0
  %318 = vmatprep.mubr.bf16.mxu0 0
  %319 = vmatmul.mubr.bf16.gmra.mrb[0].mxu0 %v188
  %v320 = vpop.f32.mrb[0].mxu0
  %v321 = vadd.f32 %v86, %v320
  %v322 = vpop.f32.mrb[0].mxu0
  %v323 = vpop.f32.mrb[0].mxu0
  %v324 = vadd.f32 %v86, %v323
  %v325 = vpop.f32.mrb[0].mxu0
  %326 = vmatprep.mubr.bf16.mxu0 0
  %327 = vmatmul.mubr.bf16.gmra.mrb[0].mxu0 %v189
  %v328 = vpop.f32.mrb[0].mxu0
  %v329 = vadd.f32 %v86, %v328
  %v330 = vpop.f32.mrb[0].mxu0
  %v331 = vpop.f32.mrb[0].mxu0
  %v332 = vadd.f32 %v86, %v331
  %v333 = vpop.f32.mrb[0].mxu0
  %334 = vmatprep.mubr.bf16.mxu0 0
  %335 = vmatmul.mubr.bf16.gmra.mrb[0].mxu0 %v190
  %v336 = vpop.f32.mrb[0].mxu0
  %v337 = vadd.f32 %v86, %v336
  %v338 = vpop.f32.mrb[0].mxu0
  %v339 = vpop.f32.mrb[0].mxu0
  %v340 = vadd.f32 %v86, %v339
  %v341 = vpop.f32.mrb[0].mxu0
  %342 = vmatprep.mubr.bf16.mxu0 0
  %343 = vmatmul.mubr.bf16.gmra.mrb[0].mxu0 %v191
  %v344 = vpop.f32.mrb[0].mxu0
  %v345 = vadd.f32 %v86, %v344
  %v346 = vpop.f32.mrb[0].mxu0
  %v347 = vpop.f32.mrb[0].mxu0
  %v348 = vadd.f32 %v86, %v347
  %v349 = vpop.f32.mrb[0].mxu0
  %350 = vmatprep.mubr.bf16.mxu0 0
  %351 = vmatmul.mubr.bf16.gmra.mrb[0].mxu0 %v192
  %v352 = vpop.f32.mrb[0].mxu0
  %v353 = vadd.f32 %v86, %v352
  %v354 = vpop.f32.mrb[0].mxu0
  %v355 = vpop.f32.mrb[0].mxu0
  %v356 = vadd.f32 %v86, %v355
  %v357 = vpop.f32.mrb[0].mxu0
  %358 = vmatprep.mubr.bf16.mxu0 0
  %359 = vmatmul.mubr.bf16.gmra.mrb[0].mxu0 %v193
  %v360 = vpop.f32.mrb[0].mxu0
  %v361 = vadd.f32 %v86, %v360
  %v362 = vpop.f32.mrb[0].mxu0
  %v363 = vpop.f32.mrb[0].mxu0
  %v364 = vadd.f32 %v86, %v363
  %v365 = vpop.f32.mrb[0].mxu0
  %366 = vmatprep.mubr.bf16.mxu0 0
  %367 = vmatmul.mubr.bf16.gmra.mrb[0].mxu0 %v194
  %v368 = vpop.f32.mrb[0].mxu0
  %v369 = vadd.f32 %v86, %v368
  %v370 = vpop.f32.mrb[0].mxu0
  %v371 = vpop.f32.mrb[0].mxu0
  %v372 = vadd.f32 %v86, %v371
  %v373 = vpop.f32.mrb[0].mxu0
  %374 = vmatprep.mubr.bf16.mxu0 0
  %375 = vmatmul.mubr.bf16.gmra.mrb[0].mxu0 %v195
  %v376 = vpop.f32.mrb[0].mxu0
  %v377 = vadd.f32 %v86, %v376
  %v378 = vpop.f32.mrb[0].mxu0
  %v379 = vpop.f32.mrb[0].mxu0
  %v380 = vadd.f32 %v86, %v379
  %v381 = vpop.f32.mrb[0].mxu0
  %382 = vmatprep.mubr.bf16.mxu0 0
  %383 = vmatmul.mubr.bf16.gmra.mrb[0].mxu0 %v196
  %v384 = vpop.f32.mrb[0].mxu0
  %v385 = vadd.f32 %v86, %v384
  %v386 = vpop.f32.mrb[0].mxu0
  %v387 = vpop.f32.mrb[0].mxu0
  %v388 = vadd.f32 %v86, %v387
  %v389 = vpop.f32.mrb[0].mxu0
  %390 = vmatprep.mubr.bf16.mxu0 0
  %391 = vmatmul.mubr.bf16.gmra.mrb[0].mxu0 %v197
  %v392 = vpop.f32.mrb[0].mxu0
  %v393 = vadd.f32 %v86, %v392
  %v394 = vpop.f32.mrb[0].mxu0
  %v395 = vpop.f32.mrb[0].mxu0
  %v396 = vadd.f32 %v86, %v395
  %v397 = vpop.f32.mrb[0].mxu0
  %398 = vmatprep.mubr.bf16.mxu0 0
  %399 = vmatmul.mubr.bf16.gmra.mrb[0].mxu0 %v198
  %v400 = vpop.f32.mrb[0].mxu0
  %v401 = vadd.f32 %v86, %v400
  %v402 = vpop.f32.mrb[0].mxu0
  %v403 = vpop.f32.mrb[0].mxu0
  %v404 = vadd.f32 %v86, %v403
  %v405 = vpop.f32.mrb[0].mxu0
  %406 = vmatprep.mubr.bf16.mxu0 0
  %407 = vmatmul.mubr.bf16.gmra.mrb[0].mxu0 %v199
  %v408 = vpop.f32.mrb[0].mxu0
  %v409 = vadd.f32 %v86, %v408
  %v410 = vpop.f32.mrb[0].mxu0
  %v411 = vpop.f32.mrb[0].mxu0
  %v412 = vadd.f32 %v86, %v411
  %v413 = vpop.f32.mrb[0].mxu0
  %414 = vmatprep.mubr.bf16.mxu0 0
  %415 = vmatmul.mubr.bf16.gmra.mrb[0].mxu0 %v200
  %v416 = vpop.f32.mrb[0].mxu0
  %v417 = vadd.f32 %v86, %v416
  %v418 = vpop.f32.mrb[0].mxu0
  %v419 = vpop.f32.mrb[0].mxu0
  %v420 = vadd.f32 %v86, %v419
  %v421 = vpop.f32.mrb[0].mxu0
  %422 = vmatprep.mubr.bf16.mxu0 0
  %423 = vmatmul.mubr.bf16.gmra.mrb[0].mxu0 %v201
  %v424 = vpop.f32.mrb[0].mxu0
  %v425 = vadd.f32 %v86, %v424
  %v426 = vpop.f32.mrb[0].mxu0
  %v427 = vpop.f32.mrb[0].mxu0
  %v428 = vadd.f32 %v86, %v427
  %v429 = vpop.f32.mrb[0].mxu0
  %430 = vmatprep.mubr.bf16.mxu0 0
  %431 = vmatmul.mubr.bf16.gmra.mrb[0].mxu0 %v202
  %v432 = vpop.f32.mrb[0].mxu0
  %v433 = vadd.f32 %v86, %v432
  %v434 = vpop.f32.mrb[0].mxu0
  %v435 = vpop.f32.mrb[0].mxu0
  %v436 = vadd.f32 %v86, %v435
  %v437 = vpop.f32.mrb[0].mxu0
  %438 = vmatprep.mubr.bf16.mxu0 0
  %439 = vmatmul.mubr.bf16.gmra.mrb[0].mxu0 %v203
  %v440 = vpop.f32.mrb[0].mxu0
  %v441 = vadd.f32 %v86, %v440
  %v442 = vpop.f32.mrb[0].mxu0
  %v443 = vpop.f32.mrb[0].mxu0
  %v444 = vadd.f32 %v86, %v443
  %v445 = vpop.f32.mrb[0].mxu0
  %446 = vmatprep.mubr.bf16.mxu0 0
  %447 = vmatmul.mubr.bf16.gmra.mrb[0].mxu0 %v204
  %v448 = vpop.f32.mrb[0].mxu0
  %v449 = vadd.f32 %v86, %v448
  %v450 = vpop.f32.mrb[0].mxu0
  %v451 = vpop.f32.mrb[0].mxu0
  %v452 = vadd.f32 %v86, %v451
  %v453 = vpop.f32.mrb[0].mxu0
  %454 = vmatprep.mubr.bf16.mxu0 0
  %455 = vmatmul.mubr.bf16.gmra.mrb[0].mxu0 %v205
  %v456 = vpop.f32.mrb[0].mxu0
  %v457 = vadd.f32 %v86, %v456
  %v458 = vpop.f32.mrb[0].mxu0
  %v459 = vpop.f32.mrb[0].mxu0
  %v460 = vadd.f32 %v86, %v459
  %v461 = vpop.f32.mrb[0].mxu0
  %462 = vmatprep.mubr.bf16.mxu0 0
  %463 = vmatmul.mubr.bf16.gmra.mrb[0].mxu0 %v206
  %v464 = vpop.f32.mrb[0].mxu0
  %v465 = vadd.f32 %v86, %v464
  %v466 = vpop.f32.mrb[0].mxu0
  %v467 = vpop.f32.mrb[0].mxu0
  %v468 = vadd.f32 %v86, %v467
  %v469 = vpop.f32.mrb[0].mxu0
  %470 = vmatprep.mubr.bf16.mxu0 0
  %471 = vmatmul.mubr.bf16.gmra.mrb[0].mxu0 %v207
  %v472 = vpop.f32.mrb[0].mxu0
  %v473 = vadd.f32 %v86, %v472
  %v474 = vpop.f32.mrb[0].mxu0
  %v475 = vpop.f32.mrb[0].mxu0
  %v476 = vadd.f32 %v86, %v475
  %v477 = vpop.f32.mrb[0].mxu0
  %478 = vmatprep.mubr.bf16.mxu0 0
  %479 = vmatmul.mubr.bf16.gmra.mrb[0].mxu0 %v208
  %v480 = vpop.f32.mrb[0].mxu0
  %v481 = vadd.f32 %v86, %v480
  %v482 = vpop.f32.mrb[0].mxu0
  %v483 = vpop.f32.mrb[0].mxu0
  %v484 = vadd.f32 %v86, %v483
  %v485 = vpop.f32.mrb[0].mxu0
  %486 = vmatprep.mubr.bf16.mxu0 0
  %487 = vmatmul.mubr.bf16.gmra.mrb[0].mxu0 %v209
  %v488 = vpop.f32.mrb[0].mxu0
  %v489 = vadd.f32 %v86, %v488
  %v490 = vpop.f32.mrb[0].mxu0
  %v491 = vpop.f32.mrb[0].mxu0
  %v492 = vadd.f32 %v86, %v491
  %v493 = vpop.f32.mrb[0].mxu0
  %494 = vmatprep.mubr.bf16.mxu0 0
  %495 = vmatmul.mubr.bf16.gmra.mrb[0].mxu0 %v210
  %v496 = vpop.f32.mrb[0].mxu0
  %v497 = vadd.f32 %v86, %v496
  %v498 = vpop.f32.mrb[0].mxu0
  %v499 = vpop.f32.mrb[0].mxu0
  %v500 = vadd.f32 %v86, %v499
  %v501 = vpop.f32.mrb[0].mxu0
  %502 = vmatprep.mubr.bf16.mxu0 0
  %503 = vmatmul.mubr.bf16.gmra.mrb[0].mxu0 %v211
  %v504 = vpop.f32.mrb[0].mxu0
  %v505 = vadd.f32 %v86, %v504
  %v506 = vpop.f32.mrb[0].mxu0
  %v507 = vpop.f32.mrb[0].mxu0
  %v508 = vadd.f32 %v86, %v507
  %v509 = vpop.f32.mrb[0].mxu0
  %510 = vmatprep.mubr.bf16.mxu0 0
  %511 = vmatmul.mubr.bf16.gmra.mrb[0].mxu0 %v212
  %v512 = vpop.f32.mrb[0].mxu0
  %v513 = vadd.f32 %v86, %v512
  %v514 = vpop.f32.mrb[0].mxu0
  %v515 = vpop.f32.mrb[0].mxu0
  %v516 = vadd.f32 %v86, %v515
  %v517 = vpop.f32.mrb[0].mxu0
  %518 = vdwg.mxu0
  %v519 = vmax.f32 %v321, 0.0
  %v520 = vmax.f32 %v324, 0.0
  %v521 = vmax.f32 %v329, 0.0
  %v522 = vmax.f32 %v332, 0.0
  %v523 = vmax.f32 %v337, 0.0
  %v524 = vmax.f32 %v340, 0.0
  %v525 = vmax.f32 %v345, 0.0
  %v526 = vmax.f32 %v348, 0.0
  %v527 = vmax.f32 %v353, 0.0
  %v528 = vmax.f32 %v356, 0.0
  %v529 = vmax.f32 %v361, 0.0
  %v530 = vmax.f32 %v364, 0.0
  %v531 = vmax.f32 %v369, 0.0
  %v532 = vmax.f32 %v372, 0.0
  %v533 = vmax.f32 %v377, 0.0
  %v534 = vmax.f32 %v380, 0.0
  %v535 = vmax.f32 %v385, 0.0
  %v536 = vmax.f32 %v388, 0.0
  %v537 = vmax.f32 %v393, 0.0
  %v538 = vmax.f32 %v396, 0.0
  %v539 = vmax.f32 %v401, 0.0
  %v540 = vmax.f32 %v404, 0.0
  %v541 = vmax.f32 %v409, 0.0
  %v542 = vmax.f32 %v412, 0.0
  %v543 = vmax.f32 %v417, 0.0
  %v544 = vmax.f32 %v420, 0.0
  %v545 = vmax.f32 %v425, 0.0
  %v546 = vmax.f32 %v428, 0.0
  %v547 = vmax.f32 %v433, 0.0
  %v548 = vmax.f32 %v436, 0.0
  %v549 = vmax.f32 %v441, 0.0
  %v550 = vmax.f32 %v444, 0.0
  %v551 = vmax.f32 %v449, 0.0
  %v552 = vmax.f32 %v452, 0.0
  %v553 = vmax.f32 %v457, 0.0
  %v554 = vmax.f32 %v460, 0.0
  %v555 = vmax.f32 %v465, 0.0
  %v556 = vmax.f32 %v468, 0.0
  %v557 = vmax.f32 %v473, 0.0
  %v558 = vmax.f32 %v476, 0.0
  %v559 = vmax.f32 %v481, 0.0
  %v560 = vmax.f32 %v484, 0.0
  %v561 = vmax.f32 %v489, 0.0
  %v562 = vmax.f32 %v492, 0.0
  %v563 = vmax.f32 %v497, 0.0
  %v564 = vmax.f32 %v500, 0.0
  %v565 = vmax.f32 %v505, 0.0
  %v566 = vmax.f32 %v508, 0.0
  %v567 = vmax.f32 %v513, 0.0
  %v568 = vmax.f32 %v516, 0.0
  %v569 = vpack.c.bf16 %v520, %v519
  %v570 = vpack.c.bf16 %v522, %v521
  %v571 = vpack.c.bf16 %v524, %v523
  %v572 = vpack.c.bf16 %v526, %v525
  %v573 = vpack.c.bf16 %v528, %v527
  %v574 = vpack.c.bf16 %v530, %v529
  %v575 = vpack.c.bf16 %v532, %v531
  %v576 = vpack.c.bf16 %v534, %v533
  %v577 = vpack.c.bf16 %v536, %v535
  %v578 = vpack.c.bf16 %v538, %v537
  %v579 = vpack.c.bf16 %v540, %v539
  %v580 = vpack.c.bf16 %v542, %v541
  %v581 = vpack.c.bf16 %v544, %v543
  %v582 = vpack.c.bf16 %v546, %v545
  %v583 = vpack.c.bf16 %v548, %v547
  %v584 = vpack.c.bf16 %v550, %v549
  %v585 = vpack.c.bf16 %v552, %v551
  %v586 = vpack.c.bf16 %v554, %v553
  %v587 = vpack.c.bf16 %v556, %v555
  %v588 = vpack.c.bf16 %v558, %v557
  %v589 = vpack.c.bf16 %v560, %v559
  %v590 = vpack.c.bf16 %v562, %v561
  %v591 = vpack.c.bf16 %v564, %v563
  %v592 = vpack.c.bf16 %v566, %v565
  %v593 = vpack.c.bf16 %v568, %v567
  %v619 = vunpack.c.l.b16 %v569
  %v620 = vunpack.c.h.b16 %v569
  %v621 = vunpack.c.l.b16 %v570
  %v622 = vunpack.c.h.b16 %v570
  %v623 = vunpack.c.l.b16 %v571
  %v624 = vunpack.c.h.b16 %v571
  %v625 = vunpack.c.l.b16 %v572
  %v626 = vunpack.c.h.b16 %v572
  %v627 = vunpack.c.l.b16 %v573
  %v628 = vunpack.c.h.b16 %v573
  %v629 = vunpack.c.l.b16 %v574
  %v630 = vunpack.c.h.b16 %v574
  %v631 = vunpack.c.l.b16 %v575
  %v632 = vunpack.c.h.b16 %v575
  %v633 = vunpack.c.l.b16 %v576
  %v634 = vunpack.c.h.b16 %v576
  %v635 = vunpack.c.l.b16 %v577
  %v636 = vunpack.c.h.b16 %v577
  %v637 = vunpack.c.l.b16 %v578
  %v638 = vunpack.c.h.b16 %v578
  %v639 = vunpack.c.l.b16 %v579
  %v640 = vunpack.c.h.b16 %v579
  %v641 = vunpack.c.l.b16 %v580
  %v642 = vunpack.c.h.b16 %v580
  %v643 = vunpack.c.l.b16 %v581
  %v644 = vunpack.c.h.b16 %v581
  %v645 = vunpack.c.l.b16 %v582
  %v646 = vunpack.c.h.b16 %v582
  %v647 = vunpack.c.l.b16 %v583
  %v648 = vunpack.c.h.b16 %v583
  %v649 = vunpack.c.l.b16 %v584
  %v650 = vunpack.c.h.b16 %v584
  %v651 = vunpack.c.l.b16 %v585
  %v652 = vunpack.c.h.b16 %v585
  %v653 = vunpack.c.l.b16 %v586
  %v654 = vunpack.c.h.b16 %v586
  %v655 = vunpack.c.l.b16 %v587
  %v656 = vunpack.c.h.b16 %v587
  %v657 = vunpack.c.l.b16 %v588
  %v658 = vunpack.c.h.b16 %v588
  %v659 = vunpack.c.l.b16 %v589
  %v660 = vunpack.c.h.b16 %v589
  %v661 = vunpack.c.l.b16 %v590
  %v662 = vunpack.c.h.b16 %v590
  %v663 = vunpack.c.l.b16 %v591
  %v664 = vunpack.c.h.b16 %v591
  %v665 = vunpack.c.l.b16 %v592
  %v666 = vunpack.c.h.b16 %v592
  %v667 = vunpack.c.l.b16 %v593
  %v668 = vunpack.c.h.b16 %v593
  %v669 = vpack.c.b16 %v619, %v619
  %v670 = vpack.c.b16 %v620, %v620
  %v671 = vpack.c.b16 %v621, %v621
  %v672 = vpack.c.b16 %v622, %v622
  %v673 = vpack.c.b16 %v623, %v623
  %v674 = vpack.c.b16 %v624, %v624
  %v675 = vpack.c.b16 %v625, %v625
  %v676 = vpack.c.b16 %v626, %v626
  %v677 = vpack.c.b16 %v627, %v627
  %v678 = vpack.c.b16 %v628, %v628
  %v679 = vpack.c.b16 %v629, %v629
  %v680 = vpack.c.b16 %v630, %v630
  %v681 = vpack.c.b16 %v631, %v631
  %v682 = vpack.c.b16 %v632, %v632
  %v683 = vpack.c.b16 %v633, %v633
  %v684 = vpack.c.b16 %v634, %v634
  %v685 = vpack.c.b16 %v635, %v635
  %v686 = vpack.c.b16 %v636, %v636
  %v687 = vpack.c.b16 %v637, %v637
  %v688 = vpack.c.b16 %v638, %v638
  %v689 = vpack.c.b16 %v639, %v639
  %v690 = vpack.c.b16 %v640, %v640
  %v691 = vpack.c.b16 %v641, %v641
  %v692 = vpack.c.b16 %v642, %v642
  %v693 = vpack.c.b16 %v643, %v643
  %v694 = vpack.c.b16 %v644, %v644
  %v695 = vpack.c.b16 %v645, %v645
  %v696 = vpack.c.b16 %v646, %v646
  %v697 = vpack.c.b16 %v647, %v647
  %v698 = vpack.c.b16 %v648, %v648
  %v699 = vpack.c.b16 %v649, %v649
  %v700 = vpack.c.b16 %v650, %v650
  %v701 = vpack.c.b16 %v651, %v651
  %v702 = vpack.c.b16 %v652, %v652
  %v703 = vpack.c.b16 %v653, %v653
  %v704 = vpack.c.b16 %v654, %v654
  %v705 = vpack.c.b16 %v655, %v655
  %v706 = vpack.c.b16 %v656, %v656
  %v707 = vpack.c.b16 %v657, %v657
  %v708 = vpack.c.b16 %v658, %v658
  %v709 = vpack.c.b16 %v659, %v659
  %v710 = vpack.c.b16 %v660, %v660
  %v711 = vpack.c.b16 %v661, %v661
  %v712 = vpack.c.b16 %v662, %v662
  %v713 = vpack.c.b16 %v663, %v663
  %v714 = vpack.c.b16 %v664, %v664
  %v715 = vpack.c.b16 %v665, %v665
  %v716 = vpack.c.b16 %v666, %v666
  %v717 = vpack.c.b16 %v667, %v667
  %v718 = vpack.c.b16 %v668, %v668
  %769 = vst [vmem:[%s3] sm:$0xf] %v669
  %770 = vst [vmem:[%s3 + $0x4] sm:$0xf] %v670
  %771 = vst [vmem:[%s3 + $0x8] sm:$0xf] %v671
  %772 = vst [vmem:[%s3 + $0xc] sm:$0xf] %v672
  %773 = vst [vmem:[%s3 + $0x10] sm:$0xf] %v673
  %774 = vst [vmem:[%s3 + $0x14] sm:$0xf] %v674
  %775 = vst [vmem:[%s3 + $0x18] sm:$0xf] %v675
  %776 = vst [vmem:[%s3 + $0x1c] sm:$0xf] %v676
  %777 = vst [vmem:[%s3 + $0x20] sm:$0xf] %v677
  %778 = vst [vmem:[%s3 + $0x24] sm:$0xf] %v678
  %779 = vst [vmem:[%s3 + $0x28] sm:$0xf] %v679
  %780 = vst [vmem:[%s3 + $0x2c] sm:$0xf] %v680
  %781 = vst [vmem:[%s3 + $0x30] sm:$0xf] %v681
  %782 = vst [vmem:[%s3 + $0x34] sm:$0xf] %v682
  %783 = vst [vmem:[%s3 + $0x38] sm:$0xf] %v683
  %784 = vst [vmem:[%s3 + $0x3c] sm:$0xf] %v684
  %785 = vst [vmem:[%s3 + $0x40] sm:$0xf] %v685
  %786 = vst [vmem:[%s3 + $0x44] sm:$0xf] %v686
  %787 = vst [vmem:[%s3 + $0x48] sm:$0xf] %v687
  %788 = vst [vmem:[%s3 + $0x4c] sm:$0xf] %v688
  %789 = vst [vmem:[%s3 + $0x50] sm:$0xf] %v689
  %790 = vst [vmem:[%s3 + $0x54] sm:$0xf] %v690
  %791 = vst [vmem:[%s3 + $0x58] sm:$0xf] %v691
  %792 = vst [vmem:[%s3 + $0x5c] sm:$0xf] %v692
  %793 = vst [vmem:[%s3 + $0x60] sm:$0xf] %v693
  %794 = vst [vmem:[%s3 + $0x64] sm:$0xf] %v694
  %795 = vst [vmem:[%s3 + $0x68] sm:$0xf] %v695
  %796 = vst [vmem:[%s3 + $0x6c] sm:$0xf] %v696
  %797 = vst [vmem:[%s3 + $0x70] sm:$0xf] %v697
  %798 = vst [vmem:[%s3 + $0x74] sm:$0xf] %v698
  %799 = vst [vmem:[%s3 + $0x78] sm:$0xf] %v699
  %800 = vst [vmem:[%s3 + $0x7c] sm:$0xf] %v700
  %801 = vst [vmem:[%s3 + $0x80] sm:$0xf] %v701
  %802 = vst [vmem:[%s3 + $0x84] sm:$0xf] %v702
  %803 = vst [vmem:[%s3 + $0x88] sm:$0xf] %v703
  %804 = vst [vmem:[%s3 + $0x8c] sm:$0xf] %v704
  %805 = vst [vmem:[%s3 + $0x90] sm:$0xf] %v705
  %806 = vst [vmem:[%s3 + $0x94] sm:$0xf] %v706
  %807 = vst [vmem:[%s3 + $0x98] sm:$0xf] %v707
  %808 = vst [vmem:[%s3 + $0x9c] sm:$0xf] %v708
  %809 = vst [vmem:[%s3 + $0xa0] sm:$0xf] %v709
  %810 = vst [vmem:[%s3 + $0xa4] sm:$0xf] %v710
  %811 = vst [vmem:[%s3 + $0xa8] sm:$0xf] %v711
  %812 = vst [vmem:[%s3 + $0xac] sm:$0xf] %v712
  %813 = vst [vmem:[%s3 + $0xb0] sm:$0xf] %v713
  %814 = vst [vmem:[%s3 + $0xb4] sm:$0xf] %v714
  %815 = vst [vmem:[%s3 + $0xb8] sm:$0xf] %v715
  %816 = vst [vmem:[%s3 + $0xbc] sm:$0xf] %v716
  %817 = vst [vmem:[%s3 + $0xc0] sm:$0xf] %v717
  %818 = vst [vmem:[%s3 + $0xc4] sm:$0xf] %v718
  // Predicated region
  $region14: #{_forward_impl.5} parent=0 // pred_check
    _
  $region15: #{_forward_impl.5} parent=0 // pred_check_branch
    %820 = sbr.rel (0) target = $region17
  $region16: #{_forward_impl.5} parent=0 // pred_region
    _
  $region17: #{_forward_impl.5} parent=0 // pred_fallthru
    _
  // Predicated region
  $region18: #{_forward_impl.5} parent=0 // pred_check
    _
  $region19: #{_forward_impl.5} parent=0 // pred_check_branch
    %822 = sbr.rel (0) target = $region21
  $region20: #{_forward_impl.5} parent=0 // pred_region
    _
  $region21: #{_forward_impl.5} parent=0 // pred_fallthru
    _

// kernel: _forward_impl.6
$region0: #{_forward_impl.6}
  #allocation0 [shape = 'u32[]', space=smem, size = 0x4, offset = 0x4, fixed_abs, tag = 'smem constant byte address 0x4 - core index']
  #allocation1 [shape = 'u32[144,128]{1,0:T(1,128)}', space=vmem, size = 0x12000, scoped, tag = 'internal scratch']
  %s0 = inlined_call_operand.vmem [shape: bf16[80,256], index: 0, kind: input, shape index: {}]
  %s1 = inlined_call_operand.vmem [shape: bf16[256,128], index: 1, kind: input, shape index: {}]
  %s2 = inlined_call_operand.vmem [shape: f32[1,128], index: 2, kind: input, shape index: {}]
  %s3 = inlined_call_operand.vmem [shape: bf16[80,128], index: 3, kind: output, shape index: {}]
  %s4 = sld [smem:[#allocation0]]
  $region22: #{_forward_impl.6} parent=0
    _
  %s6 = ssub.s32 1, %s4
  %s7 = scalar_select 0, %s6, %s4
  // Predicated region
  $region2: #{_forward_impl.6} parent=0 // pred_check
    _
  $region3: #{_forward_impl.6} parent=0 // pred_check_branch
    %9 = sbr.rel (0) target = $region5
  $region4: #{_forward_impl.6} parent=0 // pred_region
    _
  $region5: #{_forward_impl.6} parent=0 // pred_fallthru
    _
  // Predicated region
  $region6: #{_forward_impl.6} parent=0 // pred_check
    _
  $region7: #{_forward_impl.6} parent=0 // pred_check_branch
    %11 = sbr.rel (0) target = $region9
  $region8: #{_forward_impl.6} parent=0 // pred_region
    _
  $region9: #{_forward_impl.6} parent=0 // pred_fallthru
    _
  // Predicated region
  $region10: #{_forward_impl.6} parent=0 // pred_check
    _
  $region11: #{_forward_impl.6} parent=0 // pred_check_branch
    %13 = sbr.rel (0) target = $region13
  $region12: #{_forward_impl.6} parent=0 // pred_region
    _
  $region13: #{_forward_impl.6} parent=0 // pred_fallthru
    _
  %v15 = vld [vmem:[%s0] sm:$0xff]
  %v16 = vld [vmem:[%s0 + $0x8] sm:$0xff]
  %v17 = vld [vmem:[%s0 + $0x10] sm:$0xff]
  %v18 = vld [vmem:[%s0 + $0x18] sm:$0xff]
  %v19 = vld [vmem:[%s0 + $0x20] sm:$0xff]
  %v20 = vld [vmem:[%s0 + $0x28] sm:$0xff]
  %v21 = vld [vmem:[%s0 + $0x30] sm:$0xff]
  %v22 = vld [vmem:[%s0 + $0x38] sm:$0xff]
  %v23 = vld [vmem:[%s0 + $0x40] sm:$0xff]
  %v24 = vld [vmem:[%s0 + $0x48] sm:$0xff]
  %v25 = vld [vmem:[%s1] sm:$0xf]
  %v26 = vld [vmem:[%s1 + $0x4] sm:$0xf]
  %v27 = vld [vmem:[%s1 + $0x8] sm:$0xf]
  %v28 = vld [vmem:[%s1 + $0xc] sm:$0xf]
  %v29 = vld [vmem:[%s1 + $0x10] sm:$0xf]
  %v30 = vld [vmem:[%s1 + $0x14] sm:$0xf]
  %v31 = vld [vmem:[%s1 + $0x18] sm:$0xf]
  %v32 = vld [vmem:[%s1 + $0x1c] sm:$0xf]
  %v33 = vld [vmem:[%s1 + $0x20] sm:$0xf]
  %v34 = vld [vmem:[%s1 + $0x24] sm:$0xf]
  %v35 = vld [vmem:[%s1 + $0x28] sm:$0xf]
  %v36 = vld [vmem:[%s1 + $0x2c] sm:$0xf]
  %v37 = vld [vmem:[%s1 + $0x30] sm:$0xf]
  %v38 = vld [vmem:[%s1 + $0x34] sm:$0xf]
  %v39 = vld [vmem:[%s1 + $0x38] sm:$0xf]
  %v40 = vld [vmem:[%s1 + $0x3c] sm:$0xf]
  %v41 = vld [vmem:[%s1 + $0x40] sm:$0xf]
  %v42 = vld [vmem:[%s1 + $0x44] sm:$0xf]
  %v43 = vld [vmem:[%s1 + $0x48] sm:$0xf]
  %v44 = vld [vmem:[%s1 + $0x4c] sm:$0xf]
  %v45 = vld [vmem:[%s1 + $0x50] sm:$0xf]
  %v46 = vld [vmem:[%s1 + $0x54] sm:$0xf]
  %v47 = vld [vmem:[%s1 + $0x58] sm:$0xf]
  %v48 = vld [vmem:[%s1 + $0x5c] sm:$0xf]
  %v49 = vld [vmem:[%s1 + $0x60] sm:$0xf]
  %v50 = vld [vmem:[%s1 + $0x64] sm:$0xf]
  %v51 = vld [vmem:[%s1 + $0x68] sm:$0xf]
  %v52 = vld [vmem:[%s1 + $0x6c] sm:$0xf]
  %v53 = vld [vmem:[%s1 + $0x70] sm:$0xf]
  %v54 = vld [vmem:[%s1 + $0x74] sm:$0xf]
  %v55 = vld [vmem:[%s1 + $0x78] sm:$0xf]
  %v56 = vld [vmem:[%s1 + $0x7c] sm:$0xf]
  %v57 = vld [vmem:[%s2] sm:$0x1]
  %v59 = vlaneseq
  %v60 = vshrl.u32 %v59, 7
  %v61 = vsub.s32 0, %v60
  %v62 = vrot.slane %v57, %v61
  %v74 = vunpack.c.l.b16 %v15
  %v75 = vunpack.c.h.b16 %v15
  %v76 = vunpack.c.l.b16 %v16
  %v77 = vunpack.c.h.b16 %v16
  %v78 = vunpack.c.l.b16 %v17
  %v79 = vunpack.c.h.b16 %v17
  %v80 = vunpack.c.l.b16 %v18
  %v81 = vunpack.c.h.b16 %v18
  %v82 = vunpack.c.l.b16 %v19
  %v83 = vunpack.c.h.b16 %v19
  %v84 = vunpack.c.l.b16 %v20
  %v85 = vunpack.c.h.b16 %v20
  %v86 = vunpack.c.l.b16 %v21
  %v87 = vunpack.c.h.b16 %v21
  %v88 = vunpack.c.l.b16 %v22
  %v89 = vunpack.c.h.b16 %v22
  %v90 = vunpack.c.l.b16 %v23
  %v91 = vunpack.c.h.b16 %v23
  %v92 = vunpack.c.l.b16 %v24
  %v93 = vunpack.c.h.b16 %v24
  %v94 = vpack.c.b16 %v76, %v74
  %v95 = vpack.c.b16 %v77, %v75
  %v96 = vpack.c.b16 %v80, %v78
  %v97 = vpack.c.b16 %v81, %v79
  %v98 = vpack.c.b16 %v84, %v82
  %v99 = vpack.c.b16 %v85, %v83
  %v100 = vpack.c.b16 %v88, %v86
  %v101 = vpack.c.b16 %v89, %v87
  %v102 = vpack.c.b16 %v92, %v90
  %v103 = vpack.c.b16 %v93, %v91
  %v146 = vunpack.c.l.b16 %v25
  %v147 = vunpack.c.l.b16 %v26
  %v148 = vunpack.c.l.b16 %v27
  %v149 = vunpack.c.l.b16 %v28
  %v150 = vunpack.c.l.b16 %v29
  %v151 = vunpack.c.l.b16 %v30
  %v152 = vunpack.c.l.b16 %v31
  %v153 = vunpack.c.l.b16 %v32
  %v154 = vunpack.c.l.b16 %v33
  %v155 = vunpack.c.l.b16 %v34
  %v156 = vunpack.c.l.b16 %v35
  %v157 = vunpack.c.l.b16 %v36
  %v158 = vunpack.c.l.b16 %v37
  %v159 = vunpack.c.l.b16 %v38
  %v160 = vunpack.c.l.b16 %v39
  %v161 = vunpack.c.l.b16 %v40
  %v162 = vunpack.c.l.b16 %v41
  %v163 = vunpack.c.l.b16 %v42
  %v164 = vunpack.c.l.b16 %v43
  %v165 = vunpack.c.l.b16 %v44
  %v166 = vunpack.c.l.b16 %v45
  %v167 = vunpack.c.l.b16 %v46
  %v168 = vunpack.c.l.b16 %v47
  %v169 = vunpack.c.l.b16 %v48
  %v170 = vunpack.c.l.b16 %v49
  %v171 = vunpack.c.l.b16 %v50
  %v172 = vunpack.c.l.b16 %v51
  %v173 = vunpack.c.l.b16 %v52
  %v174 = vunpack.c.l.b16 %v53
  %v175 = vunpack.c.l.b16 %v54
  %v176 = vunpack.c.l.b16 %v55
  %v177 = vunpack.c.l.b16 %v56
  %v178 = vpack.c.b16 %v147, %v146
  %v179 = vpack.c.b16 %v149, %v148
  %v180 = vpack.c.b16 %v151, %v150
  %v181 = vpack.c.b16 %v153, %v152
  %v182 = vpack.c.b16 %v155, %v154
  %v183 = vpack.c.b16 %v157, %v156
  %v184 = vpack.c.b16 %v159, %v158
  %v185 = vpack.c.b16 %v161, %v160
  %v186 = vpack.c.b16 %v163, %v162
  %v187 = vpack.c.b16 %v165, %v164
  %v188 = vpack.c.b16 %v167, %v166
  %v189 = vpack.c.b16 %v169, %v168
  %v190 = vpack.c.b16 %v171, %v170
  %v191 = vpack.c.b16 %v173, %v172
  %v192 = vpack.c.b16 %v175, %v174
  %v193 = vpack.c.b16 %v177, %v176
  %210 = vmatprep.subr.bf16.mxu0 0
  %211 = vmatpush1.bf16.msra.mxu0 %v178
  %212 = vmatprep.subr.bf16.mxu0 0
  %213 = vmatpush1.bf16.msra.mxu0 %v179
  %214 = vmatprep.subr.bf16.mxu0 0
  %215 = vmatpush1.bf16.msra.mxu0 %v180
  %216 = vmatprep.subr.bf16.mxu0 0
  %217 = vmatpush1.bf16.msra.mxu0 %v181
  %218 = vmatprep.subr.bf16.mxu0 0
  %219 = vmatpush1.bf16.msra.mxu0 %v182
  %220 = vmatprep.subr.bf16.mxu0 0
  %221 = vmatpush1.bf16.msra.mxu0 %v183
  %222 = vmatprep.subr.bf16.mxu0 0
  %223 = vmatpush1.bf16.msra.mxu0 %v184
  %224 = vmatprep.subr.bf16.mxu0 0
  %225 = vmatpush1.bf16.msra.mxu0 %v185
  %226 = vmatprep.subr.bf16.mxu0 0
  %227 = vmatpush1.bf16.msra.mxu0 %v186
  %228 = vmatprep.subr.bf16.mxu0 0
  %229 = vmatpush1.bf16.msra.mxu0 %v187
  %230 = vmatprep.subr.bf16.mxu0 0
  %231 = vmatpush1.bf16.msra.mxu0 %v188
  %232 = vmatprep.subr.bf16.mxu0 0
  %233 = vmatpush1.bf16.msra.mxu0 %v189
  %234 = vmatprep.subr.bf16.mxu0 0
  %235 = vmatpush1.bf16.msra.mxu0 %v190
  %236 = vmatprep.subr.bf16.mxu0 0
  %237 = vmatpush1.bf16.msra.mxu0 %v191
  %238 = vmatprep.subr.bf16.mxu0 0
  %239 = vmatpush1.bf16.msra.mxu0 %v192
  %240 = vmatprep.subr.bf16.mxu0 0
  %241 = vmatpush1.bf16.msra.mxu0 %v193
  %242 = vmatprep.mubr.bf16.mxu0 %v95
  %243 = vmatmul.mubr.bf16.gmra.mrb[0].mxu0 %v94
  %v244 = vpop.f32.mrb[0].mxu0
  %v245 = vadd.f32 %v62, %v244
  %v246 = vpop.f32.mrb[0].mxu0
  %v247 = vpop.f32.mrb[0].mxu0
  %v248 = vadd.f32 %v62, %v247
  %v249 = vpop.f32.mrb[0].mxu0
  %250 = vmatprep.mubr.bf16.mxu0 %v97
  %251 = vmatmul.mubr.bf16.gmra.mrb[0].mxu0 %v96
  %v252 = vpop.f32.mrb[0].mxu0
  %v253 = vadd.f32 %v62, %v252
  %v254 = vpop.f32.mrb[0].mxu0
  %v255 = vpop.f32.mrb[0].mxu0
  %v256 = vadd.f32 %v62, %v255
  %v257 = vpop.f32.mrb[0].mxu0
  %258 = vmatprep.mubr.bf16.mxu0 %v99
  %259 = vmatmul.mubr.bf16.gmra.mrb[0].mxu0 %v98
  %v260 = vpop.f32.mrb[0].mxu0
  %v261 = vadd.f32 %v62, %v260
  %v262 = vpop.f32.mrb[0].mxu0
  %v263 = vpop.f32.mrb[0].mxu0
  %v264 = vadd.f32 %v62, %v263
  %v265 = vpop.f32.mrb[0].mxu0
  %266 = vmatprep.mubr.bf16.mxu0 %v101
  %267 = vmatmul.mubr.bf16.gmra.mrb[0].mxu0 %v100
  %v268 = vpop.f32.mrb[0].mxu0
  %v269 = vadd.f32 %v62, %v268
  %v270 = vpop.f32.mrb[0].mxu0
  %v271 = vpop.f32.mrb[0].mxu0
  %v272 = vadd.f32 %v62, %v271
  %v273 = vpop.f32.mrb[0].mxu0
  %274 = vmatprep.mubr.bf16.mxu0 %v103
  %275 = vmatmul.mubr.bf16.gmra.mrb[0].mxu0 %v102
  %v276 = vpop.f32.mrb[0].mxu0
  %v277 = vadd.f32 %v62, %v276
  %v278 = vpop.f32.mrb[0].mxu0
  %v279 = vpop.f32.mrb[0].mxu0
  %v280 = vadd.f32 %v62, %v279
  %v281 = vpop.f32.mrb[0].mxu0
  %282 = vdwg.mxu0
  %v283 = vmax.f32 %v245, 0.0
  %v284 = vmax.f32 %v248, 0.0
  %v285 = vmax.f32 %v253, 0.0
  %v286 = vmax.f32 %v256, 0.0
  %v287 = vmax.f32 %v261, 0.0
  %v288 = vmax.f32 %v264, 0.0
  %v289 = vmax.f32 %v269, 0.0
  %v290 = vmax.f32 %v272, 0.0
  %v291 = vmax.f32 %v277, 0.0
  %v292 = vmax.f32 %v280, 0.0
  %v293 = vpack.c.bf16 %v284, %v283
  %v294 = vpack.c.bf16 %v286, %v285
  %v295 = vpack.c.bf16 %v288, %v287
  %v296 = vpack.c.bf16 %v290, %v289
  %v297 = vpack.c.bf16 %v292, %v291
  %v303 = vunpack.c.l.b16 %v293
  %v304 = vunpack.c.h.b16 %v293
  %v305 = vunpack.c.l.b16 %v294
  %v306 = vunpack.c.h.b16 %v294
  %v307 = vunpack.c.l.b16 %v295
  %v308 = vunpack.c.h.b16 %v295
  %v309 = vunpack.c.l.b16 %v296
  %v310 = vunpack.c.h.b16 %v296
  %v311 = vunpack.c.l.b16 %v297
  %v312 = vunpack.c.h.b16 %v297
  %v313 = vpack.c.b16 %v303, %v303
  %v314 = vpack.c.b16 %v304, %v304
  %v315 = vpack.c.b16 %v305, %v305
  %v316 = vpack.c.b16 %v306, %v306
  %v317 = vpack.c.b16 %v307, %v307
  %v318 = vpack.c.b16 %v308, %v308
  %v319 = vpack.c.b16 %v309, %v309
  %v320 = vpack.c.b16 %v310, %v310
  %v321 = vpack.c.b16 %v311, %v311
  %v322 = vpack.c.b16 %v312, %v312
  %333 = vst [vmem:[%s3] sm:$0xf] %v313
  %334 = vst [vmem:[%s3 + $0x4] sm:$0xf] %v314
  %335 = vst [vmem:[%s3 + $0x8] sm:$0xf] %v315
  %336 = vst [vmem:[%s3 + $0xc] sm:$0xf] %v316
  %337 = vst [vmem:[%s3 + $0x10] sm:$0xf] %v317
  %338 = vst [vmem:[%s3 + $0x14] sm:$0xf] %v318
  %339 = vst [vmem:[%s3 + $0x18] sm:$0xf] %v319
  %340 = vst [vmem:[%s3 + $0x1c] sm:$0xf] %v320
  %341 = vst [vmem:[%s3 + $0x20] sm:$0xf] %v321
  %342 = vst [vmem:[%s3 + $0x24] sm:$0xf] %v322
  // Predicated region
  $region14: #{_forward_impl.6} parent=0 // pred_check
    _
  $region15: #{_forward_impl.6} parent=0 // pred_check_branch
    %344 = sbr.rel (0) target = $region17
  $region16: #{_forward_impl.6} parent=0 // pred_region
    _
  $region17: #{_forward_impl.6} parent=0 // pred_fallthru
    _
  // Predicated region
  $region18: #{_forward_impl.6} parent=0 // pred_check
    _
  $region19: #{_forward_impl.6} parent=0 // pred_check_branch
    %346 = sbr.rel (0) target = $region21
  $region20: #{_forward_impl.6} parent=0 // pred_region
    _
  $region21: #{_forward_impl.6} parent=0 // pred_fallthru
    _

// kernel: _forward_impl.7
$region0: #{_forward_impl.7}
  #allocation0 [shape = 'u32[]', space=smem, size = 0x4, offset = 0x4, fixed_abs, tag = 'smem constant byte address 0x4 - core index']
  #allocation1 [shape = 'u32[144,128]{1,0:T(1,128)}', space=vmem, size = 0x12000, scoped, tag = 'internal scratch']
  %s0 = inlined_call_operand.vmem [shape: bf16[16,512], index: 0, kind: input, shape index: {}]
  %s1 = inlined_call_operand.vmem [shape: bf16[512,128], index: 1, kind: input, shape index: {}]
  %s2 = inlined_call_operand.vmem [shape: f32[1,128], index: 2, kind: input, shape index: {}]
  %s3 = inlined_call_operand.vmem [shape: f32[16,128], index: 3, kind: output, shape index: {}]
  %s4 = sld [smem:[#allocation0]]
  $region22: #{_forward_impl.7} parent=0
    _
  %s6 = ssub.s32 1, %s4
  %s7 = scalar_select 0, %s6, %s4
  // Predicated region
  $region2: #{_forward_impl.7} parent=0 // pred_check
    _
  $region3: #{_forward_impl.7} parent=0 // pred_check_branch
    %9 = sbr.rel (0) target = $region5
  $region4: #{_forward_impl.7} parent=0 // pred_region
    _
  $region5: #{_forward_impl.7} parent=0 // pred_fallthru
    _
  // Predicated region
  $region6: #{_forward_impl.7} parent=0 // pred_check
    _
  $region7: #{_forward_impl.7} parent=0 // pred_check_branch
    %11 = sbr.rel (0) target = $region9
  $region8: #{_forward_impl.7} parent=0 // pred_region
    _
  $region9: #{_forward_impl.7} parent=0 // pred_fallthru
    _
  // Predicated region
  $region10: #{_forward_impl.7} parent=0 // pred_check
    _
  $region11: #{_forward_impl.7} parent=0 // pred_check_branch
    %13 = sbr.rel (0) target = $region13
  $region12: #{_forward_impl.7} parent=0 // pred_region
    _
  $region13: #{_forward_impl.7} parent=0 // pred_fallthru
    _
  %v15 = vld [vmem:[%s0] sm:$0xff]
  %v16 = vld [vmem:[%s0 + $0x8] sm:$0xff]
  %v17 = vld [vmem:[%s0 + $0x10] sm:$0xff]
  %v18 = vld [vmem:[%s0 + $0x18] sm:$0xff]
  %v19 = vld [vmem:[%s1] sm:$0xf]
  %v20 = vld [vmem:[%s1 + $0x4] sm:$0xf]
  %v21 = vld [vmem:[%s1 + $0x8] sm:$0xf]
  %v22 = vld [vmem:[%s1 + $0xc] sm:$0xf]
  %v23 = vld [vmem:[%s1 + $0x10] sm:$0xf]
  %v24 = vld [vmem:[%s1 + $0x14] sm:$0xf]
  %v25 = vld [vmem:[%s1 + $0x18] sm:$0xf]
  %v26 = vld [vmem:[%s1 + $0x1c] sm:$0xf]
  %v27 = vld [vmem:[%s1 + $0x20] sm:$0xf]
  %v28 = vld [vmem:[%s1 + $0x24] sm:$0xf]
  %v29 = vld [vmem:[%s1 + $0x28] sm:$0xf]
  %v30 = vld [vmem:[%s1 + $0x2c] sm:$0xf]
  %v31 = vld [vmem:[%s1 + $0x30] sm:$0xf]
  %v32 = vld [vmem:[%s1 + $0x34] sm:$0xf]
  %v33 = vld [vmem:[%s1 + $0x38] sm:$0xf]
  %v34 = vld [vmem:[%s1 + $0x3c] sm:$0xf]
  %v35 = vld [vmem:[%s1 + $0x40] sm:$0xf]
  %v36 = vld [vmem:[%s1 + $0x44] sm:$0xf]
  %v37 = vld [vmem:[%s1 + $0x48] sm:$0xf]
  %v38 = vld [vmem:[%s1 + $0x4c] sm:$0xf]
  %v39 = vld [vmem:[%s1 + $0x50] sm:$0xf]
  %v40 = vld [vmem:[%s1 + $0x54] sm:$0xf]
  %v41 = vld [vmem:[%s1 + $0x58] sm:$0xf]
  %v42 = vld [vmem:[%s1 + $0x5c] sm:$0xf]
  %v43 = vld [vmem:[%s1 + $0x60] sm:$0xf]
  %v44 = vld [vmem:[%s1 + $0x64] sm:$0xf]
  %v45 = vld [vmem:[%s1 + $0x68] sm:$0xf]
  %v46 = vld [vmem:[%s1 + $0x6c] sm:$0xf]
  %v47 = vld [vmem:[%s1 + $0x70] sm:$0xf]
  %v48 = vld [vmem:[%s1 + $0x74] sm:$0xf]
  %v49 = vld [vmem:[%s1 + $0x78] sm:$0xf]
  %v50 = vld [vmem:[%s1 + $0x7c] sm:$0xf]
  %v51 = vld [vmem:[%s1 + $0x80] sm:$0xf]
  %v52 = vld [vmem:[%s1 + $0x84] sm:$0xf]
  %v53 = vld [vmem:[%s1 + $0x88] sm:$0xf]
  %v54 = vld [vmem:[%s1 + $0x8c] sm:$0xf]
  %v55 = vld [vmem:[%s1 + $0x90] sm:$0xf]
  %v56 = vld [vmem:[%s1 + $0x94] sm:$0xf]
  %v57 = vld [vmem:[%s1 + $0x98] sm:$0xf]
  %v58 = vld [vmem:[%s1 + $0x9c] sm:$0xf]
  %v59 = vld [vmem:[%s1 + $0xa0] sm:$0xf]
  %v60 = vld [vmem:[%s1 + $0xa4] sm:$0xf]
  %v61 = vld [vmem:[%s1 + $0xa8] sm:$0xf]
  %v62 = vld [vmem:[%s1 + $0xac] sm:$0xf]
  %v63 = vld [vmem:[%s1 + $0xb0] sm:$0xf]
  %v64 = vld [vmem:[%s1 + $0xb4] sm:$0xf]
  %v65 = vld [vmem:[%s1 + $0xb8] sm:$0xf]
  %v66 = vld [vmem:[%s1 + $0xbc] sm:$0xf]
  %v67 = vld [vmem:[%s1 + $0xc0] sm:$0xf]
  %v68 = vld [vmem:[%s1 + $0xc4] sm:$0xf]
  %v69 = vld [vmem:[%s1 + $0xc8] sm:$0xf]
  %v70 = vld [vmem:[%s1 + $0xcc] sm:$0xf]
  %v71 = vld [vmem:[%s1 + $0xd0] sm:$0xf]
  %v72 = vld [vmem:[%s1 + $0xd4] sm:$0xf]
  %v73 = vld [vmem:[%s1 + $0xd8] sm:$0xf]
  %v74 = vld [vmem:[%s1 + $0xdc] sm:$0xf]
  %v75 = vld [vmem:[%s1 + $0xe0] sm:$0xf]
  %v76 = vld [vmem:[%s1 + $0xe4] sm:$0xf]
  %v77 = vld [vmem:[%s1 + $0xe8] sm:$0xf]
  %v78 = vld [vmem:[%s1 + $0xec] sm:$0xf]
  %v79 = vld [vmem:[%s1 + $0xf0] sm:$0xf]
  %v80 = vld [vmem:[%s1 + $0xf4] sm:$0xf]
  %v81 = vld [vmem:[%s1 + $0xf8] sm:$0xf]
  %v82 = vld [vmem:[%s1 + $0xfc] sm:$0xf]
  %v83 = vld [vmem:[%s2] sm:$0x1]
  %v85 = vlaneseq
  %v86 = vshrl.u32 %v85, 7
  %v87 = vsub.s32 0, %v86
  %v88 = vrot.slane %v83, %v87
  %v94 = vunpack.c.l.b16 %v15
  %v95 = vunpack.c.h.b16 %v15
  %v96 = vunpack.c.l.b16 %v16
  %v97 = vunpack.c.h.b16 %v16
  %v98 = vunpack.c.l.b16 %v17
  %v99 = vunpack.c.h.b16 %v17
  %v100 = vunpack.c.l.b16 %v18
  %v101 = vunpack.c.h.b16 %v18
  %v102 = vpack.c.b16 %v98, %v94
  %v103 = vpack.c.b16 %v99, %v95
  %v104 = vpack.c.b16 %v100, %v96
  %v105 = vpack.c.b16 %v101, %v97
  %v174 = vunpack.c.l.b16 %v19
  %v175 = vunpack.c.l.b16 %v20
  %v176 = vunpack.c.l.b16 %v21
  %v177 = vunpack.c.l.b16 %v22
  %v178 = vunpack.c.l.b16 %v23
  %v179 = vunpack.c.l.b16 %v24
  %v180 = vunpack.c.l.b16 %v25
  %v181 = vunpack.c.l.b16 %v26
  %v182 = vunpack.c.l.b16 %v27
  %v183 = vunpack.c.l.b16 %v28
  %v184 = vunpack.c.l.b16 %v29
  %v185 = vunpack.c.l.b16 %v30
  %v186 = vunpack.c.l.b16 %v31
  %v187 = vunpack.c.l.b16 %v32
  %v188 = vunpack.c.l.b16 %v33
  %v189 = vunpack.c.l.b16 %v34
  %v190 = vunpack.c.l.b16 %v35
  %v191 = vunpack.c.l.b16 %v36
  %v192 = vunpack.c.l.b16 %v37
  %v193 = vunpack.c.l.b16 %v38
  %v194 = vunpack.c.l.b16 %v39
  %v195 = vunpack.c.l.b16 %v40
  %v196 = vunpack.c.l.b16 %v41
  %v197 = vunpack.c.l.b16 %v42
  %v198 = vunpack.c.l.b16 %v43
  %v199 = vunpack.c.l.b16 %v44
  %v200 = vunpack.c.l.b16 %v45
  %v201 = vunpack.c.l.b16 %v46
  %v202 = vunpack.c.l.b16 %v47
  %v203 = vunpack.c.l.b16 %v48
  %v204 = vunpack.c.l.b16 %v49
  %v205 = vunpack.c.l.b16 %v50
  %v206 = vunpack.c.l.b16 %v51
  %v207 = vunpack.c.l.b16 %v52
  %v208 = vunpack.c.l.b16 %v53
  %v209 = vunpack.c.l.b16 %v54
  %v210 = vunpack.c.l.b16 %v55
  %v211 = vunpack.c.l.b16 %v56
  %v212 = vunpack.c.l.b16 %v57
  %v213 = vunpack.c.l.b16 %v58
  %v214 = vunpack.c.l.b16 %v59
  %v215 = vunpack.c.l.b16 %v60
  %v216 = vunpack.c.l.b16 %v61
  %v217 = vunpack.c.l.b16 %v62
  %v218 = vunpack.c.l.b16 %v63
  %v219 = vunpack.c.l.b16 %v64
  %v220 = vunpack.c.l.b16 %v65
  %v221 = vunpack.c.l.b16 %v66
  %v222 = vunpack.c.l.b16 %v67
  %v223 = vunpack.c.l.b16 %v68
  %v224 = vunpack.c.l.b16 %v69
  %v225 = vunpack.c.l.b16 %v70
  %v226 = vunpack.c.l.b16 %v71
  %v227 = vunpack.c.l.b16 %v72
  %v228 = vunpack.c.l.b16 %v73
  %v229 = vunpack.c.l.b16 %v74
  %v230 = vunpack.c.l.b16 %v75
  %v231 = vunpack.c.l.b16 %v76
  %v232 = vunpack.c.l.b16 %v77
  %v233 = vunpack.c.l.b16 %v78
  %v234 = vunpack.c.l.b16 %v79
  %v235 = vunpack.c.l.b16 %v80
  %v236 = vunpack.c.l.b16 %v81
  %v237 = vunpack.c.l.b16 %v82
  %v238 = vpack.c.b16 %v175, %v174
  %v239 = vpack.c.b16 %v177, %v176
  %v240 = vpack.c.b16 %v179, %v178
  %v241 = vpack.c.b16 %v181, %v180
  %v242 = vpack.c.b16 %v183, %v182
  %v243 = vpack.c.b16 %v185, %v184
  %v244 = vpack.c.b16 %v187, %v186
  %v245 = vpack.c.b16 %v189, %v188
  %v246 = vpack.c.b16 %v191, %v190
  %v247 = vpack.c.b16 %v193, %v192
  %v248 = vpack.c.b16 %v195, %v194
  %v249 = vpack.c.b16 %v197, %v196
  %v250 = vpack.c.b16 %v199, %v198
  %v251 = vpack.c.b16 %v201, %v200
  %v252 = vpack.c.b16 %v203, %v202
  %v253 = vpack.c.b16 %v205, %v204
  %v254 = vpack.c.b16 %v207, %v206
  %v255 = vpack.c.b16 %v209, %v208
  %v256 = vpack.c.b16 %v211, %v210
  %v257 = vpack.c.b16 %v213, %v212
  %v258 = vpack.c.b16 %v215, %v214
  %v259 = vpack.c.b16 %v217, %v216
  %v260 = vpack.c.b16 %v219, %v218
  %v261 = vpack.c.b16 %v221, %v220
  %v262 = vpack.c.b16 %v223, %v222
  %v263 = vpack.c.b16 %v225, %v224
  %v264 = vpack.c.b16 %v227, %v226
  %v265 = vpack.c.b16 %v229, %v228
  %v266 = vpack.c.b16 %v231, %v230
  %v267 = vpack.c.b16 %v233, %v232
  %v268 = vpack.c.b16 %v235, %v234
  %v269 = vpack.c.b16 %v237, %v236
  %302 = vmatprep.subr.bf16.mxu0 0
  %303 = vmatpush1.bf16.msra.mxu0 %v238
  %304 = vmatprep.subr.bf16.mxu0 0
  %305 = vmatpush1.bf16.msra.mxu0 %v239
  %306 = vmatprep.subr.bf16.mxu0 0
  %307 = vmatpush1.bf16.msra.mxu0 %v240
  %308 = vmatprep.subr.bf16.mxu0 0
  %309 = vmatpush1.bf16.msra.mxu0 %v241
  %310 = vmatprep.subr.bf16.mxu0 0
  %311 = vmatpush1.bf16.msra.mxu0 %v242
  %312 = vmatprep.subr.bf16.mxu0 0
  %313 = vmatpush1.bf16.msra.mxu0 %v243
  %314 = vmatprep.subr.bf16.mxu0 0
  %315 = vmatpush1.bf16.msra.mxu0 %v244
  %316 = vmatprep.subr.bf16.mxu0 0
  %317 = vmatpush1.bf16.msra.mxu0 %v245
  %318 = vmatprep.subr.bf16.mxu0 0
  %319 = vmatpush1.bf16.msra.mxu0 %v246
  %320 = vmatprep.subr.bf16.mxu0 0
  %321 = vmatpush1.bf16.msra.mxu0 %v247
  %322 = vmatprep.subr.bf16.mxu0 0
  %323 = vmatpush1.bf16.msra.mxu0 %v248
  %324 = vmatprep.subr.bf16.mxu0 0
  %325 = vmatpush1.bf16.msra.mxu0 %v249
  %326 = vmatprep.subr.bf16.mxu0 0
  %327 = vmatpush1.bf16.msra.mxu0 %v250
  %328 = vmatprep.subr.bf16.mxu0 0
  %329 = vmatpush1.bf16.msra.mxu0 %v251
  %330 = vmatprep.subr.bf16.mxu0 0
  %331 = vmatpush1.bf16.msra.mxu0 %v252
  %332 = vmatprep.subr.bf16.mxu0 0
  %333 = vmatpush1.bf16.msra.mxu0 %v253
  %334 = vmatprep.mubr.bf16.mxu0 %v103
  %335 = vmatmul.mubr.bf16.gmra.mrb[0].mxu0 %v102
  %v336 = vpop.f32.mrb[0].mxu0
  %v337 = vadd.f32 %v88, %v336
  %v338 = vpop.f32.mrb[0].mxu0
  %v339 = vpop.f32.mrb[0].mxu0
  %v340 = vadd.f32 %v88, %v339
  %v341 = vpop.f32.mrb[0].mxu0
  %342 = vdwg.mxu0
  %343 = vmatprep.subr.bf16.mxu0 0
  %344 = vmatpush1.bf16.msra.mxu0 %v254
  %345 = vmatprep.subr.bf16.mxu0 0
  %346 = vmatpush1.bf16.msra.mxu0 %v255
  %347 = vmatprep.subr.bf16.mxu0 0
  %348 = vmatpush1.bf16.msra.mxu0 %v256
  %349 = vmatprep.subr.bf16.mxu0 0
  %350 = vmatpush1.bf16.msra.mxu0 %v257
  %351 = vmatprep.subr.bf16.mxu0 0
  %352 = vmatpush1.bf16.msra.mxu0 %v258
  %353 = vmatprep.subr.bf16.mxu0 0
  %354 = vmatpush1.bf16.msra.mxu0 %v259
  %355 = vmatprep.subr.bf16.mxu0 0
  %356 = vmatpush1.bf16.msra.mxu0 %v260
  %357 = vmatprep.subr.bf16.mxu0 0
  %358 = vmatpush1.bf16.msra.mxu0 %v261
  %359 = vmatprep.subr.bf16.mxu0 0
  %360 = vmatpush1.bf16.msra.mxu0 %v262
  %361 = vmatprep.subr.bf16.mxu0 0
  %362 = vmatpush1.bf16.msra.mxu0 %v263
  %363 = vmatprep.subr.bf16.mxu0 0
  %364 = vmatpush1.bf16.msra.mxu0 %v264
  %365 = vmatprep.subr.bf16.mxu0 0
  %366 = vmatpush1.bf16.msra.mxu0 %v265
  %367 = vmatprep.subr.bf16.mxu0 0
  %368 = vmatpush1.bf16.msra.mxu0 %v266
  %369 = vmatprep.subr.bf16.mxu0 0
  %370 = vmatpush1.bf16.msra.mxu0 %v267
  %371 = vmatprep.subr.bf16.mxu0 0
  %372 = vmatpush1.bf16.msra.mxu0 %v268
  %373 = vmatprep.subr.bf16.mxu0 0
  %374 = vmatpush1.bf16.msra.mxu0 %v269
  %375 = vmatprep.mubr.bf16.mxu0 %v105
  %376 = vmatmul.mubr.bf16.gmra.mrb[0].mxu0 %v104
  %v377 = vpop.f32.mrb[0].mxu0
  %v378 = vadd.f32 %v337, %v377
  %v379 = vpop.f32.mrb[0].mxu0
  %v380 = vpop.f32.mrb[0].mxu0
  %v381 = vadd.f32 %v340, %v380
  %v382 = vpop.f32.mrb[0].mxu0
  %383 = vdwg.mxu0
  %v384 = vmax.f32 %v378, 0.0
  %v385 = vmax.f32 %v381, 0.0
  %386 = vst [vmem:[%s3] sm:$0xff] %v384
  %387 = vst [vmem:[%s3 + $0x8] sm:$0xff] %v385
  // Predicated region
  $region14: #{_forward_impl.7} parent=0 // pred_check
    _
  $region15: #{_forward_impl.7} parent=0 // pred_check_branch
    %389 = sbr.rel (0) target = $region17
  $region16: #{_forward_impl.7} parent=0 // pred_region
    _
  $region17: #{_forward_impl.7} parent=0 // pred_fallthru
    _
  // Predicated region
  $region18: #{_forward_impl.7} parent=0 // pred_check
    _
  $region19: #{_forward_impl.7} parent=0 // pred_check_branch
    %391 = sbr.rel (0) target = $region21
  $region20: #{_forward_impl.7} parent=0 // pred_region
    _
  $region21: #{_forward_impl.7} parent=0 // pred_fallthru
    _

</llo_original>
